<compile_context>
chip_gen: v5e
topology: v5e:2x2
jax: 0.10.0
libtpu: 0.0.40
codegen_flags: <defaults>
</compile_context>

<pallas_src>
import math
from functools import partial

import jax
import jax.numpy as jnp
from jax.experimental import pallas as pl
from jax.experimental.pallas import tpu as pltpu

# ----- small, module-consistent config -----
BATCH = 2
SEQ = 8
EMBED_DIM = 32      # d_model
HIDDEN_DIM = 32     # dim_feedforward and classifier hidden
NUM_HEADS = 4
NUM_LAYERS = 2
NUM_CLASSES = 16
MAX_LEN = 32
LN_EPS = 1e-5


def _softmax_last(x):
    m = jnp.max(x, axis=-1, keepdims=True)
    e = jnp.exp(x - m)
    return e * pl.reciprocal(jnp.sum(e, axis=-1, keepdims=True), approx=False)


def _layernorm(x, g, b):
    mu = jnp.mean(x, axis=-1, keepdims=True)
    var = jnp.mean((x - mu) ** 2, axis=-1, keepdims=True)
    return (x - mu) * jax.lax.rsqrt(var + LN_EPS) * g + b


def _transformer_kernel(num_heads,
                        x_ref, pe_ref,
                        wqkv_ref, bqkv_ref, wo_ref, bo_ref,
                        ln1g_ref, ln1b_ref, ln2g_ref, ln2b_ref,
                        w1_ref, b1_ref, w2_ref, b2_ref,
                        fc1w_ref, fc1b_ref, fclng_ref, fclnb_ref,
                        fc2w_ref, fc2b_ref,
                        out_ref):
    B, S, D = x_ref.shape
    L = wqkv_ref.shape[0]
    H = num_heads
    Dh = D // H
    BS = B * S

    # positional encoding, then fold batch into the matmul M dimension.
    h = (x_ref[...] + pe_ref[...][None, :, :]).reshape(BS, D)          # (B*S, D)

    for l in range(L):                                 # static unroll over layers
        # ---- QKV projection: one matmul over all B*S rows ----
        # (the 1/sqrt(Dh) score scale is pre-folded into the Q columns)
        qkv = jnp.dot(h, wqkv_ref[l],
                      preferred_element_type=jnp.float32) + bqkv_ref[l]   # (B*S, 3D)

        # ---- multi-head self-attention ----
        # the head concat is fused into the output projection: accumulate
        # head_out @ wo[rows of this head] (an aligned 8-row sublane slice).
        wo_l = wo_ref[l]
        attn = jnp.zeros((BS, D), jnp.float32)
        for hh in range(H):                            # static unroll over heads
            qh = qkv[:, hh * Dh:(hh + 1) * Dh].reshape(B, S, Dh)
            kh = qkv[:, D + hh * Dh:D + (hh + 1) * Dh].reshape(B, S, Dh)
            vh = qkv[:, 2 * D + hh * Dh:2 * D + (hh + 1) * Dh].reshape(B, S, Dh)
            s = jnp.einsum('bqd,bkd->bqk', qh, kh,
                           preferred_element_type=jnp.float32)            # (B, S, S)
            p = _softmax_last(s)
            oh = jnp.einsum('bqk,bkd->bqd', p, vh,
                            preferred_element_type=jnp.float32)           # (B, S, Dh)
            attn = attn + jnp.dot(oh.reshape(BS, Dh),
                                  wo_l[hh * Dh:(hh + 1) * Dh, :],
                                  preferred_element_type=jnp.float32)
        attn = attn + bo_ref[l]

        # ---- residual + LayerNorm 1 (post-norm) ----
        h = _layernorm(h + attn, ln1g_ref[l], ln1b_ref[l])

        # ---- feed-forward ----
        ff = jnp.dot(h, w1_ref[l], preferred_element_type=jnp.float32) + b1_ref[l]
        ff = jnp.maximum(ff, 0.0)
        ff = jnp.dot(ff, w2_ref[l], preferred_element_type=jnp.float32) + b2_ref[l]

        # ---- residual + LayerNorm 2 ----
        h = _layernorm(h + ff, ln2g_ref[l], ln2b_ref[l])

    # ---- mean pool over sequence ----
    pooled = jnp.mean(h.reshape(B, S, D), axis=1)                          # (B, D)

    # ---- classifier head: Linear -> LayerNorm -> ReLU -> Linear (all B rows) ----
    z = jnp.dot(pooled, fc1w_ref[...],
                preferred_element_type=jnp.float32) + fc1b_ref[...]        # (B, H)
    z = _layernorm(z, fclng_ref[...], fclnb_ref[...])
    z = jnp.maximum(z, 0.0)
    logits = jnp.dot(z, fc2w_ref[...],
                     preferred_element_type=jnp.float32) + fc2b_ref[...]   # (B, C)

    # single store of the whole output block
    out_ref[...] = logits


def make_positional_encoding(max_len, d_model):
    position = jnp.arange(max_len, dtype=jnp.float32)[:, None]
    div_term = jnp.exp(jnp.arange(0, d_model, 2, dtype=jnp.float32)
                       * (-math.log(10000.0) / d_model))
    pe = jnp.zeros((max_len, d_model), jnp.float32)
    pe = pe.at[:, 0::2].set(jnp.sin(position * div_term))
    pe = pe.at[:, 1::2].set(jnp.cos(position * div_term))
    return pe


def init_params(key, d, hdim, num_layers, num_classes):
    scale = 0.02
    keys = jax.random.split(key, 8)
    params = {
        "wqkv": scale * jax.random.normal(keys[0], (num_layers, d, 3 * d), jnp.float32),
        "bqkv": jnp.zeros((num_layers, 1, 3 * d), jnp.float32),
        "wo":   scale * jax.random.normal(keys[1], (num_layers, d, d), jnp.float32),
        "bo":   jnp.zeros((num_layers, 1, d), jnp.float32),
        "ln1g": jnp.ones((num_layers, 1, d), jnp.float32),
        "ln1b": jnp.zeros((num_layers, 1, d), jnp.float32),
        "ln2g": jnp.ones((num_layers, 1, d), jnp.float32),
        "ln2b": jnp.zeros((num_layers, 1, d), jnp.float32),
        "w1":   scale * jax.random.normal(keys[2], (num_layers, d, hdim), jnp.float32),
        "b1":   jnp.zeros((num_layers, 1, hdim), jnp.float32),
        "w2":   scale * jax.random.normal(keys[3], (num_layers, hdim, d), jnp.float32),
        "b2":   jnp.zeros((num_layers, 1, d), jnp.float32),
        "fc1w": scale * jax.random.normal(keys[4], (d, hdim), jnp.float32),
        "fc1b": jnp.zeros((1, hdim), jnp.float32),
        "fclng": jnp.ones((1, hdim), jnp.float32),
        "fclnb": jnp.zeros((1, hdim), jnp.float32),
        "fc2w": scale * jax.random.normal(keys[5], (hdim, num_classes), jnp.float32),
        "fc2b": jnp.zeros((1, num_classes), jnp.float32),
    }
    return params


def prepare_params(params, num_heads, d):
    """One-time host-side transform: fold 1/sqrt(Dh) into the Q projection."""
    scale = 1.0 / math.sqrt(d // num_heads)
    p = dict(params)
    p["wqkv"] = params["wqkv"].at[:, :, :d].multiply(scale)
    p["bqkv"] = params["bqkv"].at[:, :, :d].multiply(scale)
    return p


def transaction_text_transformer(x, kparams, pe):
    """x: (B, S, D) float32 -> logits (B, num_classes) float32.

    `kparams` must come from prepare_params (Q columns pre-scaled)."""
    B, S, D = x.shape
    args = (
        x, pe[:S],
        kparams["wqkv"], kparams["bqkv"], kparams["wo"], kparams["bo"],
        kparams["ln1g"], kparams["ln1b"], kparams["ln2g"], kparams["ln2b"],
        kparams["w1"], kparams["b1"], kparams["w2"], kparams["b2"],
        kparams["fc1w"], kparams["fc1b"], kparams["fclng"], kparams["fclnb"],
        kparams["fc2w"], kparams["fc2b"],
    )
    # Everything is tiny (<100 KiB) -> single program, all operands resident in
    # VMEM; no grid / pipelining (per-step grid overhead would be pure loss).
    kernel = partial(_transformer_kernel, NUM_HEADS)
    return pl.pallas_call(
        kernel,
        out_shape=jax.ShapeDtypeStruct((B, NUM_CLASSES), jnp.float32),
        in_specs=[pl.BlockSpec(memory_space=pltpu.MemorySpace.VMEM)] * len(args),
        out_specs=pl.BlockSpec(memory_space=pltpu.MemorySpace.VMEM),
    )(*args)


# ---------------- pure-JAX reference (same math, for sanity check) -------------
def reference_forward(x, params, pe):
    B, S, D = x.shape
    Dh = D // NUM_HEADS
    scale = 1.0 / math.sqrt(Dh)
    h = x + pe[:S][None]
    for l in range(NUM_LAYERS):
        qkv = h @ params["wqkv"][l] + params["bqkv"][l]
        q, k, v = qkv[..., :D], qkv[..., D:2 * D], qkv[..., 2 * D:]
        q = q.reshape(B, S, NUM_HEADS, Dh)
        k = k.reshape(B, S, NUM_HEADS, Dh)
        v = v.reshape(B, S, NUM_HEADS, Dh)
        s = jnp.einsum("bqhd,bkhd->bhqk", q, k) * scale
        p = jax.nn.softmax(s, axis=-1)
        attn = jnp.einsum("bhqk,bkhd->bqhd", p, v).reshape(B, S, D)
        attn = attn @ params["wo"][l] + params["bo"][l]
        h = _layernorm(h + attn, params["ln1g"][l], params["ln1b"][l])
        ff = jnp.maximum(h @ params["w1"][l] + params["b1"][l], 0.0)
        ff = ff @ params["w2"][l] + params["b2"][l]
        h = _layernorm(h + ff, params["ln2g"][l], params["ln2b"][l])
    pooled = jnp.mean(h, axis=1)
    z = pooled @ params["fc1w"] + params["fc1b"]
    z = _layernorm(z, params["fclng"], params["fclnb"])
    z = jnp.maximum(z, 0.0)
    return z @ params["fc2w"] + params["fc2b"]


if __name__ == "__main__":
    key = jax.random.PRNGKey(0)
    kx, kp = jax.random.split(key)

    x = jax.random.normal(kx, (BATCH, SEQ, EMBED_DIM), jnp.float32)
    params = init_params(kp, EMBED_DIM, HIDDEN_DIM, NUM_LAYERS, NUM_CLASSES)
    pe = make_positional_encoding(MAX_LEN, EMBED_DIM)

    # one-time parameter transform for the kernel (scale folded into Q)
    kparams = jax.tree_util.tree_map(jax.block_until_ready,
                                     prepare_params(params, NUM_HEADS, EMBED_DIM))

    out = transaction_text_transformer(x, kparams, pe)
    out = jax.block_until_ready(out)

    ref = jax.block_until_ready(reference_forward(x, params, pe))
    assert out.shape == (BATCH, NUM_CLASSES)
    assert jnp.all(jnp.isfinite(out))
    assert jnp.allclose(out, ref, rtol=1e-3, atol=1e-3), (
        f"max abs diff {jnp.max(jnp.abs(out - ref))}")

    print("KERNEL_OK")
</pallas_src>

<mosaic_0001>
module attributes {stable_mosaic.version = 11 : i64} {
  func.func @_transformer_kernel(%arg0: memref<2x8x32xf32, #tpu.memory_space<vmem>>, %arg1: memref<8x32xf32, #tpu.memory_space<vmem>>, %arg2: memref<2x32x96xf32, #tpu.memory_space<vmem>>, %arg3: memref<2x1x96xf32, #tpu.memory_space<vmem>>, %arg4: memref<2x32x32xf32, #tpu.memory_space<vmem>>, %arg5: memref<2x1x32xf32, #tpu.memory_space<vmem>>, %arg6: memref<2x1x32xf32, #tpu.memory_space<vmem>>, %arg7: memref<2x1x32xf32, #tpu.memory_space<vmem>>, %arg8: memref<2x1x32xf32, #tpu.memory_space<vmem>>, %arg9: memref<2x1x32xf32, #tpu.memory_space<vmem>>, %arg10: memref<2x32x32xf32, #tpu.memory_space<vmem>>, %arg11: memref<2x1x32xf32, #tpu.memory_space<vmem>>, %arg12: memref<2x32x32xf32, #tpu.memory_space<vmem>>, %arg13: memref<2x1x32xf32, #tpu.memory_space<vmem>>, %arg14: memref<32x32xf32, #tpu.memory_space<vmem>>, %arg15: memref<1x32xf32, #tpu.memory_space<vmem>>, %arg16: memref<1x32xf32, #tpu.memory_space<vmem>>, %arg17: memref<1x32xf32, #tpu.memory_space<vmem>>, %arg18: memref<32x16xf32, #tpu.memory_space<vmem>>, %arg19: memref<1x16xf32, #tpu.memory_space<vmem>>, %arg20: memref<2x16xf32, #tpu.memory_space<vmem>>) attributes {dimension_semantics = [], scalar_prefetch = 0 : i64, scratch_operands = 0 : i64, tpu.core_type = #tpu.core_type<tc>} {
    %c0 = arith.constant 0 : index
    %c0_0 = arith.constant 0 : index
    %c0_1 = arith.constant 0 : index
    %0 = vector.load %arg0[%c0, %c0_0, %c0_1] : memref<2x8x32xf32, #tpu.memory_space<vmem>>, vector<2x8x32xf32>
    %c0_2 = arith.constant 0 : index
    %c0_3 = arith.constant 0 : index
    %1 = vector.load %arg1[%c0_2, %c0_3] : memref<8x32xf32, #tpu.memory_space<vmem>>, vector<8x32xf32>
    %2 = vector.shape_cast %1 : vector<8x32xf32> to vector<1x8x32xf32>
    %3 = vector.broadcast %2 : vector<1x8x32xf32> to vector<2x8x32xf32>
    %4 = arith.addf %0, %3 : vector<2x8x32xf32>
    %5 = vector.shape_cast %4 : vector<2x8x32xf32> to vector<16x32xf32>
    %c0_4 = arith.constant 0 : index
    %c0_5 = arith.constant 0 : index
    %c0_6 = arith.constant 0 : index
    %6 = vector.load %arg2[%c0_4, %c0_5, %c0_6] : memref<2x32x96xf32, #tpu.memory_space<vmem>>, vector<1x32x96xf32>
    %7 = vector.shape_cast %6 : vector<1x32x96xf32> to vector<32x96xf32>
    %cst = arith.constant dense<0.000000e+00> : vector<16x96xf32>
    %8 = tpu.matmul %5, %7, %cst {dimension_numbers = #tpu.dot_dimension_numbers<[1], [0], [0], [1], [0, 0, 1, 1], [], []>} : vector<16x32xf32>, vector<32x96xf32>, vector<16x96xf32> -> vector<16x96xf32>
    %c0_7 = arith.constant 0 : index
    %c0_8 = arith.constant 0 : index
    %c0_9 = arith.constant 0 : index
    %9 = vector.load %arg3[%c0_7, %c0_8, %c0_9] : memref<2x1x96xf32, #tpu.memory_space<vmem>>, vector<1x1x96xf32>
    %10 = vector.shape_cast %9 : vector<1x1x96xf32> to vector<1x96xf32>
    %11 = vector.broadcast %10 : vector<1x96xf32> to vector<16x96xf32>
    %12 = arith.addf %8, %11 : vector<16x96xf32>
    %c0_10 = arith.constant 0 : index
    %c0_11 = arith.constant 0 : index
    %c0_12 = arith.constant 0 : index
    %13 = vector.load %arg4[%c0_10, %c0_11, %c0_12] : memref<2x32x32xf32, #tpu.memory_space<vmem>>, vector<1x32x32xf32>
    %14 = vector.shape_cast %13 : vector<1x32x32xf32> to vector<32x32xf32>
    %cst_13 = arith.constant 0.000000e+00 : f32
    %15 = vector.broadcast %cst_13 : f32 to vector<16x32xf32>
    %16 = vector.extract_strided_slice %12 {offsets = [0, 0], sizes = [16, 8], strides = [1, 1]} : vector<16x96xf32> to vector<16x8xf32>
    %17 = vector.shape_cast %16 : vector<16x8xf32> to vector<2x8x8xf32>
    %18 = vector.extract_strided_slice %12 {offsets = [0, 32], sizes = [16, 8], strides = [1, 1]} : vector<16x96xf32> to vector<16x8xf32>
    %19 = vector.shape_cast %18 : vector<16x8xf32> to vector<2x8x8xf32>
    %20 = vector.extract_strided_slice %12 {offsets = [0, 64], sizes = [16, 8], strides = [1, 1]} : vector<16x96xf32> to vector<16x8xf32>
    %21 = vector.shape_cast %20 : vector<16x8xf32> to vector<2x8x8xf32>
    "tpu.trace_start"() <{level = 10 : i32, message = "bqd,bkd->bqk"}> : () -> ()
    %cst_14 = arith.constant dense<0.000000e+00> : vector<2x8x8xf32>
    %22 = tpu.matmul %17, %19, %cst_14 {dimension_numbers = #tpu.dot_dimension_numbers<[2], [2], [1], [1], [0, 0, 0, 1, 1, 1], [0], [0]>} : vector<2x8x8xf32>, vector<2x8x8xf32>, vector<2x8x8xf32> -> vector<2x8x8xf32>
    "tpu.trace_stop"() : () -> ()
    %cst_15 = arith.constant dense<0xFF800000> : vector<2x8xf32>
    %23 = vector.multi_reduction <maximumf>, %22, %cst_15 [2] : vector<2x8x8xf32> to vector<2x8xf32>
    %24 = vector.shape_cast %23 : vector<2x8xf32> to vector<2x8x1xf32>
    %25 = vector.broadcast %24 : vector<2x8x1xf32> to vector<2x8x8xf32>
    %26 = arith.subf %22, %25 : vector<2x8x8xf32>
    %27 = math.exp %26 : vector<2x8x8xf32>
    %cst_16 = arith.constant dense<0.000000e+00> : vector<2x8xf32>
    %28 = vector.multi_reduction <add>, %27, %cst_16 [2] : vector<2x8x8xf32> to vector<2x8xf32>
    %29 = vector.shape_cast %28 : vector<2x8xf32> to vector<2x8x1xf32>
    %30 = tpu.reciprocal %29 : vector<2x8x1xf32> -> vector<2x8x1xf32>
    %31 = vector.broadcast %30 : vector<2x8x1xf32> to vector<2x8x8xf32>
    %32 = arith.mulf %27, %31 : vector<2x8x8xf32>
    "tpu.trace_start"() <{level = 10 : i32, message = "bqk,bkd->bqd"}> : () -> ()
    %cst_17 = arith.constant dense<0.000000e+00> : vector<2x8x8xf32>
    %33 = tpu.matmul %32, %21, %cst_17 {dimension_numbers = #tpu.dot_dimension_numbers<[2], [1], [1], [2], [0, 0, 0, 1, 1, 2], [0], [0]>} : vector<2x8x8xf32>, vector<2x8x8xf32>, vector<2x8x8xf32> -> vector<2x8x8xf32>
    "tpu.trace_stop"() : () -> ()
    %34 = vector.shape_cast %33 : vector<2x8x8xf32> to vector<16x8xf32>
    %35 = vector.extract_strided_slice %14 {offsets = [0, 0], sizes = [8, 32], strides = [1, 1]} : vector<32x32xf32> to vector<8x32xf32>
    %cst_18 = arith.constant dense<0.000000e+00> : vector<16x32xf32>
    %36 = tpu.matmul %34, %35, %cst_18 {dimension_numbers = #tpu.dot_dimension_numbers<[1], [0], [0], [1], [0, 0, 1, 1], [], []>} : vector<16x8xf32>, vector<8x32xf32>, vector<16x32xf32> -> vector<16x32xf32>
    %37 = arith.addf %15, %36 : vector<16x32xf32>
    %38 = vector.extract_strided_slice %12 {offsets = [0, 8], sizes = [16, 8], strides = [1, 1]} : vector<16x96xf32> to vector<16x8xf32>
    %39 = vector.shape_cast %38 : vector<16x8xf32> to vector<2x8x8xf32>
    %40 = vector.extract_strided_slice %12 {offsets = [0, 40], sizes = [16, 8], strides = [1, 1]} : vector<16x96xf32> to vector<16x8xf32>
    %41 = vector.shape_cast %40 : vector<16x8xf32> to vector<2x8x8xf32>
    %42 = vector.extract_strided_slice %12 {offsets = [0, 72], sizes = [16, 8], strides = [1, 1]} : vector<16x96xf32> to vector<16x8xf32>
    %43 = vector.shape_cast %42 : vector<16x8xf32> to vector<2x8x8xf32>
    "tpu.trace_start"() <{level = 10 : i32, message = "bqd,bkd->bqk"}> : () -> ()
    %cst_19 = arith.constant dense<0.000000e+00> : vector<2x8x8xf32>
    %44 = tpu.matmul %39, %41, %cst_19 {dimension_numbers = #tpu.dot_dimension_numbers<[2], [2], [1], [1], [0, 0, 0, 1, 1, 1], [0], [0]>} : vector<2x8x8xf32>, vector<2x8x8xf32>, vector<2x8x8xf32> -> vector<2x8x8xf32>
    "tpu.trace_stop"() : () -> ()
    %cst_20 = arith.constant dense<0xFF800000> : vector<2x8xf32>
    %45 = vector.multi_reduction <maximumf>, %44, %cst_20 [2] : vector<2x8x8xf32> to vector<2x8xf32>
    %46 = vector.shape_cast %45 : vector<2x8xf32> to vector<2x8x1xf32>
    %47 = vector.broadcast %46 : vector<2x8x1xf32> to vector<2x8x8xf32>
    %48 = arith.subf %44, %47 : vector<2x8x8xf32>
    %49 = math.exp %48 : vector<2x8x8xf32>
    %cst_21 = arith.constant dense<0.000000e+00> : vector<2x8xf32>
    %50 = vector.multi_reduction <add>, %49, %cst_21 [2] : vector<2x8x8xf32> to vector<2x8xf32>
    %51 = vector.shape_cast %50 : vector<2x8xf32> to vector<2x8x1xf32>
    %52 = tpu.reciprocal %51 : vector<2x8x1xf32> -> vector<2x8x1xf32>
    %53 = vector.broadcast %52 : vector<2x8x1xf32> to vector<2x8x8xf32>
    %54 = arith.mulf %49, %53 : vector<2x8x8xf32>
    "tpu.trace_start"() <{level = 10 : i32, message = "bqk,bkd->bqd"}> : () -> ()
    %cst_22 = arith.constant dense<0.000000e+00> : vector<2x8x8xf32>
    %55 = tpu.matmul %54, %43, %cst_22 {dimension_numbers = #tpu.dot_dimension_numbers<[2], [1], [1], [2], [0, 0, 0, 1, 1, 2], [0], [0]>} : vector<2x8x8xf32>, vector<2x8x8xf32>, vector<2x8x8xf32> -> vector<2x8x8xf32>
    "tpu.trace_stop"() : () -> ()
    %56 = vector.shape_cast %55 : vector<2x8x8xf32> to vector<16x8xf32>
    %57 = vector.extract_strided_slice %14 {offsets = [8, 0], sizes = [8, 32], strides = [1, 1]} : vector<32x32xf32> to vector<8x32xf32>
    %cst_23 = arith.constant dense<0.000000e+00> : vector<16x32xf32>
    %58 = tpu.matmul %56, %57, %cst_23 {dimension_numbers = #tpu.dot_dimension_numbers<[1], [0], [0], [1], [0, 0, 1, 1], [], []>} : vector<16x8xf32>, vector<8x32xf32>, vector<16x32xf32> -> vector<16x32xf32>
    %59 = arith.addf %37, %58 : vector<16x32xf32>
    %60 = vector.extract_strided_slice %12 {offsets = [0, 16], sizes = [16, 8], strides = [1, 1]} : vector<16x96xf32> to vector<16x8xf32>
    %61 = vector.shape_cast %60 : vector<16x8xf32> to vector<2x8x8xf32>
    %62 = vector.extract_strided_slice %12 {offsets = [0, 48], sizes = [16, 8], strides = [1, 1]} : vector<16x96xf32> to vector<16x8xf32>
    %63 = vector.shape_cast %62 : vector<16x8xf32> to vector<2x8x8xf32>
    %64 = vector.extract_strided_slice %12 {offsets = [0, 80], sizes = [16, 8], strides = [1, 1]} : vector<16x96xf32> to vector<16x8xf32>
    %65 = vector.shape_cast %64 : vector<16x8xf32> to vector<2x8x8xf32>
    "tpu.trace_start"() <{level = 10 : i32, message = "bqd,bkd->bqk"}> : () -> ()
    %cst_24 = arith.constant dense<0.000000e+00> : vector<2x8x8xf32>
    %66 = tpu.matmul %61, %63, %cst_24 {dimension_numbers = #tpu.dot_dimension_numbers<[2], [2], [1], [1], [0, 0, 0, 1, 1, 1], [0], [0]>} : vector<2x8x8xf32>, vector<2x8x8xf32>, vector<2x8x8xf32> -> vector<2x8x8xf32>
    "tpu.trace_stop"() : () -> ()
    %cst_25 = arith.constant dense<0xFF800000> : vector<2x8xf32>
    %67 = vector.multi_reduction <maximumf>, %66, %cst_25 [2] : vector<2x8x8xf32> to vector<2x8xf32>
    %68 = vector.shape_cast %67 : vector<2x8xf32> to vector<2x8x1xf32>
    %69 = vector.broadcast %68 : vector<2x8x1xf32> to vector<2x8x8xf32>
    %70 = arith.subf %66, %69 : vector<2x8x8xf32>
    %71 = math.exp %70 : vector<2x8x8xf32>
    %cst_26 = arith.constant dense<0.000000e+00> : vector<2x8xf32>
    %72 = vector.multi_reduction <add>, %71, %cst_26 [2] : vector<2x8x8xf32> to vector<2x8xf32>
    %73 = vector.shape_cast %72 : vector<2x8xf32> to vector<2x8x1xf32>
    %74 = tpu.reciprocal %73 : vector<2x8x1xf32> -> vector<2x8x1xf32>
    %75 = vector.broadcast %74 : vector<2x8x1xf32> to vector<2x8x8xf32>
    %76 = arith.mulf %71, %75 : vector<2x8x8xf32>
    "tpu.trace_start"() <{level = 10 : i32, message = "bqk,bkd->bqd"}> : () -> ()
    %cst_27 = arith.constant dense<0.000000e+00> : vector<2x8x8xf32>
    %77 = tpu.matmul %76, %65, %cst_27 {dimension_numbers = #tpu.dot_dimension_numbers<[2], [1], [1], [2], [0, 0, 0, 1, 1, 2], [0], [0]>} : vector<2x8x8xf32>, vector<2x8x8xf32>, vector<2x8x8xf32> -> vector<2x8x8xf32>
    "tpu.trace_stop"() : () -> ()
    %78 = vector.shape_cast %77 : vector<2x8x8xf32> to vector<16x8xf32>
    %79 = vector.extract_strided_slice %14 {offsets = [16, 0], sizes = [8, 32], strides = [1, 1]} : vector<32x32xf32> to vector<8x32xf32>
    %cst_28 = arith.constant dense<0.000000e+00> : vector<16x32xf32>
    %80 = tpu.matmul %78, %79, %cst_28 {dimension_numbers = #tpu.dot_dimension_numbers<[1], [0], [0], [1], [0, 0, 1, 1], [], []>} : vector<16x8xf32>, vector<8x32xf32>, vector<16x32xf32> -> vector<16x32xf32>
    %81 = arith.addf %59, %80 : vector<16x32xf32>
    %82 = vector.extract_strided_slice %12 {offsets = [0, 24], sizes = [16, 8], strides = [1, 1]} : vector<16x96xf32> to vector<16x8xf32>
    %83 = vector.shape_cast %82 : vector<16x8xf32> to vector<2x8x8xf32>
    %84 = vector.extract_strided_slice %12 {offsets = [0, 56], sizes = [16, 8], strides = [1, 1]} : vector<16x96xf32> to vector<16x8xf32>
    %85 = vector.shape_cast %84 : vector<16x8xf32> to vector<2x8x8xf32>
    %86 = vector.extract_strided_slice %12 {offsets = [0, 88], sizes = [16, 8], strides = [1, 1]} : vector<16x96xf32> to vector<16x8xf32>
    %87 = vector.shape_cast %86 : vector<16x8xf32> to vector<2x8x8xf32>
    "tpu.trace_start"() <{level = 10 : i32, message = "bqd,bkd->bqk"}> : () -> ()
    %cst_29 = arith.constant dense<0.000000e+00> : vector<2x8x8xf32>
    %88 = tpu.matmul %83, %85, %cst_29 {dimension_numbers = #tpu.dot_dimension_numbers<[2], [2], [1], [1], [0, 0, 0, 1, 1, 1], [0], [0]>} : vector<2x8x8xf32>, vector<2x8x8xf32>, vector<2x8x8xf32> -> vector<2x8x8xf32>
    "tpu.trace_stop"() : () -> ()
    %cst_30 = arith.constant dense<0xFF800000> : vector<2x8xf32>
    %89 = vector.multi_reduction <maximumf>, %88, %cst_30 [2] : vector<2x8x8xf32> to vector<2x8xf32>
    %90 = vector.shape_cast %89 : vector<2x8xf32> to vector<2x8x1xf32>
    %91 = vector.broadcast %90 : vector<2x8x1xf32> to vector<2x8x8xf32>
    %92 = arith.subf %88, %91 : vector<2x8x8xf32>
    %93 = math.exp %92 : vector<2x8x8xf32>
    %cst_31 = arith.constant dense<0.000000e+00> : vector<2x8xf32>
    %94 = vector.multi_reduction <add>, %93, %cst_31 [2] : vector<2x8x8xf32> to vector<2x8xf32>
    %95 = vector.shape_cast %94 : vector<2x8xf32> to vector<2x8x1xf32>
    %96 = tpu.reciprocal %95 : vector<2x8x1xf32> -> vector<2x8x1xf32>
    %97 = vector.broadcast %96 : vector<2x8x1xf32> to vector<2x8x8xf32>
    %98 = arith.mulf %93, %97 : vector<2x8x8xf32>
    "tpu.trace_start"() <{level = 10 : i32, message = "bqk,bkd->bqd"}> : () -> ()
    %cst_32 = arith.constant dense<0.000000e+00> : vector<2x8x8xf32>
    %99 = tpu.matmul %98, %87, %cst_32 {dimension_numbers = #tpu.dot_dimension_numbers<[2], [1], [1], [2], [0, 0, 0, 1, 1, 2], [0], [0]>} : vector<2x8x8xf32>, vector<2x8x8xf32>, vector<2x8x8xf32> -> vector<2x8x8xf32>
    "tpu.trace_stop"() : () -> ()
    %100 = vector.shape_cast %99 : vector<2x8x8xf32> to vector<16x8xf32>
    %101 = vector.extract_strided_slice %14 {offsets = [24, 0], sizes = [8, 32], strides = [1, 1]} : vector<32x32xf32> to vector<8x32xf32>
    %cst_33 = arith.constant dense<0.000000e+00> : vector<16x32xf32>
    %102 = tpu.matmul %100, %101, %cst_33 {dimension_numbers = #tpu.dot_dimension_numbers<[1], [0], [0], [1], [0, 0, 1, 1], [], []>} : vector<16x8xf32>, vector<8x32xf32>, vector<16x32xf32> -> vector<16x32xf32>
    %103 = arith.addf %81, %102 : vector<16x32xf32>
    %c0_34 = arith.constant 0 : index
    %c0_35 = arith.constant 0 : index
    %c0_36 = arith.constant 0 : index
    %104 = vector.load %arg5[%c0_34, %c0_35, %c0_36] : memref<2x1x32xf32, #tpu.memory_space<vmem>>, vector<1x1x32xf32>
    %105 = vector.shape_cast %104 : vector<1x1x32xf32> to vector<1x32xf32>
    %106 = vector.broadcast %105 : vector<1x32xf32> to vector<16x32xf32>
    %107 = arith.addf %103, %106 : vector<16x32xf32>
    %108 = arith.addf %5, %107 : vector<16x32xf32>
    %c0_37 = arith.constant 0 : index
    %c0_38 = arith.constant 0 : index
    %c0_39 = arith.constant 0 : index
    %109 = vector.load %arg6[%c0_37, %c0_38, %c0_39] : memref<2x1x32xf32, #tpu.memory_space<vmem>>, vector<1x1x32xf32>
    %110 = vector.shape_cast %109 : vector<1x1x32xf32> to vector<1x32xf32>
    %c0_40 = arith.constant 0 : index
    %c0_41 = arith.constant 0 : index
    %c0_42 = arith.constant 0 : index
    %111 = vector.load %arg7[%c0_40, %c0_41, %c0_42] : memref<2x1x32xf32, #tpu.memory_space<vmem>>, vector<1x1x32xf32>
    %112 = vector.shape_cast %111 : vector<1x1x32xf32> to vector<1x32xf32>
    %cst_43 = arith.constant dense<0.000000e+00> : vector<16xf32>
    %113 = vector.multi_reduction <add>, %108, %cst_43 [1] : vector<16x32xf32> to vector<16xf32>
    %114 = vector.shape_cast %113 : vector<16xf32> to vector<16x1xf32>
    %cst_44 = arith.constant 3.200000e+01 : f32
    %115 = vector.broadcast %cst_44 : f32 to vector<16x1xf32>
    %116 = arith.divf %114, %115 : vector<16x1xf32>
    %117 = vector.broadcast %116 : vector<16x1xf32> to vector<16x32xf32>
    %118 = arith.subf %108, %117 : vector<16x32xf32>
    %119 = arith.mulf %118, %118 : vector<16x32xf32>
    %cst_45 = arith.constant dense<0.000000e+00> : vector<16xf32>
    %120 = vector.multi_reduction <add>, %119, %cst_45 [1] : vector<16x32xf32> to vector<16xf32>
    %121 = vector.shape_cast %120 : vector<16xf32> to vector<16x1xf32>
    %cst_46 = arith.constant 3.200000e+01 : f32
    %122 = vector.broadcast %cst_46 : f32 to vector<16x1xf32>
    %123 = arith.divf %121, %122 : vector<16x1xf32>
    %124 = vector.broadcast %116 : vector<16x1xf32> to vector<16x32xf32>
    %125 = arith.subf %108, %124 : vector<16x32xf32>
    %cst_47 = arith.constant 9.99999974E-6 : f32
    %126 = vector.broadcast %cst_47 : f32 to vector<16x1xf32>
    %127 = arith.addf %123, %126 : vector<16x1xf32>
    %128 = math.rsqrt %127 : vector<16x1xf32>
    %129 = vector.broadcast %128 : vector<16x1xf32> to vector<16x32xf32>
    %130 = arith.mulf %125, %129 : vector<16x32xf32>
    %131 = vector.broadcast %110 : vector<1x32xf32> to vector<16x32xf32>
    %132 = arith.mulf %130, %131 : vector<16x32xf32>
    %133 = vector.broadcast %112 : vector<1x32xf32> to vector<16x32xf32>
    %134 = arith.addf %132, %133 : vector<16x32xf32>
    %c0_48 = arith.constant 0 : index
    %c0_49 = arith.constant 0 : index
    %c0_50 = arith.constant 0 : index
    %135 = vector.load %arg10[%c0_48, %c0_49, %c0_50] : memref<2x32x32xf32, #tpu.memory_space<vmem>>, vector<1x32x32xf32>
    %136 = vector.shape_cast %135 : vector<1x32x32xf32> to vector<32x32xf32>
    %cst_51 = arith.constant dense<0.000000e+00> : vector<16x32xf32>
    %137 = tpu.matmul %134, %136, %cst_51 {dimension_numbers = #tpu.dot_dimension_numbers<[1], [0], [0], [1], [0, 0, 1, 1], [], []>} : vector<16x32xf32>, vector<32x32xf32>, vector<16x32xf32> -> vector<16x32xf32>
    %c0_52 = arith.constant 0 : index
    %c0_53 = arith.constant 0 : index
    %c0_54 = arith.constant 0 : index
    %138 = vector.load %arg11[%c0_52, %c0_53, %c0_54] : memref<2x1x32xf32, #tpu.memory_space<vmem>>, vector<1x1x32xf32>
    %139 = vector.shape_cast %138 : vector<1x1x32xf32> to vector<1x32xf32>
    %140 = vector.broadcast %139 : vector<1x32xf32> to vector<16x32xf32>
    %141 = arith.addf %137, %140 : vector<16x32xf32>
    %cst_55 = arith.constant 0.000000e+00 : f32
    %142 = vector.broadcast %cst_55 : f32 to vector<16x32xf32>
    %143 = arith.maximumf %141, %142 : vector<16x32xf32>
    %c0_56 = arith.constant 0 : index
    %c0_57 = arith.constant 0 : index
    %c0_58 = arith.constant 0 : index
    %144 = vector.load %arg12[%c0_56, %c0_57, %c0_58] : memref<2x32x32xf32, #tpu.memory_space<vmem>>, vector<1x32x32xf32>
    %145 = vector.shape_cast %144 : vector<1x32x32xf32> to vector<32x32xf32>
    %cst_59 = arith.constant dense<0.000000e+00> : vector<16x32xf32>
    %146 = tpu.matmul %143, %145, %cst_59 {dimension_numbers = #tpu.dot_dimension_numbers<[1], [0], [0], [1], [0, 0, 1, 1], [], []>} : vector<16x32xf32>, vector<32x32xf32>, vector<16x32xf32> -> vector<16x32xf32>
    %c0_60 = arith.constant 0 : index
    %c0_61 = arith.constant 0 : index
    %c0_62 = arith.constant 0 : index
    %147 = vector.load %arg13[%c0_60, %c0_61, %c0_62] : memref<2x1x32xf32, #tpu.memory_space<vmem>>, vector<1x1x32xf32>
    %148 = vector.shape_cast %147 : vector<1x1x32xf32> to vector<1x32xf32>
    %149 = vector.broadcast %148 : vector<1x32xf32> to vector<16x32xf32>
    %150 = arith.addf %146, %149 : vector<16x32xf32>
    %151 = arith.addf %134, %150 : vector<16x32xf32>
    %c0_63 = arith.constant 0 : index
    %c0_64 = arith.constant 0 : index
    %c0_65 = arith.constant 0 : index
    %152 = vector.load %arg8[%c0_63, %c0_64, %c0_65] : memref<2x1x32xf32, #tpu.memory_space<vmem>>, vector<1x1x32xf32>
    %153 = vector.shape_cast %152 : vector<1x1x32xf32> to vector<1x32xf32>
    %c0_66 = arith.constant 0 : index
    %c0_67 = arith.constant 0 : index
    %c0_68 = arith.constant 0 : index
    %154 = vector.load %arg9[%c0_66, %c0_67, %c0_68] : memref<2x1x32xf32, #tpu.memory_space<vmem>>, vector<1x1x32xf32>
    %155 = vector.shape_cast %154 : vector<1x1x32xf32> to vector<1x32xf32>
    %cst_69 = arith.constant dense<0.000000e+00> : vector<16xf32>
    %156 = vector.multi_reduction <add>, %151, %cst_69 [1] : vector<16x32xf32> to vector<16xf32>
    %157 = vector.shape_cast %156 : vector<16xf32> to vector<16x1xf32>
    %cst_70 = arith.constant 3.200000e+01 : f32
    %158 = vector.broadcast %cst_70 : f32 to vector<16x1xf32>
    %159 = arith.divf %157, %158 : vector<16x1xf32>
    %160 = vector.broadcast %159 : vector<16x1xf32> to vector<16x32xf32>
    %161 = arith.subf %151, %160 : vector<16x32xf32>
    %162 = arith.mulf %161, %161 : vector<16x32xf32>
    %cst_71 = arith.constant dense<0.000000e+00> : vector<16xf32>
    %163 = vector.multi_reduction <add>, %162, %cst_71 [1] : vector<16x32xf32> to vector<16xf32>
    %164 = vector.shape_cast %163 : vector<16xf32> to vector<16x1xf32>
    %cst_72 = arith.constant 3.200000e+01 : f32
    %165 = vector.broadcast %cst_72 : f32 to vector<16x1xf32>
    %166 = arith.divf %164, %165 : vector<16x1xf32>
    %167 = vector.broadcast %159 : vector<16x1xf32> to vector<16x32xf32>
    %168 = arith.subf %151, %167 : vector<16x32xf32>
    %cst_73 = arith.constant 9.99999974E-6 : f32
    %169 = vector.broadcast %cst_73 : f32 to vector<16x1xf32>
    %170 = arith.addf %166, %169 : vector<16x1xf32>
    %171 = math.rsqrt %170 : vector<16x1xf32>
    %172 = vector.broadcast %171 : vector<16x1xf32> to vector<16x32xf32>
    %173 = arith.mulf %168, %172 : vector<16x32xf32>
    %174 = vector.broadcast %153 : vector<1x32xf32> to vector<16x32xf32>
    %175 = arith.mulf %173, %174 : vector<16x32xf32>
    %176 = vector.broadcast %155 : vector<1x32xf32> to vector<16x32xf32>
    %177 = arith.addf %175, %176 : vector<16x32xf32>
    %c1 = arith.constant 1 : index
    %c0_74 = arith.constant 0 : index
    %c0_75 = arith.constant 0 : index
    %178 = vector.load %arg2[%c1, %c0_74, %c0_75] : memref<2x32x96xf32, #tpu.memory_space<vmem>>, vector<1x32x96xf32>
    %179 = vector.shape_cast %178 : vector<1x32x96xf32> to vector<32x96xf32>
    %cst_76 = arith.constant dense<0.000000e+00> : vector<16x96xf32>
    %180 = tpu.matmul %177, %179, %cst_76 {dimension_numbers = #tpu.dot_dimension_numbers<[1], [0], [0], [1], [0, 0, 1, 1], [], []>} : vector<16x32xf32>, vector<32x96xf32>, vector<16x96xf32> -> vector<16x96xf32>
    %c1_77 = arith.constant 1 : index
    %c0_78 = arith.constant 0 : index
    %c0_79 = arith.constant 0 : index
    %181 = vector.load %arg3[%c1_77, %c0_78, %c0_79] : memref<2x1x96xf32, #tpu.memory_space<vmem>>, vector<1x1x96xf32>
    %182 = vector.shape_cast %181 : vector<1x1x96xf32> to vector<1x96xf32>
    %183 = vector.broadcast %182 : vector<1x96xf32> to vector<16x96xf32>
    %184 = arith.addf %180, %183 : vector<16x96xf32>
    %c1_80 = arith.constant 1 : index
    %c0_81 = arith.constant 0 : index
    %c0_82 = arith.constant 0 : index
    %185 = vector.load %arg4[%c1_80, %c0_81, %c0_82] : memref<2x32x32xf32, #tpu.memory_space<vmem>>, vector<1x32x32xf32>
    %186 = vector.shape_cast %185 : vector<1x32x32xf32> to vector<32x32xf32>
    %cst_83 = arith.constant 0.000000e+00 : f32
    %187 = vector.broadcast %cst_83 : f32 to vector<16x32xf32>
    %188 = vector.extract_strided_slice %184 {offsets = [0, 0], sizes = [16, 8], strides = [1, 1]} : vector<16x96xf32> to vector<16x8xf32>
    %189 = vector.shape_cast %188 : vector<16x8xf32> to vector<2x8x8xf32>
    %190 = vector.extract_strided_slice %184 {offsets = [0, 32], sizes = [16, 8], strides = [1, 1]} : vector<16x96xf32> to vector<16x8xf32>
    %191 = vector.shape_cast %190 : vector<16x8xf32> to vector<2x8x8xf32>
    %192 = vector.extract_strided_slice %184 {offsets = [0, 64], sizes = [16, 8], strides = [1, 1]} : vector<16x96xf32> to vector<16x8xf32>
    %193 = vector.shape_cast %192 : vector<16x8xf32> to vector<2x8x8xf32>
    "tpu.trace_start"() <{level = 10 : i32, message = "bqd,bkd->bqk"}> : () -> ()
    %cst_84 = arith.constant dense<0.000000e+00> : vector<2x8x8xf32>
    %194 = tpu.matmul %189, %191, %cst_84 {dimension_numbers = #tpu.dot_dimension_numbers<[2], [2], [1], [1], [0, 0, 0, 1, 1, 1], [0], [0]>} : vector<2x8x8xf32>, vector<2x8x8xf32>, vector<2x8x8xf32> -> vector<2x8x8xf32>
    "tpu.trace_stop"() : () -> ()
    %cst_85 = arith.constant dense<0xFF800000> : vector<2x8xf32>
    %195 = vector.multi_reduction <maximumf>, %194, %cst_85 [2] : vector<2x8x8xf32> to vector<2x8xf32>
    %196 = vector.shape_cast %195 : vector<2x8xf32> to vector<2x8x1xf32>
    %197 = vector.broadcast %196 : vector<2x8x1xf32> to vector<2x8x8xf32>
    %198 = arith.subf %194, %197 : vector<2x8x8xf32>
    %199 = math.exp %198 : vector<2x8x8xf32>
    %cst_86 = arith.constant dense<0.000000e+00> : vector<2x8xf32>
    %200 = vector.multi_reduction <add>, %199, %cst_86 [2] : vector<2x8x8xf32> to vector<2x8xf32>
    %201 = vector.shape_cast %200 : vector<2x8xf32> to vector<2x8x1xf32>
    %202 = tpu.reciprocal %201 : vector<2x8x1xf32> -> vector<2x8x1xf32>
    %203 = vector.broadcast %202 : vector<2x8x1xf32> to vector<2x8x8xf32>
    %204 = arith.mulf %199, %203 : vector<2x8x8xf32>
    "tpu.trace_start"() <{level = 10 : i32, message = "bqk,bkd->bqd"}> : () -> ()
    %cst_87 = arith.constant dense<0.000000e+00> : vector<2x8x8xf32>
    %205 = tpu.matmul %204, %193, %cst_87 {dimension_numbers = #tpu.dot_dimension_numbers<[2], [1], [1], [2], [0, 0, 0, 1, 1, 2], [0], [0]>} : vector<2x8x8xf32>, vector<2x8x8xf32>, vector<2x8x8xf32> -> vector<2x8x8xf32>
    "tpu.trace_stop"() : () -> ()
    %206 = vector.shape_cast %205 : vector<2x8x8xf32> to vector<16x8xf32>
    %207 = vector.extract_strided_slice %186 {offsets = [0, 0], sizes = [8, 32], strides = [1, 1]} : vector<32x32xf32> to vector<8x32xf32>
    %cst_88 = arith.constant dense<0.000000e+00> : vector<16x32xf32>
    %208 = tpu.matmul %206, %207, %cst_88 {dimension_numbers = #tpu.dot_dimension_numbers<[1], [0], [0], [1], [0, 0, 1, 1], [], []>} : vector<16x8xf32>, vector<8x32xf32>, vector<16x32xf32> -> vector<16x32xf32>
    %209 = arith.addf %187, %208 : vector<16x32xf32>
    %210 = vector.extract_strided_slice %184 {offsets = [0, 8], sizes = [16, 8], strides = [1, 1]} : vector<16x96xf32> to vector<16x8xf32>
    %211 = vector.shape_cast %210 : vector<16x8xf32> to vector<2x8x8xf32>
    %212 = vector.extract_strided_slice %184 {offsets = [0, 40], sizes = [16, 8], strides = [1, 1]} : vector<16x96xf32> to vector<16x8xf32>
    %213 = vector.shape_cast %212 : vector<16x8xf32> to vector<2x8x8xf32>
    %214 = vector.extract_strided_slice %184 {offsets = [0, 72], sizes = [16, 8], strides = [1, 1]} : vector<16x96xf32> to vector<16x8xf32>
    %215 = vector.shape_cast %214 : vector<16x8xf32> to vector<2x8x8xf32>
    "tpu.trace_start"() <{level = 10 : i32, message = "bqd,bkd->bqk"}> : () -> ()
    %cst_89 = arith.constant dense<0.000000e+00> : vector<2x8x8xf32>
    %216 = tpu.matmul %211, %213, %cst_89 {dimension_numbers = #tpu.dot_dimension_numbers<[2], [2], [1], [1], [0, 0, 0, 1, 1, 1], [0], [0]>} : vector<2x8x8xf32>, vector<2x8x8xf32>, vector<2x8x8xf32> -> vector<2x8x8xf32>
    "tpu.trace_stop"() : () -> ()
    %cst_90 = arith.constant dense<0xFF800000> : vector<2x8xf32>
    %217 = vector.multi_reduction <maximumf>, %216, %cst_90 [2] : vector<2x8x8xf32> to vector<2x8xf32>
    %218 = vector.shape_cast %217 : vector<2x8xf32> to vector<2x8x1xf32>
    %219 = vector.broadcast %218 : vector<2x8x1xf32> to vector<2x8x8xf32>
    %220 = arith.subf %216, %219 : vector<2x8x8xf32>
    %221 = math.exp %220 : vector<2x8x8xf32>
    %cst_91 = arith.constant dense<0.000000e+00> : vector<2x8xf32>
    %222 = vector.multi_reduction <add>, %221, %cst_91 [2] : vector<2x8x8xf32> to vector<2x8xf32>
    %223 = vector.shape_cast %222 : vector<2x8xf32> to vector<2x8x1xf32>
    %224 = tpu.reciprocal %223 : vector<2x8x1xf32> -> vector<2x8x1xf32>
    %225 = vector.broadcast %224 : vector<2x8x1xf32> to vector<2x8x8xf32>
    %226 = arith.mulf %221, %225 : vector<2x8x8xf32>
    "tpu.trace_start"() <{level = 10 : i32, message = "bqk,bkd->bqd"}> : () -> ()
    %cst_92 = arith.constant dense<0.000000e+00> : vector<2x8x8xf32>
    %227 = tpu.matmul %226, %215, %cst_92 {dimension_numbers = #tpu.dot_dimension_numbers<[2], [1], [1], [2], [0, 0, 0, 1, 1, 2], [0], [0]>} : vector<2x8x8xf32>, vector<2x8x8xf32>, vector<2x8x8xf32> -> vector<2x8x8xf32>
    "tpu.trace_stop"() : () -> ()
    %228 = vector.shape_cast %227 : vector<2x8x8xf32> to vector<16x8xf32>
    %229 = vector.extract_strided_slice %186 {offsets = [8, 0], sizes = [8, 32], strides = [1, 1]} : vector<32x32xf32> to vector<8x32xf32>
    %cst_93 = arith.constant dense<0.000000e+00> : vector<16x32xf32>
    %230 = tpu.matmul %228, %229, %cst_93 {dimension_numbers = #tpu.dot_dimension_numbers<[1], [0], [0], [1], [0, 0, 1, 1], [], []>} : vector<16x8xf32>, vector<8x32xf32>, vector<16x32xf32> -> vector<16x32xf32>
    %231 = arith.addf %209, %230 : vector<16x32xf32>
    %232 = vector.extract_strided_slice %184 {offsets = [0, 16], sizes = [16, 8], strides = [1, 1]} : vector<16x96xf32> to vector<16x8xf32>
    %233 = vector.shape_cast %232 : vector<16x8xf32> to vector<2x8x8xf32>
    %234 = vector.extract_strided_slice %184 {offsets = [0, 48], sizes = [16, 8], strides = [1, 1]} : vector<16x96xf32> to vector<16x8xf32>
    %235 = vector.shape_cast %234 : vector<16x8xf32> to vector<2x8x8xf32>
    %236 = vector.extract_strided_slice %184 {offsets = [0, 80], sizes = [16, 8], strides = [1, 1]} : vector<16x96xf32> to vector<16x8xf32>
    %237 = vector.shape_cast %236 : vector<16x8xf32> to vector<2x8x8xf32>
    "tpu.trace_start"() <{level = 10 : i32, message = "bqd,bkd->bqk"}> : () -> ()
    %cst_94 = arith.constant dense<0.000000e+00> : vector<2x8x8xf32>
    %238 = tpu.matmul %233, %235, %cst_94 {dimension_numbers = #tpu.dot_dimension_numbers<[2], [2], [1], [1], [0, 0, 0, 1, 1, 1], [0], [0]>} : vector<2x8x8xf32>, vector<2x8x8xf32>, vector<2x8x8xf32> -> vector<2x8x8xf32>
    "tpu.trace_stop"() : () -> ()
    %cst_95 = arith.constant dense<0xFF800000> : vector<2x8xf32>
    %239 = vector.multi_reduction <maximumf>, %238, %cst_95 [2] : vector<2x8x8xf32> to vector<2x8xf32>
    %240 = vector.shape_cast %239 : vector<2x8xf32> to vector<2x8x1xf32>
    %241 = vector.broadcast %240 : vector<2x8x1xf32> to vector<2x8x8xf32>
    %242 = arith.subf %238, %241 : vector<2x8x8xf32>
    %243 = math.exp %242 : vector<2x8x8xf32>
    %cst_96 = arith.constant dense<0.000000e+00> : vector<2x8xf32>
    %244 = vector.multi_reduction <add>, %243, %cst_96 [2] : vector<2x8x8xf32> to vector<2x8xf32>
    %245 = vector.shape_cast %244 : vector<2x8xf32> to vector<2x8x1xf32>
    %246 = tpu.reciprocal %245 : vector<2x8x1xf32> -> vector<2x8x1xf32>
    %247 = vector.broadcast %246 : vector<2x8x1xf32> to vector<2x8x8xf32>
    %248 = arith.mulf %243, %247 : vector<2x8x8xf32>
    "tpu.trace_start"() <{level = 10 : i32, message = "bqk,bkd->bqd"}> : () -> ()
    %cst_97 = arith.constant dense<0.000000e+00> : vector<2x8x8xf32>
    %249 = tpu.matmul %248, %237, %cst_97 {dimension_numbers = #tpu.dot_dimension_numbers<[2], [1], [1], [2], [0, 0, 0, 1, 1, 2], [0], [0]>} : vector<2x8x8xf32>, vector<2x8x8xf32>, vector<2x8x8xf32> -> vector<2x8x8xf32>
    "tpu.trace_stop"() : () -> ()
    %250 = vector.shape_cast %249 : vector<2x8x8xf32> to vector<16x8xf32>
    %251 = vector.extract_strided_slice %186 {offsets = [16, 0], sizes = [8, 32], strides = [1, 1]} : vector<32x32xf32> to vector<8x32xf32>
    %cst_98 = arith.constant dense<0.000000e+00> : vector<16x32xf32>
    %252 = tpu.matmul %250, %251, %cst_98 {dimension_numbers = #tpu.dot_dimension_numbers<[1], [0], [0], [1], [0, 0, 1, 1], [], []>} : vector<16x8xf32>, vector<8x32xf32>, vector<16x32xf32> -> vector<16x32xf32>
    %253 = arith.addf %231, %252 : vector<16x32xf32>
    %254 = vector.extract_strided_slice %184 {offsets = [0, 24], sizes = [16, 8], strides = [1, 1]} : vector<16x96xf32> to vector<16x8xf32>
    %255 = vector.shape_cast %254 : vector<16x8xf32> to vector<2x8x8xf32>
    %256 = vector.extract_strided_slice %184 {offsets = [0, 56], sizes = [16, 8], strides = [1, 1]} : vector<16x96xf32> to vector<16x8xf32>
    %257 = vector.shape_cast %256 : vector<16x8xf32> to vector<2x8x8xf32>
    %258 = vector.extract_strided_slice %184 {offsets = [0, 88], sizes = [16, 8], strides = [1, 1]} : vector<16x96xf32> to vector<16x8xf32>
    %259 = vector.shape_cast %258 : vector<16x8xf32> to vector<2x8x8xf32>
    "tpu.trace_start"() <{level = 10 : i32, message = "bqd,bkd->bqk"}> : () -> ()
    %cst_99 = arith.constant dense<0.000000e+00> : vector<2x8x8xf32>
    %260 = tpu.matmul %255, %257, %cst_99 {dimension_numbers = #tpu.dot_dimension_numbers<[2], [2], [1], [1], [0, 0, 0, 1, 1, 1], [0], [0]>} : vector<2x8x8xf32>, vector<2x8x8xf32>, vector<2x8x8xf32> -> vector<2x8x8xf32>
    "tpu.trace_stop"() : () -> ()
    %cst_100 = arith.constant dense<0xFF800000> : vector<2x8xf32>
    %261 = vector.multi_reduction <maximumf>, %260, %cst_100 [2] : vector<2x8x8xf32> to vector<2x8xf32>
    %262 = vector.shape_cast %261 : vector<2x8xf32> to vector<2x8x1xf32>
    %263 = vector.broadcast %262 : vector<2x8x1xf32> to vector<2x8x8xf32>
    %264 = arith.subf %260, %263 : vector<2x8x8xf32>
    %265 = math.exp %264 : vector<2x8x8xf32>
    %cst_101 = arith.constant dense<0.000000e+00> : vector<2x8xf32>
    %266 = vector.multi_reduction <add>, %265, %cst_101 [2] : vector<2x8x8xf32> to vector<2x8xf32>
    %267 = vector.shape_cast %266 : vector<2x8xf32> to vector<2x8x1xf32>
    %268 = tpu.reciprocal %267 : vector<2x8x1xf32> -> vector<2x8x1xf32>
    %269 = vector.broadcast %268 : vector<2x8x1xf32> to vector<2x8x8xf32>
    %270 = arith.mulf %265, %269 : vector<2x8x8xf32>
    "tpu.trace_start"() <{level = 10 : i32, message = "bqk,bkd->bqd"}> : () -> ()
    %cst_102 = arith.constant dense<0.000000e+00> : vector<2x8x8xf32>
    %271 = tpu.matmul %270, %259, %cst_102 {dimension_numbers = #tpu.dot_dimension_numbers<[2], [1], [1], [2], [0, 0, 0, 1, 1, 2], [0], [0]>} : vector<2x8x8xf32>, vector<2x8x8xf32>, vector<2x8x8xf32> -> vector<2x8x8xf32>
    "tpu.trace_stop"() : () -> ()
    %272 = vector.shape_cast %271 : vector<2x8x8xf32> to vector<16x8xf32>
    %273 = vector.extract_strided_slice %186 {offsets = [24, 0], sizes = [8, 32], strides = [1, 1]} : vector<32x32xf32> to vector<8x32xf32>
    %cst_103 = arith.constant dense<0.000000e+00> : vector<16x32xf32>
    %274 = tpu.matmul %272, %273, %cst_103 {dimension_numbers = #tpu.dot_dimension_numbers<[1], [0], [0], [1], [0, 0, 1, 1], [], []>} : vector<16x8xf32>, vector<8x32xf32>, vector<16x32xf32> -> vector<16x32xf32>
    %275 = arith.addf %253, %274 : vector<16x32xf32>
    %c1_104 = arith.constant 1 : index
    %c0_105 = arith.constant 0 : index
    %c0_106 = arith.constant 0 : index
    %276 = vector.load %arg5[%c1_104, %c0_105, %c0_106] : memref<2x1x32xf32, #tpu.memory_space<vmem>>, vector<1x1x32xf32>
    %277 = vector.shape_cast %276 : vector<1x1x32xf32> to vector<1x32xf32>
    %278 = vector.broadcast %277 : vector<1x32xf32> to vector<16x32xf32>
    %279 = arith.addf %275, %278 : vector<16x32xf32>
    %280 = arith.addf %177, %279 : vector<16x32xf32>
    %c1_107 = arith.constant 1 : index
    %c0_108 = arith.constant 0 : index
    %c0_109 = arith.constant 0 : index
    %281 = vector.load %arg6[%c1_107, %c0_108, %c0_109] : memref<2x1x32xf32, #tpu.memory_space<vmem>>, vector<1x1x32xf32>
    %282 = vector.shape_cast %281 : vector<1x1x32xf32> to vector<1x32xf32>
    %c1_110 = arith.constant 1 : index
    %c0_111 = arith.constant 0 : index
    %c0_112 = arith.constant 0 : index
    %283 = vector.load %arg7[%c1_110, %c0_111, %c0_112] : memref<2x1x32xf32, #tpu.memory_space<vmem>>, vector<1x1x32xf32>
    %284 = vector.shape_cast %283 : vector<1x1x32xf32> to vector<1x32xf32>
    %cst_113 = arith.constant dense<0.000000e+00> : vector<16xf32>
    %285 = vector.multi_reduction <add>, %280, %cst_113 [1] : vector<16x32xf32> to vector<16xf32>
    %286 = vector.shape_cast %285 : vector<16xf32> to vector<16x1xf32>
    %cst_114 = arith.constant 3.200000e+01 : f32
    %287 = vector.broadcast %cst_114 : f32 to vector<16x1xf32>
    %288 = arith.divf %286, %287 : vector<16x1xf32>
    %289 = vector.broadcast %288 : vector<16x1xf32> to vector<16x32xf32>
    %290 = arith.subf %280, %289 : vector<16x32xf32>
    %291 = arith.mulf %290, %290 : vector<16x32xf32>
    %cst_115 = arith.constant dense<0.000000e+00> : vector<16xf32>
    %292 = vector.multi_reduction <add>, %291, %cst_115 [1] : vector<16x32xf32> to vector<16xf32>
    %293 = vector.shape_cast %292 : vector<16xf32> to vector<16x1xf32>
    %cst_116 = arith.constant 3.200000e+01 : f32
    %294 = vector.broadcast %cst_116 : f32 to vector<16x1xf32>
    %295 = arith.divf %293, %294 : vector<16x1xf32>
    %296 = vector.broadcast %288 : vector<16x1xf32> to vector<16x32xf32>
    %297 = arith.subf %280, %296 : vector<16x32xf32>
    %cst_117 = arith.constant 9.99999974E-6 : f32
    %298 = vector.broadcast %cst_117 : f32 to vector<16x1xf32>
    %299 = arith.addf %295, %298 : vector<16x1xf32>
    %300 = math.rsqrt %299 : vector<16x1xf32>
    %301 = vector.broadcast %300 : vector<16x1xf32> to vector<16x32xf32>
    %302 = arith.mulf %297, %301 : vector<16x32xf32>
    %303 = vector.broadcast %282 : vector<1x32xf32> to vector<16x32xf32>
    %304 = arith.mulf %302, %303 : vector<16x32xf32>
    %305 = vector.broadcast %284 : vector<1x32xf32> to vector<16x32xf32>
    %306 = arith.addf %304, %305 : vector<16x32xf32>
    %c1_118 = arith.constant 1 : index
    %c0_119 = arith.constant 0 : index
    %c0_120 = arith.constant 0 : index
    %307 = vector.load %arg10[%c1_118, %c0_119, %c0_120] : memref<2x32x32xf32, #tpu.memory_space<vmem>>, vector<1x32x32xf32>
    %308 = vector.shape_cast %307 : vector<1x32x32xf32> to vector<32x32xf32>
    %cst_121 = arith.constant dense<0.000000e+00> : vector<16x32xf32>
    %309 = tpu.matmul %306, %308, %cst_121 {dimension_numbers = #tpu.dot_dimension_numbers<[1], [0], [0], [1], [0, 0, 1, 1], [], []>} : vector<16x32xf32>, vector<32x32xf32>, vector<16x32xf32> -> vector<16x32xf32>
    %c1_122 = arith.constant 1 : index
    %c0_123 = arith.constant 0 : index
    %c0_124 = arith.constant 0 : index
    %310 = vector.load %arg11[%c1_122, %c0_123, %c0_124] : memref<2x1x32xf32, #tpu.memory_space<vmem>>, vector<1x1x32xf32>
    %311 = vector.shape_cast %310 : vector<1x1x32xf32> to vector<1x32xf32>
    %312 = vector.broadcast %311 : vector<1x32xf32> to vector<16x32xf32>
    %313 = arith.addf %309, %312 : vector<16x32xf32>
    %cst_125 = arith.constant 0.000000e+00 : f32
    %314 = vector.broadcast %cst_125 : f32 to vector<16x32xf32>
    %315 = arith.maximumf %313, %314 : vector<16x32xf32>
    %c1_126 = arith.constant 1 : index
    %c0_127 = arith.constant 0 : index
    %c0_128 = arith.constant 0 : index
    %316 = vector.load %arg12[%c1_126, %c0_127, %c0_128] : memref<2x32x32xf32, #tpu.memory_space<vmem>>, vector<1x32x32xf32>
    %317 = vector.shape_cast %316 : vector<1x32x32xf32> to vector<32x32xf32>
    %cst_129 = arith.constant dense<0.000000e+00> : vector<16x32xf32>
    %318 = tpu.matmul %315, %317, %cst_129 {dimension_numbers = #tpu.dot_dimension_numbers<[1], [0], [0], [1], [0, 0, 1, 1], [], []>} : vector<16x32xf32>, vector<32x32xf32>, vector<16x32xf32> -> vector<16x32xf32>
    %c1_130 = arith.constant 1 : index
    %c0_131 = arith.constant 0 : index
    %c0_132 = arith.constant 0 : index
    %319 = vector.load %arg13[%c1_130, %c0_131, %c0_132] : memref<2x1x32xf32, #tpu.memory_space<vmem>>, vector<1x1x32xf32>
    %320 = vector.shape_cast %319 : vector<1x1x32xf32> to vector<1x32xf32>
    %321 = vector.broadcast %320 : vector<1x32xf32> to vector<16x32xf32>
    %322 = arith.addf %318, %321 : vector<16x32xf32>
    %323 = arith.addf %306, %322 : vector<16x32xf32>
    %c1_133 = arith.constant 1 : index
    %c0_134 = arith.constant 0 : index
    %c0_135 = arith.constant 0 : index
    %324 = vector.load %arg8[%c1_133, %c0_134, %c0_135] : memref<2x1x32xf32, #tpu.memory_space<vmem>>, vector<1x1x32xf32>
    %325 = vector.shape_cast %324 : vector<1x1x32xf32> to vector<1x32xf32>
    %c1_136 = arith.constant 1 : index
    %c0_137 = arith.constant 0 : index
    %c0_138 = arith.constant 0 : index
    %326 = vector.load %arg9[%c1_136, %c0_137, %c0_138] : memref<2x1x32xf32, #tpu.memory_space<vmem>>, vector<1x1x32xf32>
    %327 = vector.shape_cast %326 : vector<1x1x32xf32> to vector<1x32xf32>
    %cst_139 = arith.constant dense<0.000000e+00> : vector<16xf32>
    %328 = vector.multi_reduction <add>, %323, %cst_139 [1] : vector<16x32xf32> to vector<16xf32>
    %329 = vector.shape_cast %328 : vector<16xf32> to vector<16x1xf32>
    %cst_140 = arith.constant 3.200000e+01 : f32
    %330 = vector.broadcast %cst_140 : f32 to vector<16x1xf32>
    %331 = arith.divf %329, %330 : vector<16x1xf32>
    %332 = vector.broadcast %331 : vector<16x1xf32> to vector<16x32xf32>
    %333 = arith.subf %323, %332 : vector<16x32xf32>
    %334 = arith.mulf %333, %333 : vector<16x32xf32>
    %cst_141 = arith.constant dense<0.000000e+00> : vector<16xf32>
    %335 = vector.multi_reduction <add>, %334, %cst_141 [1] : vector<16x32xf32> to vector<16xf32>
    %336 = vector.shape_cast %335 : vector<16xf32> to vector<16x1xf32>
    %cst_142 = arith.constant 3.200000e+01 : f32
    %337 = vector.broadcast %cst_142 : f32 to vector<16x1xf32>
    %338 = arith.divf %336, %337 : vector<16x1xf32>
    %339 = vector.broadcast %331 : vector<16x1xf32> to vector<16x32xf32>
    %340 = arith.subf %323, %339 : vector<16x32xf32>
    %cst_143 = arith.constant 9.99999974E-6 : f32
    %341 = vector.broadcast %cst_143 : f32 to vector<16x1xf32>
    %342 = arith.addf %338, %341 : vector<16x1xf32>
    %343 = math.rsqrt %342 : vector<16x1xf32>
    %344 = vector.broadcast %343 : vector<16x1xf32> to vector<16x32xf32>
    %345 = arith.mulf %340, %344 : vector<16x32xf32>
    %346 = vector.broadcast %325 : vector<1x32xf32> to vector<16x32xf32>
    %347 = arith.mulf %345, %346 : vector<16x32xf32>
    %348 = vector.broadcast %327 : vector<1x32xf32> to vector<16x32xf32>
    %349 = arith.addf %347, %348 : vector<16x32xf32>
    %350 = vector.shape_cast %349 : vector<16x32xf32> to vector<2x8x32xf32>
    %cst_144 = arith.constant dense<0.000000e+00> : vector<2x32xf32>
    %351 = vector.multi_reduction <add>, %350, %cst_144 [1] : vector<2x8x32xf32> to vector<2x32xf32>
    %cst_145 = arith.constant 8.000000e+00 : f32
    %352 = vector.broadcast %cst_145 : f32 to vector<2x32xf32>
    %353 = arith.divf %351, %352 : vector<2x32xf32>
    %c0_146 = arith.constant 0 : index
    %c0_147 = arith.constant 0 : index
    %354 = vector.load %arg14[%c0_146, %c0_147] : memref<32x32xf32, #tpu.memory_space<vmem>>, vector<32x32xf32>
    %cst_148 = arith.constant dense<0.000000e+00> : vector<2x32xf32>
    %355 = tpu.matmul %353, %354, %cst_148 {dimension_numbers = #tpu.dot_dimension_numbers<[1], [0], [0], [1], [0, 0, 1, 1], [], []>} : vector<2x32xf32>, vector<32x32xf32>, vector<2x32xf32> -> vector<2x32xf32>
    %c0_149 = arith.constant 0 : index
    %c0_150 = arith.constant 0 : index
    %356 = vector.load %arg15[%c0_149, %c0_150] : memref<1x32xf32, #tpu.memory_space<vmem>>, vector<1x32xf32>
    %357 = vector.broadcast %356 : vector<1x32xf32> to vector<2x32xf32>
    %358 = arith.addf %355, %357 : vector<2x32xf32>
    %c0_151 = arith.constant 0 : index
    %c0_152 = arith.constant 0 : index
    %359 = vector.load %arg16[%c0_151, %c0_152] : memref<1x32xf32, #tpu.memory_space<vmem>>, vector<1x32xf32>
    %c0_153 = arith.constant 0 : index
    %c0_154 = arith.constant 0 : index
    %360 = vector.load %arg17[%c0_153, %c0_154] : memref<1x32xf32, #tpu.memory_space<vmem>>, vector<1x32xf32>
    %cst_155 = arith.constant dense<0.000000e+00> : vector<2xf32>
    %361 = vector.multi_reduction <add>, %358, %cst_155 [1] : vector<2x32xf32> to vector<2xf32>
    %362 = vector.shape_cast %361 : vector<2xf32> to vector<2x1xf32>
    %cst_156 = arith.constant 3.200000e+01 : f32
    %363 = vector.broadcast %cst_156 : f32 to vector<2x1xf32>
    %364 = arith.divf %362, %363 : vector<2x1xf32>
    %365 = vector.broadcast %364 : vector<2x1xf32> to vector<2x32xf32>
    %366 = arith.subf %358, %365 : vector<2x32xf32>
    %367 = arith.mulf %366, %366 : vector<2x32xf32>
    %cst_157 = arith.constant dense<0.000000e+00> : vector<2xf32>
    %368 = vector.multi_reduction <add>, %367, %cst_157 [1] : vector<2x32xf32> to vector<2xf32>
    %369 = vector.shape_cast %368 : vector<2xf32> to vector<2x1xf32>
    %cst_158 = arith.constant 3.200000e+01 : f32
    %370 = vector.broadcast %cst_158 : f32 to vector<2x1xf32>
    %371 = arith.divf %369, %370 : vector<2x1xf32>
    %372 = vector.broadcast %364 : vector<2x1xf32> to vector<2x32xf32>
    %373 = arith.subf %358, %372 : vector<2x32xf32>
    %cst_159 = arith.constant 9.99999974E-6 : f32
    %374 = vector.broadcast %cst_159 : f32 to vector<2x1xf32>
    %375 = arith.addf %371, %374 : vector<2x1xf32>
    %376 = math.rsqrt %375 : vector<2x1xf32>
    %377 = vector.broadcast %376 : vector<2x1xf32> to vector<2x32xf32>
    %378 = arith.mulf %373, %377 : vector<2x32xf32>
    %379 = vector.broadcast %359 : vector<1x32xf32> to vector<2x32xf32>
    %380 = arith.mulf %378, %379 : vector<2x32xf32>
    %381 = vector.broadcast %360 : vector<1x32xf32> to vector<2x32xf32>
    %382 = arith.addf %380, %381 : vector<2x32xf32>
    %cst_160 = arith.constant 0.000000e+00 : f32
    %383 = vector.broadcast %cst_160 : f32 to vector<2x32xf32>
    %384 = arith.maximumf %382, %383 : vector<2x32xf32>
    %c0_161 = arith.constant 0 : index
    %c0_162 = arith.constant 0 : index
    %385 = vector.load %arg18[%c0_161, %c0_162] : memref<32x16xf32, #tpu.memory_space<vmem>>, vector<32x16xf32>
    %cst_163 = arith.constant dense<0.000000e+00> : vector<2x16xf32>
    %386 = tpu.matmul %384, %385, %cst_163 {dimension_numbers = #tpu.dot_dimension_numbers<[1], [0], [0], [1], [0, 0, 1, 1], [], []>} : vector<2x32xf32>, vector<32x16xf32>, vector<2x16xf32> -> vector<2x16xf32>
    %c0_164 = arith.constant 0 : index
    %c0_165 = arith.constant 0 : index
    %387 = vector.load %arg19[%c0_164, %c0_165] : memref<1x16xf32, #tpu.memory_space<vmem>>, vector<1x16xf32>
    %388 = vector.broadcast %387 : vector<1x16xf32> to vector<2x16xf32>
    %389 = arith.addf %386, %388 : vector<2x16xf32>
    %c0_166 = arith.constant 0 : index
    %c0_167 = arith.constant 0 : index
    %390 = vector.load %arg20[%c0_166, %c0_167] : memref<2x16xf32, #tpu.memory_space<vmem>>, vector<2x16xf32>
    tpu.vector_store %arg20[%c0_166, %c0_167], %389 {strides = array<i32>} : memref<2x16xf32, #tpu.memory_space<vmem>>, vector<2x16xf32>,
    return
  }
}

</mosaic_0001>

<llo_original>
// kernel: tpu_custom_call.1
$region0: #{tpu_custom_call.1}
  #allocation0 [shape = 'u32[]', space=smem, size = 0x4, offset = 0x4, fixed_abs, tag = 'smem constant byte address 0x4 - core index']
  #allocation1 [shape = 'u32[72,128]{1,0:T(1,128)}', space=vmem, size = 0x9000, scoped, tag = 'internal scratch']
  %s0 = inlined_call_operand.vmem [shape: f32[2,8,32], index: 0, kind: input, shape index: {}]
  %s1 = inlined_call_operand.hbm [shape: f32[8,32], index: 1, kind: input, shape index: {}]
  %s2 = inlined_call_operand.hbm [shape: f32[2,32,96], index: 2, kind: input, shape index: {}]
  %s3 = inlined_call_operand.hbm [shape: f32[2,1,96], index: 3, kind: input, shape index: {}]
  %s4 = inlined_call_operand.hbm [shape: f32[2,32,32], index: 4, kind: input, shape index: {}]
  %s5 = inlined_call_operand.hbm [shape: f32[2,1,32], index: 5, kind: input, shape index: {}]
  %s6 = inlined_call_operand.hbm [shape: f32[2,1,32], index: 6, kind: input, shape index: {}]
  %s7 = inlined_call_operand.hbm [shape: f32[2,1,32], index: 7, kind: input, shape index: {}]
  %s8 = inlined_call_operand.hbm [shape: f32[2,1,32], index: 8, kind: input, shape index: {}]
  %s9 = inlined_call_operand.hbm [shape: f32[2,1,32], index: 9, kind: input, shape index: {}]
  %s10 = inlined_call_operand.hbm [shape: f32[2,32,32], index: 10, kind: input, shape index: {}]
  %s11 = inlined_call_operand.hbm [shape: f32[2,1,32], index: 11, kind: input, shape index: {}]
  %s12 = inlined_call_operand.hbm [shape: f32[2,32,32], index: 12, kind: input, shape index: {}]
  %s13 = inlined_call_operand.hbm [shape: f32[2,1,32], index: 13, kind: input, shape index: {}]
  %s14 = inlined_call_operand.vmem [shape: f32[32,32], index: 14, kind: input, shape index: {}]
  %s15 = inlined_call_operand.vmem [shape: f32[1,32], index: 15, kind: input, shape index: {}]
  %s16 = inlined_call_operand.hbm [shape: f32[1,32], index: 16, kind: input, shape index: {}]
  %s17 = inlined_call_operand.hbm [shape: f32[1,32], index: 17, kind: input, shape index: {}]
  %s18 = inlined_call_operand.vmem [shape: f32[32,16], index: 18, kind: input, shape index: {}]
  %s19 = inlined_call_operand.vmem [shape: f32[1,16], index: 19, kind: input, shape index: {}]
  %s20 = inlined_call_operand.hbm [shape: f32[2,16], index: 20, kind: output, shape index: {}]
  %s21 = sld [smem:[#allocation0]]
  $region150: #{tpu_custom_call.1} parent=0
    _
  %s23 = ssub.s32 1, %s21
  %s24 = scalar_select 0, %s23, %s21
  $region1: #{tpu_custom_call.1} parent=0
    #allocation2 [shape = 'u8[4096]{0}', space=vmem, size = 0x1000, scoped, tag = 'input window, operand 1, single buffered']
    #allocation3 [shape = 's32[1]{0}', space=sflag, size = 0x4, scoped, tag = 'scoped memory for tpu_custom_call.1']
    #allocation4 [shape = 's32[1]{0}', space=sflag, size = 0x4, scoped, tag = 'scoped memory for tpu_custom_call.1']
    #allocation5 [shape = 'u8[32768]{0}', space=vmem, size = 0x8000, scoped, tag = 'input window, operand 2, single buffered']
    #allocation6 [shape = 's32[1]{0}', space=sflag, size = 0x4, scoped, tag = 'scoped memory for tpu_custom_call.1']
    #allocation7 [shape = 'u8[1024]{0}', space=vmem, size = 0x400, scoped, tag = 'input window, operand 3, single buffered']
    #allocation8 [shape = 'u8[32768]{0}', space=vmem, size = 0x8000, scoped, tag = 'input window, operand 4, single buffered']
    #allocation9 [shape = 's32[1]{0}', space=sflag, size = 0x4, scoped, tag = 'scoped memory for tpu_custom_call.1']
    #allocation10 [shape = 'u8[1024]{0}', space=vmem, size = 0x400, scoped, tag = 'input window, operand 5, single buffered']
    #allocation11 [shape = 'u8[1024]{0}', space=vmem, size = 0x400, scoped, tag = 'input window, operand 6, single buffered']
    #allocation12 [shape = 's32[1]{0}', space=sflag, size = 0x4, scoped, tag = 'scoped memory for tpu_custom_call.1']
    #allocation13 [shape = 'u8[1024]{0}', space=vmem, size = 0x400, scoped, tag = 'input window, operand 7, single buffered']
    #allocation14 [shape = 'u8[1024]{0}', space=vmem, size = 0x400, scoped, tag = 'input window, operand 8, single buffered']
    #allocation15 [shape = 's32[1]{0}', space=sflag, size = 0x4, scoped, tag = 'scoped memory for tpu_custom_call.1']
    #allocation16 [shape = 'u8[1024]{0}', space=vmem, size = 0x400, scoped, tag = 'input window, operand 9, single buffered']
    #allocation17 [shape = 'u8[32768]{0}', space=vmem, size = 0x8000, scoped, tag = 'input window, operand 10, single buffered']
    #allocation18 [shape = 's32[1]{0}', space=sflag, size = 0x4, scoped, tag = 'scoped memory for tpu_custom_call.1']
    #allocation19 [shape = 'u8[1024]{0}', space=vmem, size = 0x400, scoped, tag = 'input window, operand 11, single buffered']
    #allocation20 [shape = 'u8[32768]{0}', space=vmem, size = 0x8000, scoped, tag = 'input window, operand 12, single buffered']
    #allocation21 [shape = 's32[1]{0}', space=sflag, size = 0x4, scoped, tag = 'scoped memory for tpu_custom_call.1']
    #allocation22 [shape = 'u8[1024]{0}', space=vmem, size = 0x400, scoped, tag = 'input window, operand 13, single buffered']
    #allocation23 [shape = 'u8[512]{0}', space=vmem, size = 0x400, scoped, tag = 'input window, operand 16, single buffered']
    #allocation24 [shape = 's32[1]{0}', space=sflag, size = 0x4, scoped, tag = 'scoped memory for tpu_custom_call.1']
    #allocation25 [shape = 'u8[512]{0}', space=vmem, size = 0x400, scoped, tag = 'input window, operand 17, single buffered']
    #allocation26 [shape = 'u8[1024]{0}', space=vmem, size = 0x400, scoped, tag = 'output window, operand 0, single buffered']
    %25 = vsyncpa [#allocation3], 0
    %26 = vsyncpa [#allocation6], 0
    %27 = vsyncpa [#allocation9], 0
    %28 = vsyncpa [#allocation12], 0
    %29 = vsyncpa [#allocation15], 0
    %30 = vsyncpa [#allocation18], 0
    %31 = vsyncpa [#allocation21], 0
    %32 = vsyncpa [#allocation24], 0
    %33 = vsyncpa [#allocation4], 0
    // Predicated region
    $region2: #{tpu_custom_call.1} parent=1 // pred_check
      _
    $region3: #{tpu_custom_call.1} parent=1 // pred_check_branch
      %35 = sbr.rel (0) target = $region5
    $region4: #{tpu_custom_call.1} parent=1 // pred_region
      _
    $region5: #{tpu_custom_call.1} parent=1 // pred_fallthru
      _
    // Predicated region
    $region6: #{tpu_custom_call.1} parent=1 // pred_check
      _
    $region7: #{tpu_custom_call.1} parent=1 // pred_check_branch
      %37 = sbr.rel (0) target = $region9
    $region8: #{tpu_custom_call.1} parent=1 // pred_region
      %39 = vsyncadd [#allocation3], 0
      %s41 = sshll.u32 %s1, 4
      %s42 = int_to_ptr.hbm [resolvable:$true] %s41
      %s43 = sshll.u32 [#allocation2], 4
      %s44 = int_to_ptr.vmem [resolvable:$true] %s43
      %46 = dma.hbm_to_vmem [thread:$0]  %s42, 128, %s44, [#allocation3]
    $region9: #{tpu_custom_call.1} parent=1 // pred_fallthru
      _
    // Predicated region
    $region10: #{tpu_custom_call.1} parent=1 // pred_check
      _
    $region11: #{tpu_custom_call.1} parent=1 // pred_check_branch
      %48 = sbr.rel (0) target = $region13
    $region12: #{tpu_custom_call.1} parent=1 // pred_region
      %50 = vsyncadd [#allocation6], 0
      %s51 = sshll.u32 %s2, 4
      %s52 = int_to_ptr.hbm [resolvable:$true] %s51
      %s53 = sshll.u32 [#allocation5], 4
      %s54 = int_to_ptr.vmem [resolvable:$true] %s53
      %59 = dma.hbm_to_vmem [thread:$0]  %s52, 1024, %s54, [#allocation6], 128, 128, 8
    $region13: #{tpu_custom_call.1} parent=1 // pred_fallthru
      _
    // Predicated region
    $region14: #{tpu_custom_call.1} parent=1 // pred_check
      _
    $region15: #{tpu_custom_call.1} parent=1 // pred_check_branch
      %61 = sbr.rel (0) target = $region17
    $region16: #{tpu_custom_call.1} parent=1 // pred_region
      %63 = vsyncadd [#allocation6], 0
      %s64 = sshll.u32 %s3, 4
      %s65 = int_to_ptr.hbm [resolvable:$true] %s64
      %s66 = sshll.u32 [#allocation7], 4
      %s67 = int_to_ptr.vmem [resolvable:$true] %s66
      %72 = dma.hbm_to_vmem [thread:$0]  %s65, 32, %s67, [#allocation6], 16, 16, 1
    $region17: #{tpu_custom_call.1} parent=1 // pred_fallthru
      _
    // Predicated region
    $region18: #{tpu_custom_call.1} parent=1 // pred_check
      _
    $region19: #{tpu_custom_call.1} parent=1 // pred_check_branch
      %74 = sbr.rel (0) target = $region21
    $region20: #{tpu_custom_call.1} parent=1 // pred_region
      %76 = vsyncadd [#allocation9], 0
      %s77 = sshll.u32 %s4, 4
      %s78 = int_to_ptr.hbm [resolvable:$true] %s77
      %s79 = sshll.u32 [#allocation8], 4
      %s80 = int_to_ptr.vmem [resolvable:$true] %s79
      %85 = dma.hbm_to_vmem [thread:$0]  %s78, 1024, %s80, [#allocation9], 128, 128, 8
    $region21: #{tpu_custom_call.1} parent=1 // pred_fallthru
      _
    // Predicated region
    $region22: #{tpu_custom_call.1} parent=1 // pred_check
      _
    $region23: #{tpu_custom_call.1} parent=1 // pred_check_branch
      %87 = sbr.rel (0) target = $region25
    $region24: #{tpu_custom_call.1} parent=1 // pred_region
      %89 = vsyncadd [#allocation9], 0
      %s90 = sshll.u32 %s5, 4
      %s91 = int_to_ptr.hbm [resolvable:$true] %s90
      %s92 = sshll.u32 [#allocation10], 4
      %s93 = int_to_ptr.vmem [resolvable:$true] %s92
      %98 = dma.hbm_to_vmem [thread:$0]  %s91, 32, %s93, [#allocation9], 16, 16, 1
    $region25: #{tpu_custom_call.1} parent=1 // pred_fallthru
      _
    // Predicated region
    $region26: #{tpu_custom_call.1} parent=1 // pred_check
      _
    $region27: #{tpu_custom_call.1} parent=1 // pred_check_branch
      %100 = sbr.rel (0) target = $region29
    $region28: #{tpu_custom_call.1} parent=1 // pred_region
      %102 = vsyncadd [#allocation12], 0
      %s103 = sshll.u32 %s6, 4
      %s104 = int_to_ptr.hbm [resolvable:$true] %s103
      %s105 = sshll.u32 [#allocation11], 4
      %s106 = int_to_ptr.vmem [resolvable:$true] %s105
      %111 = dma.hbm_to_vmem [thread:$0]  %s104, 32, %s106, [#allocation12], 16, 16, 1
    $region29: #{tpu_custom_call.1} parent=1 // pred_fallthru
      _
    // Predicated region
    $region30: #{tpu_custom_call.1} parent=1 // pred_check
      _
    $region31: #{tpu_custom_call.1} parent=1 // pred_check_branch
      %113 = sbr.rel (0) target = $region33
    $region32: #{tpu_custom_call.1} parent=1 // pred_region
      %115 = vsyncadd [#allocation12], 0
      %s116 = sshll.u32 %s7, 4
      %s117 = int_to_ptr.hbm [resolvable:$true] %s116
      %s118 = sshll.u32 [#allocation13], 4
      %s119 = int_to_ptr.vmem [resolvable:$true] %s118
      %124 = dma.hbm_to_vmem [thread:$0]  %s117, 32, %s119, [#allocation12], 16, 16, 1
    $region33: #{tpu_custom_call.1} parent=1 // pred_fallthru
      _
    // Predicated region
    $region34: #{tpu_custom_call.1} parent=1 // pred_check
      _
    $region35: #{tpu_custom_call.1} parent=1 // pred_check_branch
      %126 = sbr.rel (0) target = $region37
    $region36: #{tpu_custom_call.1} parent=1 // pred_region
      %128 = vsyncadd [#allocation15], 0
      %s129 = sshll.u32 %s8, 4
      %s130 = int_to_ptr.hbm [resolvable:$true] %s129
      %s131 = sshll.u32 [#allocation14], 4
      %s132 = int_to_ptr.vmem [resolvable:$true] %s131
      %137 = dma.hbm_to_vmem [thread:$0]  %s130, 32, %s132, [#allocation15], 16, 16, 1
    $region37: #{tpu_custom_call.1} parent=1 // pred_fallthru
      _
    // Predicated region
    $region38: #{tpu_custom_call.1} parent=1 // pred_check
      _
    $region39: #{tpu_custom_call.1} parent=1 // pred_check_branch
      %139 = sbr.rel (0) target = $region41
    $region40: #{tpu_custom_call.1} parent=1 // pred_region
      %141 = vsyncadd [#allocation15], 0
      %s142 = sshll.u32 %s9, 4
      %s143 = int_to_ptr.hbm [resolvable:$true] %s142
      %s144 = sshll.u32 [#allocation16], 4
      %s145 = int_to_ptr.vmem [resolvable:$true] %s144
      %150 = dma.hbm_to_vmem [thread:$0]  %s143, 32, %s145, [#allocation15], 16, 16, 1
    $region41: #{tpu_custom_call.1} parent=1 // pred_fallthru
      _
    // Predicated region
    $region42: #{tpu_custom_call.1} parent=1 // pred_check
      _
    $region43: #{tpu_custom_call.1} parent=1 // pred_check_branch
      %152 = sbr.rel (0) target = $region45
    $region44: #{tpu_custom_call.1} parent=1 // pred_region
      %154 = vsyncadd [#allocation18], 0
      %s155 = sshll.u32 %s10, 4
      %s156 = int_to_ptr.hbm [resolvable:$true] %s155
      %s157 = sshll.u32 [#allocation17], 4
      %s158 = int_to_ptr.vmem [resolvable:$true] %s157
      %163 = dma.hbm_to_vmem [thread:$0]  %s156, 1024, %s158, [#allocation18], 128, 128, 8
    $region45: #{tpu_custom_call.1} parent=1 // pred_fallthru
      _
    // Predicated region
    $region46: #{tpu_custom_call.1} parent=1 // pred_check
      _
    $region47: #{tpu_custom_call.1} parent=1 // pred_check_branch
      %165 = sbr.rel (0) target = $region49
    $region48: #{tpu_custom_call.1} parent=1 // pred_region
      %167 = vsyncadd [#allocation18], 0
      %s168 = sshll.u32 %s11, 4
      %s169 = int_to_ptr.hbm [resolvable:$true] %s168
      %s170 = sshll.u32 [#allocation19], 4
      %s171 = int_to_ptr.vmem [resolvable:$true] %s170
      %176 = dma.hbm_to_vmem [thread:$0]  %s169, 32, %s171, [#allocation18], 16, 16, 1
    $region49: #{tpu_custom_call.1} parent=1 // pred_fallthru
      _
    // Predicated region
    $region50: #{tpu_custom_call.1} parent=1 // pred_check
      _
    $region51: #{tpu_custom_call.1} parent=1 // pred_check_branch
      %178 = sbr.rel (0) target = $region53
    $region52: #{tpu_custom_call.1} parent=1 // pred_region
      %180 = vsyncadd [#allocation21], 0
      %s181 = sshll.u32 %s12, 4
      %s182 = int_to_ptr.hbm [resolvable:$true] %s181
      %s183 = sshll.u32 [#allocation20], 4
      %s184 = int_to_ptr.vmem [resolvable:$true] %s183
      %189 = dma.hbm_to_vmem [thread:$0]  %s182, 1024, %s184, [#allocation21], 128, 128, 8
    $region53: #{tpu_custom_call.1} parent=1 // pred_fallthru
      _
    // Predicated region
    $region54: #{tpu_custom_call.1} parent=1 // pred_check
      _
    $region55: #{tpu_custom_call.1} parent=1 // pred_check_branch
      %191 = sbr.rel (0) target = $region57
    $region56: #{tpu_custom_call.1} parent=1 // pred_region
      %193 = vsyncadd [#allocation21], 0
      %s194 = sshll.u32 %s13, 4
      %s195 = int_to_ptr.hbm [resolvable:$true] %s194
      %s196 = sshll.u32 [#allocation22], 4
      %s197 = int_to_ptr.vmem [resolvable:$true] %s196
      %202 = dma.hbm_to_vmem [thread:$0]  %s195, 32, %s197, [#allocation21], 16, 16, 1
    $region57: #{tpu_custom_call.1} parent=1 // pred_fallthru
      _
    // Predicated region
    $region58: #{tpu_custom_call.1} parent=1 // pred_check
      _
    $region59: #{tpu_custom_call.1} parent=1 // pred_check_branch
      %204 = sbr.rel (0) target = $region61
    $region60: #{tpu_custom_call.1} parent=1 // pred_region
      _
    $region61: #{tpu_custom_call.1} parent=1 // pred_fallthru
      _
    // Predicated region
    $region62: #{tpu_custom_call.1} parent=1 // pred_check
      _
    $region63: #{tpu_custom_call.1} parent=1 // pred_check_branch
      %206 = sbr.rel (0) target = $region65
    $region64: #{tpu_custom_call.1} parent=1 // pred_region
      _
    $region65: #{tpu_custom_call.1} parent=1 // pred_fallthru
      _
    // Predicated region
    $region66: #{tpu_custom_call.1} parent=1 // pred_check
      _
    $region67: #{tpu_custom_call.1} parent=1 // pred_check_branch
      %208 = sbr.rel (0) target = $region69
    $region68: #{tpu_custom_call.1} parent=1 // pred_region
      %210 = vsyncadd [#allocation24], 0
      %s212 = sshll.u32 %s16, 4
      %s213 = int_to_ptr.hbm [resolvable:$true] %s212
      %s214 = sshll.u32 [#allocation23], 4
      %s215 = int_to_ptr.vmem [resolvable:$true] %s214
      %217 = dma.hbm_to_vmem [thread:$0]  %s213, 16, %s215, [#allocation24]
    $region69: #{tpu_custom_call.1} parent=1 // pred_fallthru
      _
    // Predicated region
    $region70: #{tpu_custom_call.1} parent=1 // pred_check
      _
    $region71: #{tpu_custom_call.1} parent=1 // pred_check_branch
      %219 = sbr.rel (0) target = $region73
    $region72: #{tpu_custom_call.1} parent=1 // pred_region
      %221 = vsyncadd [#allocation24], 0
      %s223 = sshll.u32 %s17, 4
      %s224 = int_to_ptr.hbm [resolvable:$true] %s223
      %s225 = sshll.u32 [#allocation25], 4
      %s226 = int_to_ptr.vmem [resolvable:$true] %s225
      %228 = dma.hbm_to_vmem [thread:$0]  %s224, 16, %s226, [#allocation24]
    $region73: #{tpu_custom_call.1} parent=1 // pred_fallthru
      _
    // Predicated region
    $region74: #{tpu_custom_call.1} parent=1 // pred_check
      _
    $region75: #{tpu_custom_call.1} parent=1 // pred_check_branch
      %230 = sbr.rel (0) target = $region77
    $region76: #{tpu_custom_call.1} parent=1 // pred_region
      _
    $region77: #{tpu_custom_call.1} parent=1 // pred_fallthru
      _
    // Predicated region
    $region78: #{tpu_custom_call.1} parent=1 // pred_check
      _
    $region79: #{tpu_custom_call.1} parent=1 // pred_check_branch
      %232 = sbr.rel (0) target = $region81
    $region80: #{tpu_custom_call.1} parent=1 // pred_region
      _
    $region81: #{tpu_custom_call.1} parent=1 // pred_fallthru
      _
    // Predicated region
    $region82: #{tpu_custom_call.1} parent=1 // pred_check
      _
    $region83: #{tpu_custom_call.1} parent=1 // pred_check_branch
      %234 = sbr.rel (0) target = $region85
    $region84: #{tpu_custom_call.1} parent=1 // pred_region
      %236 = dma.done [#allocation3], 128
    $region85: #{tpu_custom_call.1} parent=1 // pred_fallthru
      _
    // Predicated region
    $region86: #{tpu_custom_call.1} parent=1 // pred_check
      _
    $region87: #{tpu_custom_call.1} parent=1 // pred_check_branch
      %238 = sbr.rel (0) target = $region89
    $region88: #{tpu_custom_call.1} parent=1 // pred_region
      %240 = dma.done [#allocation6], 1024
    $region89: #{tpu_custom_call.1} parent=1 // pred_fallthru
      _
    // Predicated region
    $region90: #{tpu_custom_call.1} parent=1 // pred_check
      _
    $region91: #{tpu_custom_call.1} parent=1 // pred_check_branch
      %242 = sbr.rel (0) target = $region93
    $region92: #{tpu_custom_call.1} parent=1 // pred_region
      %244 = dma.done [#allocation6], 32
    $region93: #{tpu_custom_call.1} parent=1 // pred_fallthru
      _
    // Predicated region
    $region94: #{tpu_custom_call.1} parent=1 // pred_check
      _
    $region95: #{tpu_custom_call.1} parent=1 // pred_check_branch
      %246 = sbr.rel (0) target = $region97
    $region96: #{tpu_custom_call.1} parent=1 // pred_region
      %248 = dma.done [#allocation9], 1024
    $region97: #{tpu_custom_call.1} parent=1 // pred_fallthru
      _
    // Predicated region
    $region98: #{tpu_custom_call.1} parent=1 // pred_check
      _
    $region99: #{tpu_custom_call.1} parent=1 // pred_check_branch
      %250 = sbr.rel (0) target = $region101
    $region100: #{tpu_custom_call.1} parent=1 // pred_region
      %252 = dma.done [#allocation9], 32
    $region101: #{tpu_custom_call.1} parent=1 // pred_fallthru
      _
    // Predicated region
    $region102: #{tpu_custom_call.1} parent=1 // pred_check
      _
    $region103: #{tpu_custom_call.1} parent=1 // pred_check_branch
      %254 = sbr.rel (0) target = $region105
    $region104: #{tpu_custom_call.1} parent=1 // pred_region
      %256 = dma.done [#allocation12], 32
    $region105: #{tpu_custom_call.1} parent=1 // pred_fallthru
      _
    // Predicated region
    $region106: #{tpu_custom_call.1} parent=1 // pred_check
      _
    $region107: #{tpu_custom_call.1} parent=1 // pred_check_branch
      %258 = sbr.rel (0) target = $region109
    $region108: #{tpu_custom_call.1} parent=1 // pred_region
      %260 = dma.done [#allocation12], 32
    $region109: #{tpu_custom_call.1} parent=1 // pred_fallthru
      _
    // Predicated region
    $region110: #{tpu_custom_call.1} parent=1 // pred_check
      _
    $region111: #{tpu_custom_call.1} parent=1 // pred_check_branch
      %262 = sbr.rel (0) target = $region113
    $region112: #{tpu_custom_call.1} parent=1 // pred_region
      %264 = dma.done [#allocation15], 32
    $region113: #{tpu_custom_call.1} parent=1 // pred_fallthru
      _
    // Predicated region
    $region114: #{tpu_custom_call.1} parent=1 // pred_check
      _
    $region115: #{tpu_custom_call.1} parent=1 // pred_check_branch
      %266 = sbr.rel (0) target = $region117
    $region116: #{tpu_custom_call.1} parent=1 // pred_region
      %268 = dma.done [#allocation15], 32
    $region117: #{tpu_custom_call.1} parent=1 // pred_fallthru
      _
    // Predicated region
    $region118: #{tpu_custom_call.1} parent=1 // pred_check
      _
    $region119: #{tpu_custom_call.1} parent=1 // pred_check_branch
      %270 = sbr.rel (0) target = $region121
    $region120: #{tpu_custom_call.1} parent=1 // pred_region
      %272 = dma.done [#allocation18], 1024
    $region121: #{tpu_custom_call.1} parent=1 // pred_fallthru
      _
    // Predicated region
    $region122: #{tpu_custom_call.1} parent=1 // pred_check
      _
    $region123: #{tpu_custom_call.1} parent=1 // pred_check_branch
      %274 = sbr.rel (0) target = $region125
    $region124: #{tpu_custom_call.1} parent=1 // pred_region
      %276 = dma.done [#allocation18], 32
    $region125: #{tpu_custom_call.1} parent=1 // pred_fallthru
      _
    // Predicated region
    $region126: #{tpu_custom_call.1} parent=1 // pred_check
      _
    $region127: #{tpu_custom_call.1} parent=1 // pred_check_branch
      %278 = sbr.rel (0) target = $region129
    $region128: #{tpu_custom_call.1} parent=1 // pred_region
      %280 = dma.done [#allocation21], 1024
    $region129: #{tpu_custom_call.1} parent=1 // pred_fallthru
      _
    // Predicated region
    $region130: #{tpu_custom_call.1} parent=1 // pred_check
      _
    $region131: #{tpu_custom_call.1} parent=1 // pred_check_branch
      %282 = sbr.rel (0) target = $region133
    $region132: #{tpu_custom_call.1} parent=1 // pred_region
      %284 = dma.done [#allocation21], 32
    $region133: #{tpu_custom_call.1} parent=1 // pred_fallthru
      _
    // Predicated region
    $region134: #{tpu_custom_call.1} parent=1 // pred_check
      _
    $region135: #{tpu_custom_call.1} parent=1 // pred_check_branch
      %286 = sbr.rel (0) target = $region137
    $region136: #{tpu_custom_call.1} parent=1 // pred_region
      %288 = dma.done [#allocation24], 16
    $region137: #{tpu_custom_call.1} parent=1 // pred_fallthru
      _
    // Predicated region
    $region138: #{tpu_custom_call.1} parent=1 // pred_check
      _
    $region139: #{tpu_custom_call.1} parent=1 // pred_check_branch
      %290 = sbr.rel (0) target = $region141
    $region140: #{tpu_custom_call.1} parent=1 // pred_region
      %292 = dma.done [#allocation24], 16
    $region141: #{tpu_custom_call.1} parent=1 // pred_fallthru
      _
    %v293 = vld [vmem:[%s0] sm:$0xff]
    %v294 = vld [vmem:[%s0 + $0x8] sm:$0xff]
    %v295 = vld [vmem:[#allocation2] sm:$0xff]
    %v296 = vadd.f32 %v293, %v295
    %v297 = vadd.f32 %v294, %v295
    %v298 = vld [vmem:[#allocation5] sm:$0xff]
    %v299 = vld [vmem:[#allocation5 + $0x8] sm:$0xff]
    %v300 = vld [vmem:[#allocation5 + $0x10] sm:$0xff]
    %v301 = vld [vmem:[#allocation5 + $0x18] sm:$0xff]
    %v302 = vld [vmem:[#allocation7] sm:$0x1]
    %v304 = vperm.slane %v302, 0
    %vm306 = vcmask 261120
    %v308 = vsel %vm306, %v296, 0
    %v311 = vsel %vm306, %v297, 0
    %313 = vmatpush.msra.mxu0 0.0
    %314 = vmatpush.msra.mxu0 0.0
    %315 = vmatpush.msra.mxu0 0.0
    %316 = vmatpush.msra.mxu0 0.0
    %317 = vmatpush.msra.mxu0 0.0
    %318 = vmatpush.msra.mxu0 0.0
    %319 = vmatpush.msra.mxu0 0.0
    %320 = vmatpush.msra.mxu0 0.0
    %321 = vmatpush.msra.mxu0 0.0
    %322 = vmatpush.msra.mxu0 0.0
    %323 = vmatpush.msra.mxu0 0.0
    %324 = vmatpush.msra.mxu0 0.0
    %325 = vmatpush.msra.mxu0 %v301
    %326 = vmatpush.msra.mxu0 %v300
    %327 = vmatpush.msra.mxu0 %v299
    %328 = vmatpush.msra.mxu0 %v298
    %329 = vmatmul.f32.gmra.mxu0 %v308
    %v330 = vpop.f32.mrf.mxu0
    %v331 = vadd.f32 %v304, %v330
    %332 = vmatmul.f32.gmra.mxu0 %v311
    %v333 = vpop.f32.mrf.mxu0
    %v334 = vadd.f32 %v304, %v333
    %335 = vdwg.mxu0
    %v336 = vld [vmem:[#allocation8] sm:$0xff]
    %v337 = vld [vmem:[#allocation8 + $0x8] sm:$0xff]
    %v338 = vld [vmem:[#allocation8 + $0x10] sm:$0xff]
    %v339 = vld [vmem:[#allocation8 + $0x18] sm:$0xff]
    %341 = vrot.lane.b32.xlu0 %v331, 96
    %v342 = vpop.permute.xlu0 %341
    %vm343 = vcmask 64512
    %v344 = vsel %vm343, %v331, 0
    %v346 = vsel %vm343, %v342, 0
    %348 = vmatpush.xpose.msra.mxu0 0.0
    %349 = vmatpush.xpose.msra.mxu0 0.0
    %350 = vmatpush.xpose.msra.mxu0 0.0
    %351 = vmatpush.xpose.msra.mxu0 0.0
    %352 = vmatpush.xpose.msra.mxu0 0.0
    %353 = vmatpush.xpose.msra.mxu0 0.0
    %354 = vmatpush.xpose.msra.mxu0 0.0
    %355 = vmatpush.xpose.msra.mxu0 0.0
    %356 = vmatpush.xpose.msra.mxu0 0.0
    %357 = vmatpush.xpose.msra.mxu0 0.0
    %358 = vmatpush.xpose.msra.mxu0 0.0
    %359 = vmatpush.xpose.msra.mxu0 0.0
    %360 = vmatpush.xpose.msra.mxu0 0.0
    %361 = vmatpush.xpose.msra.mxu0 0.0
    %362 = vmatpush.xpose.msra.mxu0 0.0
    %363 = vmatpush.xpose.msra.mxu0 %v346
    %364 = vmatmul.f32.gmra.mxu0 %v344
    %v365 = vpop.f32.mrf.mxu0
    %v366 = vadd.f32 0.0, %v365
    %367 = vdwg.mxu0
    %369 = vrot.lane.b32.xlu0 %v334, 96
    %v370 = vpop.permute.xlu0 %369
    %v371 = vsel %vm343, %v334, 0
    %v373 = vsel %vm343, %v370, 0
    %375 = vmatpush.xpose.msra.mxu0 0.0
    %376 = vmatpush.xpose.msra.mxu0 0.0
    %377 = vmatpush.xpose.msra.mxu0 0.0
    %378 = vmatpush.xpose.msra.mxu0 0.0
    %379 = vmatpush.xpose.msra.mxu0 0.0
    %380 = vmatpush.xpose.msra.mxu0 0.0
    %381 = vmatpush.xpose.msra.mxu0 0.0
    %382 = vmatpush.xpose.msra.mxu0 0.0
    %383 = vmatpush.xpose.msra.mxu0 0.0
    %384 = vmatpush.xpose.msra.mxu0 0.0
    %385 = vmatpush.xpose.msra.mxu0 0.0
    %386 = vmatpush.xpose.msra.mxu0 0.0
    %387 = vmatpush.xpose.msra.mxu0 0.0
    %388 = vmatpush.xpose.msra.mxu0 0.0
    %389 = vmatpush.xpose.msra.mxu0 0.0
    %390 = vmatpush.xpose.msra.mxu0 %v373
    %391 = vmatmul.f32.gmra.mxu0 %v371
    %v392 = vpop.f32.mrf.mxu0
    %v393 = vadd.f32 0.0, %v392
    %394 = vdwg.mxu0
    %v395 = vsel %vm343, %v366, -inf
    %396 = vmax.xlane.f32.xlu0 %v395
    %v397 = vpop.xlane.xlu0 %396
    %v398 = vsel %vm343, %v393, -inf
    %399 = vmax.xlane.f32.xlu0 %v398
    %v400 = vpop.xlane.xlu0 %399
    %v401 = vsub.f32 %v366, %v397
    %v402 = vsub.f32 %v393, %v400
    %v403 = vmul.f32 %v401, 1.442695
    %v404 = vpow.pop %v403
    %v405 = vmul.f32 %v402, 1.442695
    %v406 = vpow.pop %v405
    %v407 = vsel %vm343, %v404, 0.0
    %408 = vadd.xlane.f32.xlu0 %v407
    %v409 = vpop.xlane.xlu0 %408
    %v410 = vsel %vm343, %v406, 0.0
    %411 = vadd.xlane.f32.xlu0 %v410
    %v412 = vpop.xlane.xlu0 %411
    %v413 = vrcp.pop %v409
    %v414 = vmul.f32 %v409, %v413
    %v415 = vsub.f32 1.0, %v414
    %v416 = vmul.f32 %v413, %v415
    %v417 = vadd.f32 %v413, %v416
    %vm418 = vweird.f32 %v409
    %vm419 = vweird.f32 %v413
    %vm420 = vmor %vm418, %vm419
    %v421 = vsel %vm420, %v413, %v417
    %v422 = vand.u32 2147483647, %v409
    %vm423 = vcmp.eq.f32.partialorder %v422, 8.507059e+37
    %v424 = vand.u32 %v409, 2147483648
    %v425 = vor.u32 1.1754944e-38, %v424
    %v426 = vsel %vm423, %v425, %v421
    %v427 = vrcp.pop %v412
    %v428 = vmul.f32 %v412, %v427
    %v429 = vsub.f32 1.0, %v428
    %v430 = vmul.f32 %v427, %v429
    %v431 = vadd.f32 %v427, %v430
    %vm432 = vweird.f32 %v412
    %vm433 = vweird.f32 %v427
    %vm434 = vmor %vm432, %vm433
    %v435 = vsel %vm434, %v427, %v431
    %v436 = vand.u32 2147483647, %v412
    %vm437 = vcmp.eq.f32.partialorder %v436, 8.507059e+37
    %v438 = vand.u32 %v412, 2147483648
    %v439 = vor.u32 1.1754944e-38, %v438
    %v440 = vsel %vm437, %v439, %v435
    %v441 = vmul.f32 %v404, %v426
    %v442 = vmul.f32 %v406, %v440
    %443 = vrot.lane.b32.xlu0 %v331, 64
    %v444 = vpop.permute.xlu0 %443
    %v447 = vsel %vm343, %v441, 0
    %449 = vmatpush.msra.mxu0 0.0
    %450 = vmatpush.msra.mxu0 0.0
    %451 = vmatpush.msra.mxu0 0.0
    %452 = vmatpush.msra.mxu0 0.0
    %453 = vmatpush.msra.mxu0 0.0
    %454 = vmatpush.msra.mxu0 0.0
    %455 = vmatpush.msra.mxu0 0.0
    %456 = vmatpush.msra.mxu0 0.0
    %457 = vmatpush.msra.mxu0 0.0
    %458 = vmatpush.msra.mxu0 0.0
    %459 = vmatpush.msra.mxu0 0.0
    %460 = vmatpush.msra.mxu0 0.0
    %461 = vmatpush.msra.mxu0 0.0
    %462 = vmatpush.msra.mxu0 0.0
    %463 = vmatpush.msra.mxu0 0.0
    %464 = vmatpush.msra.mxu0 %v444
    %465 = vmatmul.f32.gmra.mxu0 %v447
    %v466 = vpop.f32.mrf.mxu0
    %v467 = vadd.f32 0.0, %v466
    %468 = vdwg.mxu0
    %469 = vrot.lane.b32.xlu0 %v334, 64
    %v470 = vpop.permute.xlu0 %469
    %v473 = vsel %vm343, %v442, 0
    %475 = vmatpush.msra.mxu0 0.0
    %476 = vmatpush.msra.mxu0 0.0
    %477 = vmatpush.msra.mxu0 0.0
    %478 = vmatpush.msra.mxu0 0.0
    %479 = vmatpush.msra.mxu0 0.0
    %480 = vmatpush.msra.mxu0 0.0
    %481 = vmatpush.msra.mxu0 0.0
    %482 = vmatpush.msra.mxu0 0.0
    %483 = vmatpush.msra.mxu0 0.0
    %484 = vmatpush.msra.mxu0 0.0
    %485 = vmatpush.msra.mxu0 0.0
    %486 = vmatpush.msra.mxu0 0.0
    %487 = vmatpush.msra.mxu0 0.0
    %488 = vmatpush.msra.mxu0 0.0
    %489 = vmatpush.msra.mxu0 0.0
    %490 = vmatpush.msra.mxu0 %v470
    %491 = vmatmul.f32.gmra.mxu0 %v473
    %v492 = vpop.f32.mrf.mxu0
    %v493 = vadd.f32 0.0, %v492
    %494 = vdwg.mxu0
    %495 = vrot.lane.b32.xlu0 %v331, 120
    %v496 = vpop.permute.xlu0 %495
    %497 = vrot.lane.b32.xlu0 %v331, 88
    %v498 = vpop.permute.xlu0 %497
    %v499 = vsel %vm343, %v496, 0
    %v501 = vsel %vm343, %v498, 0
    %503 = vmatpush.xpose.msra.mxu0 0.0
    %504 = vmatpush.xpose.msra.mxu0 0.0
    %505 = vmatpush.xpose.msra.mxu0 0.0
    %506 = vmatpush.xpose.msra.mxu0 0.0
    %507 = vmatpush.xpose.msra.mxu0 0.0
    %508 = vmatpush.xpose.msra.mxu0 0.0
    %509 = vmatpush.xpose.msra.mxu0 0.0
    %510 = vmatpush.xpose.msra.mxu0 0.0
    %511 = vmatpush.xpose.msra.mxu0 0.0
    %512 = vmatpush.xpose.msra.mxu0 0.0
    %513 = vmatpush.xpose.msra.mxu0 0.0
    %514 = vmatpush.xpose.msra.mxu0 0.0
    %515 = vmatpush.xpose.msra.mxu0 0.0
    %516 = vmatpush.xpose.msra.mxu0 0.0
    %517 = vmatpush.xpose.msra.mxu0 0.0
    %518 = vmatpush.xpose.msra.mxu0 %v501
    %519 = vmatmul.f32.gmra.mxu0 %v499
    %v520 = vpop.f32.mrf.mxu0
    %v521 = vadd.f32 0.0, %v520
    %522 = vdwg.mxu0
    %523 = vrot.lane.b32.xlu0 %v334, 120
    %v524 = vpop.permute.xlu0 %523
    %525 = vrot.lane.b32.xlu0 %v334, 88
    %v526 = vpop.permute.xlu0 %525
    %v527 = vsel %vm343, %v524, 0
    %v529 = vsel %vm343, %v526, 0
    %531 = vmatpush.xpose.msra.mxu0 0.0
    %532 = vmatpush.xpose.msra.mxu0 0.0
    %533 = vmatpush.xpose.msra.mxu0 0.0
    %534 = vmatpush.xpose.msra.mxu0 0.0
    %535 = vmatpush.xpose.msra.mxu0 0.0
    %536 = vmatpush.xpose.msra.mxu0 0.0
    %537 = vmatpush.xpose.msra.mxu0 0.0
    %538 = vmatpush.xpose.msra.mxu0 0.0
    %539 = vmatpush.xpose.msra.mxu0 0.0
    %540 = vmatpush.xpose.msra.mxu0 0.0
    %541 = vmatpush.xpose.msra.mxu0 0.0
    %542 = vmatpush.xpose.msra.mxu0 0.0
    %543 = vmatpush.xpose.msra.mxu0 0.0
    %544 = vmatpush.xpose.msra.mxu0 0.0
    %545 = vmatpush.xpose.msra.mxu0 0.0
    %546 = vmatpush.xpose.msra.mxu0 %v529
    %547 = vmatmul.f32.gmra.mxu0 %v527
    %v548 = vpop.f32.mrf.mxu0
    %v549 = vadd.f32 0.0, %v548
    %550 = vdwg.mxu0
    %v551 = vsel %vm343, %v521, -inf
    %552 = vmax.xlane.f32.xlu0 %v551
    %v553 = vpop.xlane.xlu0 %552
    %v554 = vsel %vm343, %v549, -inf
    %555 = vmax.xlane.f32.xlu0 %v554
    %v556 = vpop.xlane.xlu0 %555
    %v557 = vsub.f32 %v521, %v553
    %v558 = vsub.f32 %v549, %v556
    %v559 = vmul.f32 %v557, 1.442695
    %v560 = vpow.pop %v559
    %v561 = vmul.f32 %v558, 1.442695
    %v562 = vpow.pop %v561
    %v563 = vsel %vm343, %v560, 0.0
    %564 = vadd.xlane.f32.xlu0 %v563
    %v565 = vpop.xlane.xlu0 %564
    %v566 = vsel %vm343, %v562, 0.0
    %567 = vadd.xlane.f32.xlu0 %v566
    %v568 = vpop.xlane.xlu0 %567
    %v569 = vrcp.pop %v565
    %v570 = vmul.f32 %v565, %v569
    %v571 = vsub.f32 1.0, %v570
    %v572 = vmul.f32 %v569, %v571
    %v573 = vadd.f32 %v569, %v572
    %vm574 = vweird.f32 %v565
    %vm575 = vweird.f32 %v569
    %vm576 = vmor %vm574, %vm575
    %v577 = vsel %vm576, %v569, %v573
    %v578 = vand.u32 2147483647, %v565
    %vm579 = vcmp.eq.f32.partialorder %v578, 8.507059e+37
    %v580 = vand.u32 %v565, 2147483648
    %v581 = vor.u32 1.1754944e-38, %v580
    %v582 = vsel %vm579, %v581, %v577
    %v583 = vrcp.pop %v568
    %v584 = vmul.f32 %v568, %v583
    %v585 = vsub.f32 1.0, %v584
    %v586 = vmul.f32 %v583, %v585
    %v587 = vadd.f32 %v583, %v586
    %vm588 = vweird.f32 %v568
    %vm589 = vweird.f32 %v583
    %vm590 = vmor %vm588, %vm589
    %v591 = vsel %vm590, %v583, %v587
    %v592 = vand.u32 2147483647, %v568
    %vm593 = vcmp.eq.f32.partialorder %v592, 8.507059e+37
    %v594 = vand.u32 %v568, 2147483648
    %v595 = vor.u32 1.1754944e-38, %v594
    %v596 = vsel %vm593, %v595, %v591
    %v597 = vmul.f32 %v560, %v582
    %v598 = vmul.f32 %v562, %v596
    %599 = vrot.lane.b32.xlu0 %v331, 56
    %v600 = vpop.permute.xlu0 %599
    %v603 = vsel %vm343, %v597, 0
    %605 = vmatpush.msra.mxu0 0.0
    %606 = vmatpush.msra.mxu0 0.0
    %607 = vmatpush.msra.mxu0 0.0
    %608 = vmatpush.msra.mxu0 0.0
    %609 = vmatpush.msra.mxu0 0.0
    %610 = vmatpush.msra.mxu0 0.0
    %611 = vmatpush.msra.mxu0 0.0
    %612 = vmatpush.msra.mxu0 0.0
    %613 = vmatpush.msra.mxu0 0.0
    %614 = vmatpush.msra.mxu0 0.0
    %615 = vmatpush.msra.mxu0 0.0
    %616 = vmatpush.msra.mxu0 0.0
    %617 = vmatpush.msra.mxu0 0.0
    %618 = vmatpush.msra.mxu0 0.0
    %619 = vmatpush.msra.mxu0 0.0
    %620 = vmatpush.msra.mxu0 %v600
    %621 = vmatmul.f32.gmra.mxu0 %v603
    %v622 = vpop.f32.mrf.mxu0
    %v623 = vadd.f32 0.0, %v622
    %624 = vdwg.mxu0
    %625 = vrot.lane.b32.xlu0 %v334, 56
    %v626 = vpop.permute.xlu0 %625
    %v629 = vsel %vm343, %v598, 0
    %631 = vmatpush.msra.mxu0 0.0
    %632 = vmatpush.msra.mxu0 0.0
    %633 = vmatpush.msra.mxu0 0.0
    %634 = vmatpush.msra.mxu0 0.0
    %635 = vmatpush.msra.mxu0 0.0
    %636 = vmatpush.msra.mxu0 0.0
    %637 = vmatpush.msra.mxu0 0.0
    %638 = vmatpush.msra.mxu0 0.0
    %639 = vmatpush.msra.mxu0 0.0
    %640 = vmatpush.msra.mxu0 0.0
    %641 = vmatpush.msra.mxu0 0.0
    %642 = vmatpush.msra.mxu0 0.0
    %643 = vmatpush.msra.mxu0 0.0
    %644 = vmatpush.msra.mxu0 0.0
    %645 = vmatpush.msra.mxu0 0.0
    %646 = vmatpush.msra.mxu0 %v626
    %647 = vmatmul.f32.gmra.mxu0 %v629
    %v648 = vpop.f32.mrf.mxu0
    %v649 = vadd.f32 0.0, %v648
    %650 = vdwg.mxu0
    %v652 = vsel %vm343, %v623, 0
    %v655 = vsel %vm343, %v649, 0
    %657 = vmatpush.msra.mxu0 0.0
    %658 = vmatpush.msra.mxu0 0.0
    %659 = vmatpush.msra.mxu0 0.0
    %660 = vmatpush.msra.mxu0 0.0
    %661 = vmatpush.msra.mxu0 0.0
    %662 = vmatpush.msra.mxu0 0.0
    %663 = vmatpush.msra.mxu0 0.0
    %664 = vmatpush.msra.mxu0 0.0
    %665 = vmatpush.msra.mxu0 0.0
    %666 = vmatpush.msra.mxu0 0.0
    %667 = vmatpush.msra.mxu0 0.0
    %668 = vmatpush.msra.mxu0 0.0
    %669 = vmatpush.msra.mxu0 0.0
    %670 = vmatpush.msra.mxu0 0.0
    %671 = vmatpush.msra.mxu0 0.0
    %672 = vmatpush.msra.mxu0 %v337
    %673 = vmatmul.f32.gmra.mxu0 %v652
    %v674 = vpop.f32.mrf.mxu0
    %v675 = vadd.f32 0.0, %v674
    %676 = vmatmul.f32.gmra.mxu0 %v655
    %v677 = vpop.f32.mrf.mxu0
    %v678 = vadd.f32 0.0, %v677
    %679 = vdwg.mxu0
    %v681 = vsel %vm343, %v467, 0
    %v684 = vsel %vm343, %v493, 0
    %686 = vmatpush.msra.mxu0 0.0
    %687 = vmatpush.msra.mxu0 0.0
    %688 = vmatpush.msra.mxu0 0.0
    %689 = vmatpush.msra.mxu0 0.0
    %690 = vmatpush.msra.mxu0 0.0
    %691 = vmatpush.msra.mxu0 0.0
    %692 = vmatpush.msra.mxu0 0.0
    %693 = vmatpush.msra.mxu0 0.0
    %694 = vmatpush.msra.mxu0 0.0
    %695 = vmatpush.msra.mxu0 0.0
    %696 = vmatpush.msra.mxu0 0.0
    %697 = vmatpush.msra.mxu0 0.0
    %698 = vmatpush.msra.mxu0 0.0
    %699 = vmatpush.msra.mxu0 0.0
    %700 = vmatpush.msra.mxu0 0.0
    %701 = vmatpush.msra.mxu0 %v336
    %702 = vmatmul.f32.gmra.mxu0 %v681
    %v703 = vpop.f32.mrf.mxu0
    %v704 = vadd.f32 %v675, %v703
    %705 = vmatmul.f32.gmra.mxu0 %v684
    %v706 = vpop.f32.mrf.mxu0
    %v707 = vadd.f32 %v678, %v706
    %708 = vdwg.mxu0
    %709 = vrot.lane.b32.xlu0 %v331, 112
    %v710 = vpop.permute.xlu0 %709
    %711 = vrot.lane.b32.xlu0 %v331, 80
    %v712 = vpop.permute.xlu0 %711
    %v713 = vsel %vm343, %v710, 0
    %v715 = vsel %vm343, %v712, 0
    %717 = vmatpush.xpose.msra.mxu0 0.0
    %718 = vmatpush.xpose.msra.mxu0 0.0
    %719 = vmatpush.xpose.msra.mxu0 0.0
    %720 = vmatpush.xpose.msra.mxu0 0.0
    %721 = vmatpush.xpose.msra.mxu0 0.0
    %722 = vmatpush.xpose.msra.mxu0 0.0
    %723 = vmatpush.xpose.msra.mxu0 0.0
    %724 = vmatpush.xpose.msra.mxu0 0.0
    %725 = vmatpush.xpose.msra.mxu0 0.0
    %726 = vmatpush.xpose.msra.mxu0 0.0
    %727 = vmatpush.xpose.msra.mxu0 0.0
    %728 = vmatpush.xpose.msra.mxu0 0.0
    %729 = vmatpush.xpose.msra.mxu0 0.0
    %730 = vmatpush.xpose.msra.mxu0 0.0
    %731 = vmatpush.xpose.msra.mxu0 0.0
    %732 = vmatpush.xpose.msra.mxu0 %v715
    %733 = vmatmul.f32.gmra.mxu0 %v713
    %v734 = vpop.f32.mrf.mxu0
    %v735 = vadd.f32 0.0, %v734
    %736 = vdwg.mxu0
    %737 = vrot.lane.b32.xlu0 %v334, 112
    %v738 = vpop.permute.xlu0 %737
    %739 = vrot.lane.b32.xlu0 %v334, 80
    %v740 = vpop.permute.xlu0 %739
    %v741 = vsel %vm343, %v738, 0
    %v743 = vsel %vm343, %v740, 0
    %745 = vmatpush.xpose.msra.mxu0 0.0
    %746 = vmatpush.xpose.msra.mxu0 0.0
    %747 = vmatpush.xpose.msra.mxu0 0.0
    %748 = vmatpush.xpose.msra.mxu0 0.0
    %749 = vmatpush.xpose.msra.mxu0 0.0
    %750 = vmatpush.xpose.msra.mxu0 0.0
    %751 = vmatpush.xpose.msra.mxu0 0.0
    %752 = vmatpush.xpose.msra.mxu0 0.0
    %753 = vmatpush.xpose.msra.mxu0 0.0
    %754 = vmatpush.xpose.msra.mxu0 0.0
    %755 = vmatpush.xpose.msra.mxu0 0.0
    %756 = vmatpush.xpose.msra.mxu0 0.0
    %757 = vmatpush.xpose.msra.mxu0 0.0
    %758 = vmatpush.xpose.msra.mxu0 0.0
    %759 = vmatpush.xpose.msra.mxu0 0.0
    %760 = vmatpush.xpose.msra.mxu0 %v743
    %761 = vmatmul.f32.gmra.mxu0 %v741
    %v762 = vpop.f32.mrf.mxu0
    %v763 = vadd.f32 0.0, %v762
    %764 = vdwg.mxu0
    %v765 = vsel %vm343, %v735, -inf
    %766 = vmax.xlane.f32.xlu0 %v765
    %v767 = vpop.xlane.xlu0 %766
    %v768 = vsel %vm343, %v763, -inf
    %769 = vmax.xlane.f32.xlu0 %v768
    %v770 = vpop.xlane.xlu0 %769
    %v771 = vsub.f32 %v735, %v767
    %v772 = vsub.f32 %v763, %v770
    %v773 = vmul.f32 %v771, 1.442695
    %v774 = vpow.pop %v773
    %v775 = vmul.f32 %v772, 1.442695
    %v776 = vpow.pop %v775
    %v777 = vsel %vm343, %v774, 0.0
    %778 = vadd.xlane.f32.xlu0 %v777
    %v779 = vpop.xlane.xlu0 %778
    %v780 = vsel %vm343, %v776, 0.0
    %781 = vadd.xlane.f32.xlu0 %v780
    %v782 = vpop.xlane.xlu0 %781
    %v783 = vrcp.pop %v779
    %v784 = vmul.f32 %v779, %v783
    %v785 = vsub.f32 1.0, %v784
    %v786 = vmul.f32 %v783, %v785
    %v787 = vadd.f32 %v783, %v786
    %vm788 = vweird.f32 %v779
    %vm789 = vweird.f32 %v783
    %vm790 = vmor %vm788, %vm789
    %v791 = vsel %vm790, %v783, %v787
    %v792 = vand.u32 2147483647, %v779
    %vm793 = vcmp.eq.f32.partialorder %v792, 8.507059e+37
    %v794 = vand.u32 %v779, 2147483648
    %v795 = vor.u32 1.1754944e-38, %v794
    %v796 = vsel %vm793, %v795, %v791
    %v797 = vrcp.pop %v782
    %v798 = vmul.f32 %v782, %v797
    %v799 = vsub.f32 1.0, %v798
    %v800 = vmul.f32 %v797, %v799
    %v801 = vadd.f32 %v797, %v800
    %vm802 = vweird.f32 %v782
    %vm803 = vweird.f32 %v797
    %vm804 = vmor %vm802, %vm803
    %v805 = vsel %vm804, %v797, %v801
    %v806 = vand.u32 2147483647, %v782
    %vm807 = vcmp.eq.f32.partialorder %v806, 8.507059e+37
    %v808 = vand.u32 %v782, 2147483648
    %v809 = vor.u32 1.1754944e-38, %v808
    %v810 = vsel %vm807, %v809, %v805
    %v811 = vmul.f32 %v774, %v796
    %v812 = vmul.f32 %v776, %v810
    %813 = vrot.lane.b32.xlu0 %v331, 48
    %v814 = vpop.permute.xlu0 %813
    %v817 = vsel %vm343, %v811, 0
    %819 = vmatpush.msra.mxu0 0.0
    %820 = vmatpush.msra.mxu0 0.0
    %821 = vmatpush.msra.mxu0 0.0
    %822 = vmatpush.msra.mxu0 0.0
    %823 = vmatpush.msra.mxu0 0.0
    %824 = vmatpush.msra.mxu0 0.0
    %825 = vmatpush.msra.mxu0 0.0
    %826 = vmatpush.msra.mxu0 0.0
    %827 = vmatpush.msra.mxu0 0.0
    %828 = vmatpush.msra.mxu0 0.0
    %829 = vmatpush.msra.mxu0 0.0
    %830 = vmatpush.msra.mxu0 0.0
    %831 = vmatpush.msra.mxu0 0.0
    %832 = vmatpush.msra.mxu0 0.0
    %833 = vmatpush.msra.mxu0 0.0
    %834 = vmatpush.msra.mxu0 %v814
    %835 = vmatmul.f32.gmra.mxu0 %v817
    %v836 = vpop.f32.mrf.mxu0
    %v837 = vadd.f32 0.0, %v836
    %838 = vdwg.mxu0
    %839 = vrot.lane.b32.xlu0 %v334, 48
    %v840 = vpop.permute.xlu0 %839
    %v843 = vsel %vm343, %v812, 0
    %845 = vmatpush.msra.mxu0 0.0
    %846 = vmatpush.msra.mxu0 0.0
    %847 = vmatpush.msra.mxu0 0.0
    %848 = vmatpush.msra.mxu0 0.0
    %849 = vmatpush.msra.mxu0 0.0
    %850 = vmatpush.msra.mxu0 0.0
    %851 = vmatpush.msra.mxu0 0.0
    %852 = vmatpush.msra.mxu0 0.0
    %853 = vmatpush.msra.mxu0 0.0
    %854 = vmatpush.msra.mxu0 0.0
    %855 = vmatpush.msra.mxu0 0.0
    %856 = vmatpush.msra.mxu0 0.0
    %857 = vmatpush.msra.mxu0 0.0
    %858 = vmatpush.msra.mxu0 0.0
    %859 = vmatpush.msra.mxu0 0.0
    %860 = vmatpush.msra.mxu0 %v840
    %861 = vmatmul.f32.gmra.mxu0 %v843
    %v862 = vpop.f32.mrf.mxu0
    %v863 = vadd.f32 0.0, %v862
    %864 = vdwg.mxu0
    %v866 = vsel %vm343, %v837, 0
    %v869 = vsel %vm343, %v863, 0
    %871 = vmatpush.msra.mxu0 0.0
    %872 = vmatpush.msra.mxu0 0.0
    %873 = vmatpush.msra.mxu0 0.0
    %874 = vmatpush.msra.mxu0 0.0
    %875 = vmatpush.msra.mxu0 0.0
    %876 = vmatpush.msra.mxu0 0.0
    %877 = vmatpush.msra.mxu0 0.0
    %878 = vmatpush.msra.mxu0 0.0
    %879 = vmatpush.msra.mxu0 0.0
    %880 = vmatpush.msra.mxu0 0.0
    %881 = vmatpush.msra.mxu0 0.0
    %882 = vmatpush.msra.mxu0 0.0
    %883 = vmatpush.msra.mxu0 0.0
    %884 = vmatpush.msra.mxu0 0.0
    %885 = vmatpush.msra.mxu0 0.0
    %886 = vmatpush.msra.mxu0 %v338
    %887 = vmatmul.f32.gmra.mxu0 %v866
    %v888 = vpop.f32.mrf.mxu0
    %v889 = vadd.f32 0.0, %v888
    %890 = vmatmul.f32.gmra.mxu0 %v869
    %v891 = vpop.f32.mrf.mxu0
    %v892 = vadd.f32 0.0, %v891
    %893 = vdwg.mxu0
    %v894 = vadd.f32 %v704, %v889
    %v895 = vadd.f32 %v707, %v892
    %896 = vrot.lane.b32.xlu0 %v331, 104
    %v897 = vpop.permute.xlu0 %896
    %898 = vrot.lane.b32.xlu0 %v331, 72
    %v899 = vpop.permute.xlu0 %898
    %v900 = vsel %vm343, %v897, 0
    %v902 = vsel %vm343, %v899, 0
    %904 = vmatpush.xpose.msra.mxu0 0.0
    %905 = vmatpush.xpose.msra.mxu0 0.0
    %906 = vmatpush.xpose.msra.mxu0 0.0
    %907 = vmatpush.xpose.msra.mxu0 0.0
    %908 = vmatpush.xpose.msra.mxu0 0.0
    %909 = vmatpush.xpose.msra.mxu0 0.0
    %910 = vmatpush.xpose.msra.mxu0 0.0
    %911 = vmatpush.xpose.msra.mxu0 0.0
    %912 = vmatpush.xpose.msra.mxu0 0.0
    %913 = vmatpush.xpose.msra.mxu0 0.0
    %914 = vmatpush.xpose.msra.mxu0 0.0
    %915 = vmatpush.xpose.msra.mxu0 0.0
    %916 = vmatpush.xpose.msra.mxu0 0.0
    %917 = vmatpush.xpose.msra.mxu0 0.0
    %918 = vmatpush.xpose.msra.mxu0 0.0
    %919 = vmatpush.xpose.msra.mxu0 %v902
    %920 = vmatmul.f32.gmra.mxu0 %v900
    %v921 = vpop.f32.mrf.mxu0
    %v922 = vadd.f32 0.0, %v921
    %923 = vdwg.mxu0
    %924 = vrot.lane.b32.xlu0 %v334, 104
    %v925 = vpop.permute.xlu0 %924
    %926 = vrot.lane.b32.xlu0 %v334, 72
    %v927 = vpop.permute.xlu0 %926
    %v928 = vsel %vm343, %v925, 0
    %v930 = vsel %vm343, %v927, 0
    %932 = vmatpush.xpose.msra.mxu0 0.0
    %933 = vmatpush.xpose.msra.mxu0 0.0
    %934 = vmatpush.xpose.msra.mxu0 0.0
    %935 = vmatpush.xpose.msra.mxu0 0.0
    %936 = vmatpush.xpose.msra.mxu0 0.0
    %937 = vmatpush.xpose.msra.mxu0 0.0
    %938 = vmatpush.xpose.msra.mxu0 0.0
    %939 = vmatpush.xpose.msra.mxu0 0.0
    %940 = vmatpush.xpose.msra.mxu0 0.0
    %941 = vmatpush.xpose.msra.mxu0 0.0
    %942 = vmatpush.xpose.msra.mxu0 0.0
    %943 = vmatpush.xpose.msra.mxu0 0.0
    %944 = vmatpush.xpose.msra.mxu0 0.0
    %945 = vmatpush.xpose.msra.mxu0 0.0
    %946 = vmatpush.xpose.msra.mxu0 0.0
    %947 = vmatpush.xpose.msra.mxu0 %v930
    %948 = vmatmul.f32.gmra.mxu0 %v928
    %v949 = vpop.f32.mrf.mxu0
    %v950 = vadd.f32 0.0, %v949
    %951 = vdwg.mxu0
    %v952 = vsel %vm343, %v922, -inf
    %953 = vmax.xlane.f32.xlu0 %v952
    %v954 = vpop.xlane.xlu0 %953
    %v955 = vsel %vm343, %v950, -inf
    %956 = vmax.xlane.f32.xlu0 %v955
    %v957 = vpop.xlane.xlu0 %956
    %v958 = vsub.f32 %v922, %v954
    %v959 = vsub.f32 %v950, %v957
    %v960 = vmul.f32 %v958, 1.442695
    %v961 = vpow.pop %v960
    %v962 = vmul.f32 %v959, 1.442695
    %v963 = vpow.pop %v962
    %v964 = vsel %vm343, %v961, 0.0
    %965 = vadd.xlane.f32.xlu0 %v964
    %v966 = vpop.xlane.xlu0 %965
    %v967 = vsel %vm343, %v963, 0.0
    %968 = vadd.xlane.f32.xlu0 %v967
    %v969 = vpop.xlane.xlu0 %968
    %v970 = vrcp.pop %v966
    %v971 = vmul.f32 %v966, %v970
    %v972 = vsub.f32 1.0, %v971
    %v973 = vmul.f32 %v970, %v972
    %v974 = vadd.f32 %v970, %v973
    %vm975 = vweird.f32 %v966
    %vm976 = vweird.f32 %v970
    %vm977 = vmor %vm975, %vm976
    %v978 = vsel %vm977, %v970, %v974
    %v979 = vand.u32 2147483647, %v966
    %vm980 = vcmp.eq.f32.partialorder %v979, 8.507059e+37
    %v981 = vand.u32 %v966, 2147483648
    %v982 = vor.u32 1.1754944e-38, %v981
    %v983 = vsel %vm980, %v982, %v978
    %v984 = vrcp.pop %v969
    %v985 = vmul.f32 %v969, %v984
    %v986 = vsub.f32 1.0, %v985
    %v987 = vmul.f32 %v984, %v986
    %v988 = vadd.f32 %v984, %v987
    %vm989 = vweird.f32 %v969
    %vm990 = vweird.f32 %v984
    %vm991 = vmor %vm989, %vm990
    %v992 = vsel %vm991, %v984, %v988
    %v993 = vand.u32 2147483647, %v969
    %vm994 = vcmp.eq.f32.partialorder %v993, 8.507059e+37
    %v995 = vand.u32 %v969, 2147483648
    %v996 = vor.u32 1.1754944e-38, %v995
    %v997 = vsel %vm994, %v996, %v992
    %v998 = vmul.f32 %v961, %v983
    %v999 = vmul.f32 %v963, %v997
    %1000 = vrot.lane.b32.xlu0 %v331, 40
    %v1001 = vpop.permute.xlu0 %1000
    %v1004 = vsel %vm343, %v998, 0
    %1006 = vmatpush.msra.mxu0 0.0
    %1007 = vmatpush.msra.mxu0 0.0
    %1008 = vmatpush.msra.mxu0 0.0
    %1009 = vmatpush.msra.mxu0 0.0
    %1010 = vmatpush.msra.mxu0 0.0
    %1011 = vmatpush.msra.mxu0 0.0
    %1012 = vmatpush.msra.mxu0 0.0
    %1013 = vmatpush.msra.mxu0 0.0
    %1014 = vmatpush.msra.mxu0 0.0
    %1015 = vmatpush.msra.mxu0 0.0
    %1016 = vmatpush.msra.mxu0 0.0
    %1017 = vmatpush.msra.mxu0 0.0
    %1018 = vmatpush.msra.mxu0 0.0
    %1019 = vmatpush.msra.mxu0 0.0
    %1020 = vmatpush.msra.mxu0 0.0
    %1021 = vmatpush.msra.mxu0 %v1001
    %1022 = vmatmul.f32.gmra.mxu0 %v1004
    %v1023 = vpop.f32.mrf.mxu0
    %v1024 = vadd.f32 0.0, %v1023
    %1025 = vdwg.mxu0
    %1026 = vrot.lane.b32.xlu0 %v334, 40
    %v1027 = vpop.permute.xlu0 %1026
    %v1030 = vsel %vm343, %v999, 0
    %1032 = vmatpush.msra.mxu0 0.0
    %1033 = vmatpush.msra.mxu0 0.0
    %1034 = vmatpush.msra.mxu0 0.0
    %1035 = vmatpush.msra.mxu0 0.0
    %1036 = vmatpush.msra.mxu0 0.0
    %1037 = vmatpush.msra.mxu0 0.0
    %1038 = vmatpush.msra.mxu0 0.0
    %1039 = vmatpush.msra.mxu0 0.0
    %1040 = vmatpush.msra.mxu0 0.0
    %1041 = vmatpush.msra.mxu0 0.0
    %1042 = vmatpush.msra.mxu0 0.0
    %1043 = vmatpush.msra.mxu0 0.0
    %1044 = vmatpush.msra.mxu0 0.0
    %1045 = vmatpush.msra.mxu0 0.0
    %1046 = vmatpush.msra.mxu0 0.0
    %1047 = vmatpush.msra.mxu0 %v1027
    %1048 = vmatmul.f32.gmra.mxu0 %v1030
    %v1049 = vpop.f32.mrf.mxu0
    %v1050 = vadd.f32 0.0, %v1049
    %1051 = vdwg.mxu0
    %v1053 = vsel %vm343, %v1024, 0
    %v1056 = vsel %vm343, %v1050, 0
    %1058 = vmatpush.msra.mxu0 0.0
    %1059 = vmatpush.msra.mxu0 0.0
    %1060 = vmatpush.msra.mxu0 0.0
    %1061 = vmatpush.msra.mxu0 0.0
    %1062 = vmatpush.msra.mxu0 0.0
    %1063 = vmatpush.msra.mxu0 0.0
    %1064 = vmatpush.msra.mxu0 0.0
    %1065 = vmatpush.msra.mxu0 0.0
    %1066 = vmatpush.msra.mxu0 0.0
    %1067 = vmatpush.msra.mxu0 0.0
    %1068 = vmatpush.msra.mxu0 0.0
    %1069 = vmatpush.msra.mxu0 0.0
    %1070 = vmatpush.msra.mxu0 0.0
    %1071 = vmatpush.msra.mxu0 0.0
    %1072 = vmatpush.msra.mxu0 0.0
    %1073 = vmatpush.msra.mxu0 %v339
    %1074 = vmatmul.f32.gmra.mxu0 %v1053
    %v1075 = vpop.f32.mrf.mxu0
    %v1076 = vadd.f32 0.0, %v1075
    %1077 = vmatmul.f32.gmra.mxu0 %v1056
    %v1078 = vpop.f32.mrf.mxu0
    %v1079 = vadd.f32 0.0, %v1078
    %1080 = vdwg.mxu0
    %v1081 = vadd.f32 %v894, %v1076
    %v1082 = vadd.f32 %v895, %v1079
    %v1083 = vld [vmem:[#allocation10] sm:$0x1]
    %v1085 = vperm.slane %v1083, 0
    %v1087 = vadd.f32 %v1081, %v1085
    %v1088 = vadd.f32 %v1082, %v1085
    %v1089 = vadd.f32 %v296, %v1087
    %v1090 = vadd.f32 %v297, %v1088
    %v1091 = vld [vmem:[#allocation11] sm:$0x1]
    %v1092 = vld [vmem:[#allocation13] sm:$0x1]
    %v1093 = vsel %vm306, %v1089, 0.0
    %1094 = vadd.xlane.f32.xlu0 %v1093
    %v1095 = vpop.xlane.xlu0 %1094
    %v1096 = vsel %vm306, %v1090, 0.0
    %1097 = vadd.xlane.f32.xlu0 %v1096
    %v1098 = vpop.xlane.xlu0 %1097
    %v1099 = vrcp.pop 32.0
    %v1100 = vmul.f32 32.0, %v1099
    %v1101 = vsub.f32 1.0, %v1100
    %v1102 = vmul.f32 %v1099, %v1101
    %v1103 = vadd.f32 %v1099, %v1102
    %vm1104 = vweird.f32 %v1099
    %v1105 = vsel %vm1104, %v1099, %v1103
    %v1106 = vmul.f32 %v1095, %v1105
    %v1107 = vmul.f32 %v1098, %v1105
    %v1108 = vsub.f32 %v1089, %v1106
    %v1109 = vsub.f32 %v1090, %v1107
    %v1110 = vmul.f32 %v1108, %v1108
    %v1111 = vmul.f32 %v1109, %v1109
    %v1112 = vsel %vm306, %v1110, 0.0
    %1113 = vadd.xlane.f32.xlu0 %v1112
    %v1114 = vpop.xlane.xlu0 %1113
    %v1115 = vsel %vm306, %v1111, 0.0
    %1116 = vadd.xlane.f32.xlu0 %v1115
    %v1117 = vpop.xlane.xlu0 %1116
    %v1118 = vmul.f32 %v1114, %v1105
    %v1119 = vmul.f32 %v1117, %v1105
    %v1120 = vadd.f32 %v1118, 1e-05
    %v1121 = vadd.f32 %v1119, 1e-05
    %v1122 = vrsqrt.pop %v1120
    %v1123 = vmul.f32 %v1122, %v1120
    %v1124 = vmul.f32 %v1123, %v1122
    %v1125 = vmul.f32 0.5, %v1124
    %v1126 = vsub.f32 1.5, %v1125
    %v1127 = vmul.f32 %v1122, %v1126
    %vm1128 = vweird.f32 %v1120
    %vm1129 = vweird.f32 %v1122
    %vm1130 = vmor %vm1128, %vm1129
    %v1131 = vsel %vm1130, %v1122, %v1127
    %v1132 = vrsqrt.pop %v1121
    %v1133 = vmul.f32 %v1132, %v1121
    %v1134 = vmul.f32 %v1133, %v1132
    %v1135 = vmul.f32 0.5, %v1134
    %v1136 = vsub.f32 1.5, %v1135
    %v1137 = vmul.f32 %v1132, %v1136
    %vm1138 = vweird.f32 %v1121
    %vm1139 = vweird.f32 %v1132
    %vm1140 = vmor %vm1138, %vm1139
    %v1141 = vsel %vm1140, %v1132, %v1137
    %v1142 = vmul.f32 %v1108, %v1131
    %v1143 = vmul.f32 %v1109, %v1141
    %v1145 = vperm.slane %v1091, 0
    %v1147 = vmul.f32 %v1142, %v1145
    %v1148 = vmul.f32 %v1143, %v1145
    %v1150 = vperm.slane %v1092, 0
    %v1152 = vadd.f32 %v1147, %v1150
    %v1153 = vadd.f32 %v1148, %v1150
    %v1154 = vld [vmem:[#allocation17] sm:$0xff]
    %v1155 = vld [vmem:[#allocation17 + $0x8] sm:$0xff]
    %v1156 = vld [vmem:[#allocation17 + $0x10] sm:$0xff]
    %v1157 = vld [vmem:[#allocation17 + $0x18] sm:$0xff]
    %v1158 = vld [vmem:[#allocation19] sm:$0x1]
    %v1160 = vperm.slane %v1158, 0
    %v1163 = vsel %vm306, %v1152, 0
    %v1166 = vsel %vm306, %v1153, 0
    %1168 = vmatpush.msra.mxu0 0.0
    %1169 = vmatpush.msra.mxu0 0.0
    %1170 = vmatpush.msra.mxu0 0.0
    %1171 = vmatpush.msra.mxu0 0.0
    %1172 = vmatpush.msra.mxu0 0.0
    %1173 = vmatpush.msra.mxu0 0.0
    %1174 = vmatpush.msra.mxu0 0.0
    %1175 = vmatpush.msra.mxu0 0.0
    %1176 = vmatpush.msra.mxu0 0.0
    %1177 = vmatpush.msra.mxu0 0.0
    %1178 = vmatpush.msra.mxu0 0.0
    %1179 = vmatpush.msra.mxu0 0.0
    %1180 = vmatpush.msra.mxu0 %v1157
    %1181 = vmatpush.msra.mxu0 %v1156
    %1182 = vmatpush.msra.mxu0 %v1155
    %1183 = vmatpush.msra.mxu0 %v1154
    %1184 = vmatmul.f32.gmra.mxu0 %v1163
    %v1185 = vpop.f32.mrf.mxu0
    %v1186 = vadd.f32 %v1160, %v1185
    %1187 = vmatmul.f32.gmra.mxu0 %v1166
    %v1188 = vpop.f32.mrf.mxu0
    %v1189 = vadd.f32 %v1160, %v1188
    %1190 = vdwg.mxu0
    %v1191 = vmax.f32 %v1186, 0.0
    %v1192 = vmax.f32 %v1189, 0.0
    %v1193 = vld [vmem:[#allocation20] sm:$0xff]
    %v1194 = vld [vmem:[#allocation20 + $0x8] sm:$0xff]
    %v1195 = vld [vmem:[#allocation20 + $0x10] sm:$0xff]
    %v1196 = vld [vmem:[#allocation20 + $0x18] sm:$0xff]
    %v1197 = vld [vmem:[#allocation22] sm:$0x1]
    %v1199 = vperm.slane %v1197, 0
    %v1202 = vsel %vm306, %v1191, 0
    %v1205 = vsel %vm306, %v1192, 0
    %1207 = vmatpush.msra.mxu0 0.0
    %1208 = vmatpush.msra.mxu0 0.0
    %1209 = vmatpush.msra.mxu0 0.0
    %1210 = vmatpush.msra.mxu0 0.0
    %1211 = vmatpush.msra.mxu0 0.0
    %1212 = vmatpush.msra.mxu0 0.0
    %1213 = vmatpush.msra.mxu0 0.0
    %1214 = vmatpush.msra.mxu0 0.0
    %1215 = vmatpush.msra.mxu0 0.0
    %1216 = vmatpush.msra.mxu0 0.0
    %1217 = vmatpush.msra.mxu0 0.0
    %1218 = vmatpush.msra.mxu0 0.0
    %1219 = vmatpush.msra.mxu0 %v1196
    %1220 = vmatpush.msra.mxu0 %v1195
    %1221 = vmatpush.msra.mxu0 %v1194
    %1222 = vmatpush.msra.mxu0 %v1193
    %1223 = vmatmul.f32.gmra.mxu0 %v1202
    %v1224 = vpop.f32.mrf.mxu0
    %v1225 = vadd.f32 %v1199, %v1224
    %1226 = vmatmul.f32.gmra.mxu0 %v1205
    %v1227 = vpop.f32.mrf.mxu0
    %v1228 = vadd.f32 %v1199, %v1227
    %1229 = vdwg.mxu0
    %v1230 = vadd.f32 %v1152, %v1225
    %v1231 = vadd.f32 %v1153, %v1228
    %v1232 = vld [vmem:[#allocation14] sm:$0x1]
    %v1233 = vld [vmem:[#allocation16] sm:$0x1]
    %v1234 = vsel %vm306, %v1230, 0.0
    %1235 = vadd.xlane.f32.xlu0 %v1234
    %v1236 = vpop.xlane.xlu0 %1235
    %v1237 = vsel %vm306, %v1231, 0.0
    %1238 = vadd.xlane.f32.xlu0 %v1237
    %v1239 = vpop.xlane.xlu0 %1238
    %v1240 = vmul.f32 %v1236, %v1105
    %v1241 = vmul.f32 %v1239, %v1105
    %v1242 = vsub.f32 %v1230, %v1240
    %v1243 = vsub.f32 %v1231, %v1241
    %v1244 = vmul.f32 %v1242, %v1242
    %v1245 = vmul.f32 %v1243, %v1243
    %v1246 = vsel %vm306, %v1244, 0.0
    %1247 = vadd.xlane.f32.xlu0 %v1246
    %v1248 = vpop.xlane.xlu0 %1247
    %v1249 = vsel %vm306, %v1245, 0.0
    %1250 = vadd.xlane.f32.xlu0 %v1249
    %v1251 = vpop.xlane.xlu0 %1250
    %v1252 = vmul.f32 %v1248, %v1105
    %v1253 = vmul.f32 %v1251, %v1105
    %v1254 = vadd.f32 %v1252, 1e-05
    %v1255 = vadd.f32 %v1253, 1e-05
    %v1256 = vrsqrt.pop %v1254
    %v1257 = vmul.f32 %v1256, %v1254
    %v1258 = vmul.f32 %v1257, %v1256
    %v1259 = vmul.f32 0.5, %v1258
    %v1260 = vsub.f32 1.5, %v1259
    %v1261 = vmul.f32 %v1256, %v1260
    %vm1262 = vweird.f32 %v1254
    %vm1263 = vweird.f32 %v1256
    %vm1264 = vmor %vm1262, %vm1263
    %v1265 = vsel %vm1264, %v1256, %v1261
    %v1266 = vrsqrt.pop %v1255
    %v1267 = vmul.f32 %v1266, %v1255
    %v1268 = vmul.f32 %v1267, %v1266
    %v1269 = vmul.f32 0.5, %v1268
    %v1270 = vsub.f32 1.5, %v1269
    %v1271 = vmul.f32 %v1266, %v1270
    %vm1272 = vweird.f32 %v1255
    %vm1273 = vweird.f32 %v1266
    %vm1274 = vmor %vm1272, %vm1273
    %v1275 = vsel %vm1274, %v1266, %v1271
    %v1276 = vmul.f32 %v1242, %v1265
    %v1277 = vmul.f32 %v1243, %v1275
    %v1279 = vperm.slane %v1232, 0
    %v1281 = vmul.f32 %v1276, %v1279
    %v1282 = vmul.f32 %v1277, %v1279
    %v1284 = vperm.slane %v1233, 0
    %v1286 = vadd.f32 %v1281, %v1284
    %v1287 = vadd.f32 %v1282, %v1284
    %s1288 = scalar_lea.vmem [#allocation5], 32
    %v1289 = vld [vmem:[%s1288] sm:$0xff]
    %v1290 = vld [vmem:[%s1288 + $0x8] sm:$0xff]
    %v1291 = vld [vmem:[%s1288 + $0x10] sm:$0xff]
    %v1292 = vld [vmem:[%s1288 + $0x18] sm:$0xff]
    %s1293 = scalar_lea.vmem [#allocation7], 1
    %v1294 = vld [vmem:[%s1293] sm:$0x1]
    %v1296 = vperm.slane %v1294, 0
    %v1299 = vsel %vm306, %v1286, 0
    %v1302 = vsel %vm306, %v1287, 0
    %1304 = vmatpush.msra.mxu0 0.0
    %1305 = vmatpush.msra.mxu0 0.0
    %1306 = vmatpush.msra.mxu0 0.0
    %1307 = vmatpush.msra.mxu0 0.0
    %1308 = vmatpush.msra.mxu0 0.0
    %1309 = vmatpush.msra.mxu0 0.0
    %1310 = vmatpush.msra.mxu0 0.0
    %1311 = vmatpush.msra.mxu0 0.0
    %1312 = vmatpush.msra.mxu0 0.0
    %1313 = vmatpush.msra.mxu0 0.0
    %1314 = vmatpush.msra.mxu0 0.0
    %1315 = vmatpush.msra.mxu0 0.0
    %1316 = vmatpush.msra.mxu0 %v1292
    %1317 = vmatpush.msra.mxu0 %v1291
    %1318 = vmatpush.msra.mxu0 %v1290
    %1319 = vmatpush.msra.mxu0 %v1289
    %1320 = vmatmul.f32.gmra.mxu0 %v1299
    %v1321 = vpop.f32.mrf.mxu0
    %v1322 = vadd.f32 %v1296, %v1321
    %1323 = vmatmul.f32.gmra.mxu0 %v1302
    %v1324 = vpop.f32.mrf.mxu0
    %v1325 = vadd.f32 %v1296, %v1324
    %1326 = vdwg.mxu0
    %s1327 = scalar_lea.vmem [#allocation8], 32
    %v1328 = vld [vmem:[%s1327] sm:$0xff]
    %v1329 = vld [vmem:[%s1327 + $0x8] sm:$0xff]
    %v1330 = vld [vmem:[%s1327 + $0x10] sm:$0xff]
    %v1331 = vld [vmem:[%s1327 + $0x18] sm:$0xff]
    %1333 = vrot.lane.b32.xlu0 %v1322, 96
    %v1334 = vpop.permute.xlu0 %1333
    %v1335 = vsel %vm343, %v1322, 0
    %v1337 = vsel %vm343, %v1334, 0
    %1339 = vmatpush.xpose.msra.mxu0 0.0
    %1340 = vmatpush.xpose.msra.mxu0 0.0
    %1341 = vmatpush.xpose.msra.mxu0 0.0
    %1342 = vmatpush.xpose.msra.mxu0 0.0
    %1343 = vmatpush.xpose.msra.mxu0 0.0
    %1344 = vmatpush.xpose.msra.mxu0 0.0
    %1345 = vmatpush.xpose.msra.mxu0 0.0
    %1346 = vmatpush.xpose.msra.mxu0 0.0
    %1347 = vmatpush.xpose.msra.mxu0 0.0
    %1348 = vmatpush.xpose.msra.mxu0 0.0
    %1349 = vmatpush.xpose.msra.mxu0 0.0
    %1350 = vmatpush.xpose.msra.mxu0 0.0
    %1351 = vmatpush.xpose.msra.mxu0 0.0
    %1352 = vmatpush.xpose.msra.mxu0 0.0
    %1353 = vmatpush.xpose.msra.mxu0 0.0
    %1354 = vmatpush.xpose.msra.mxu0 %v1337
    %1355 = vmatmul.f32.gmra.mxu0 %v1335
    %v1356 = vpop.f32.mrf.mxu0
    %v1357 = vadd.f32 0.0, %v1356
    %1358 = vdwg.mxu0
    %1360 = vrot.lane.b32.xlu0 %v1325, 96
    %v1361 = vpop.permute.xlu0 %1360
    %v1362 = vsel %vm343, %v1325, 0
    %v1364 = vsel %vm343, %v1361, 0
    %1366 = vmatpush.xpose.msra.mxu0 0.0
    %1367 = vmatpush.xpose.msra.mxu0 0.0
    %1368 = vmatpush.xpose.msra.mxu0 0.0
    %1369 = vmatpush.xpose.msra.mxu0 0.0
    %1370 = vmatpush.xpose.msra.mxu0 0.0
    %1371 = vmatpush.xpose.msra.mxu0 0.0
    %1372 = vmatpush.xpose.msra.mxu0 0.0
    %1373 = vmatpush.xpose.msra.mxu0 0.0
    %1374 = vmatpush.xpose.msra.mxu0 0.0
    %1375 = vmatpush.xpose.msra.mxu0 0.0
    %1376 = vmatpush.xpose.msra.mxu0 0.0
    %1377 = vmatpush.xpose.msra.mxu0 0.0
    %1378 = vmatpush.xpose.msra.mxu0 0.0
    %1379 = vmatpush.xpose.msra.mxu0 0.0
    %1380 = vmatpush.xpose.msra.mxu0 0.0
    %1381 = vmatpush.xpose.msra.mxu0 %v1364
    %1382 = vmatmul.f32.gmra.mxu0 %v1362
    %v1383 = vpop.f32.mrf.mxu0
    %v1384 = vadd.f32 0.0, %v1383
    %1385 = vdwg.mxu0
    %v1386 = vsel %vm343, %v1357, -inf
    %1387 = vmax.xlane.f32.xlu0 %v1386
    %v1388 = vpop.xlane.xlu0 %1387
    %v1389 = vsel %vm343, %v1384, -inf
    %1390 = vmax.xlane.f32.xlu0 %v1389
    %v1391 = vpop.xlane.xlu0 %1390
    %v1392 = vsub.f32 %v1357, %v1388
    %v1393 = vsub.f32 %v1384, %v1391
    %v1394 = vmul.f32 %v1392, 1.442695
    %v1395 = vpow.pop %v1394
    %v1396 = vmul.f32 %v1393, 1.442695
    %v1397 = vpow.pop %v1396
    %v1398 = vsel %vm343, %v1395, 0.0
    %1399 = vadd.xlane.f32.xlu0 %v1398
    %v1400 = vpop.xlane.xlu0 %1399
    %v1401 = vsel %vm343, %v1397, 0.0
    %1402 = vadd.xlane.f32.xlu0 %v1401
    %v1403 = vpop.xlane.xlu0 %1402
    %v1404 = vrcp.pop %v1400
    %v1405 = vmul.f32 %v1400, %v1404
    %v1406 = vsub.f32 1.0, %v1405
    %v1407 = vmul.f32 %v1404, %v1406
    %v1408 = vadd.f32 %v1404, %v1407
    %vm1409 = vweird.f32 %v1400
    %vm1410 = vweird.f32 %v1404
    %vm1411 = vmor %vm1409, %vm1410
    %v1412 = vsel %vm1411, %v1404, %v1408
    %v1413 = vand.u32 2147483647, %v1400
    %vm1414 = vcmp.eq.f32.partialorder %v1413, 8.507059e+37
    %v1415 = vand.u32 %v1400, 2147483648
    %v1416 = vor.u32 1.1754944e-38, %v1415
    %v1417 = vsel %vm1414, %v1416, %v1412
    %v1418 = vrcp.pop %v1403
    %v1419 = vmul.f32 %v1403, %v1418
    %v1420 = vsub.f32 1.0, %v1419
    %v1421 = vmul.f32 %v1418, %v1420
    %v1422 = vadd.f32 %v1418, %v1421
    %vm1423 = vweird.f32 %v1403
    %vm1424 = vweird.f32 %v1418
    %vm1425 = vmor %vm1423, %vm1424
    %v1426 = vsel %vm1425, %v1418, %v1422
    %v1427 = vand.u32 2147483647, %v1403
    %vm1428 = vcmp.eq.f32.partialorder %v1427, 8.507059e+37
    %v1429 = vand.u32 %v1403, 2147483648
    %v1430 = vor.u32 1.1754944e-38, %v1429
    %v1431 = vsel %vm1428, %v1430, %v1426
    %v1432 = vmul.f32 %v1395, %v1417
    %v1433 = vmul.f32 %v1397, %v1431
    %1434 = vrot.lane.b32.xlu0 %v1322, 64
    %v1435 = vpop.permute.xlu0 %1434
    %v1438 = vsel %vm343, %v1432, 0
    %1440 = vmatpush.msra.mxu0 0.0
    %1441 = vmatpush.msra.mxu0 0.0
    %1442 = vmatpush.msra.mxu0 0.0
    %1443 = vmatpush.msra.mxu0 0.0
    %1444 = vmatpush.msra.mxu0 0.0
    %1445 = vmatpush.msra.mxu0 0.0
    %1446 = vmatpush.msra.mxu0 0.0
    %1447 = vmatpush.msra.mxu0 0.0
    %1448 = vmatpush.msra.mxu0 0.0
    %1449 = vmatpush.msra.mxu0 0.0
    %1450 = vmatpush.msra.mxu0 0.0
    %1451 = vmatpush.msra.mxu0 0.0
    %1452 = vmatpush.msra.mxu0 0.0
    %1453 = vmatpush.msra.mxu0 0.0
    %1454 = vmatpush.msra.mxu0 0.0
    %1455 = vmatpush.msra.mxu0 %v1435
    %1456 = vmatmul.f32.gmra.mxu0 %v1438
    %v1457 = vpop.f32.mrf.mxu0
    %v1458 = vadd.f32 0.0, %v1457
    %1459 = vdwg.mxu0
    %1460 = vrot.lane.b32.xlu0 %v1325, 64
    %v1461 = vpop.permute.xlu0 %1460
    %v1464 = vsel %vm343, %v1433, 0
    %1466 = vmatpush.msra.mxu0 0.0
    %1467 = vmatpush.msra.mxu0 0.0
    %1468 = vmatpush.msra.mxu0 0.0
    %1469 = vmatpush.msra.mxu0 0.0
    %1470 = vmatpush.msra.mxu0 0.0
    %1471 = vmatpush.msra.mxu0 0.0
    %1472 = vmatpush.msra.mxu0 0.0
    %1473 = vmatpush.msra.mxu0 0.0
    %1474 = vmatpush.msra.mxu0 0.0
    %1475 = vmatpush.msra.mxu0 0.0
    %1476 = vmatpush.msra.mxu0 0.0
    %1477 = vmatpush.msra.mxu0 0.0
    %1478 = vmatpush.msra.mxu0 0.0
    %1479 = vmatpush.msra.mxu0 0.0
    %1480 = vmatpush.msra.mxu0 0.0
    %1481 = vmatpush.msra.mxu0 %v1461
    %1482 = vmatmul.f32.gmra.mxu0 %v1464
    %v1483 = vpop.f32.mrf.mxu0
    %v1484 = vadd.f32 0.0, %v1483
    %1485 = vdwg.mxu0
    %1486 = vrot.lane.b32.xlu0 %v1322, 120
    %v1487 = vpop.permute.xlu0 %1486
    %1488 = vrot.lane.b32.xlu0 %v1322, 88
    %v1489 = vpop.permute.xlu0 %1488
    %v1490 = vsel %vm343, %v1487, 0
    %v1492 = vsel %vm343, %v1489, 0
    %1494 = vmatpush.xpose.msra.mxu0 0.0
    %1495 = vmatpush.xpose.msra.mxu0 0.0
    %1496 = vmatpush.xpose.msra.mxu0 0.0
    %1497 = vmatpush.xpose.msra.mxu0 0.0
    %1498 = vmatpush.xpose.msra.mxu0 0.0
    %1499 = vmatpush.xpose.msra.mxu0 0.0
    %1500 = vmatpush.xpose.msra.mxu0 0.0
    %1501 = vmatpush.xpose.msra.mxu0 0.0
    %1502 = vmatpush.xpose.msra.mxu0 0.0
    %1503 = vmatpush.xpose.msra.mxu0 0.0
    %1504 = vmatpush.xpose.msra.mxu0 0.0
    %1505 = vmatpush.xpose.msra.mxu0 0.0
    %1506 = vmatpush.xpose.msra.mxu0 0.0
    %1507 = vmatpush.xpose.msra.mxu0 0.0
    %1508 = vmatpush.xpose.msra.mxu0 0.0
    %1509 = vmatpush.xpose.msra.mxu0 %v1492
    %1510 = vmatmul.f32.gmra.mxu0 %v1490
    %v1511 = vpop.f32.mrf.mxu0
    %v1512 = vadd.f32 0.0, %v1511
    %1513 = vdwg.mxu0
    %1514 = vrot.lane.b32.xlu0 %v1325, 120
    %v1515 = vpop.permute.xlu0 %1514
    %1516 = vrot.lane.b32.xlu0 %v1325, 88
    %v1517 = vpop.permute.xlu0 %1516
    %v1518 = vsel %vm343, %v1515, 0
    %v1520 = vsel %vm343, %v1517, 0
    %1522 = vmatpush.xpose.msra.mxu0 0.0
    %1523 = vmatpush.xpose.msra.mxu0 0.0
    %1524 = vmatpush.xpose.msra.mxu0 0.0
    %1525 = vmatpush.xpose.msra.mxu0 0.0
    %1526 = vmatpush.xpose.msra.mxu0 0.0
    %1527 = vmatpush.xpose.msra.mxu0 0.0
    %1528 = vmatpush.xpose.msra.mxu0 0.0
    %1529 = vmatpush.xpose.msra.mxu0 0.0
    %1530 = vmatpush.xpose.msra.mxu0 0.0
    %1531 = vmatpush.xpose.msra.mxu0 0.0
    %1532 = vmatpush.xpose.msra.mxu0 0.0
    %1533 = vmatpush.xpose.msra.mxu0 0.0
    %1534 = vmatpush.xpose.msra.mxu0 0.0
    %1535 = vmatpush.xpose.msra.mxu0 0.0
    %1536 = vmatpush.xpose.msra.mxu0 0.0
    %1537 = vmatpush.xpose.msra.mxu0 %v1520
    %1538 = vmatmul.f32.gmra.mxu0 %v1518
    %v1539 = vpop.f32.mrf.mxu0
    %v1540 = vadd.f32 0.0, %v1539
    %1541 = vdwg.mxu0
    %v1542 = vsel %vm343, %v1512, -inf
    %1543 = vmax.xlane.f32.xlu0 %v1542
    %v1544 = vpop.xlane.xlu0 %1543
    %v1545 = vsel %vm343, %v1540, -inf
    %1546 = vmax.xlane.f32.xlu0 %v1545
    %v1547 = vpop.xlane.xlu0 %1546
    %v1548 = vsub.f32 %v1512, %v1544
    %v1549 = vsub.f32 %v1540, %v1547
    %v1550 = vmul.f32 %v1548, 1.442695
    %v1551 = vpow.pop %v1550
    %v1552 = vmul.f32 %v1549, 1.442695
    %v1553 = vpow.pop %v1552
    %v1554 = vsel %vm343, %v1551, 0.0
    %1555 = vadd.xlane.f32.xlu0 %v1554
    %v1556 = vpop.xlane.xlu0 %1555
    %v1557 = vsel %vm343, %v1553, 0.0
    %1558 = vadd.xlane.f32.xlu0 %v1557
    %v1559 = vpop.xlane.xlu0 %1558
    %v1560 = vrcp.pop %v1556
    %v1561 = vmul.f32 %v1556, %v1560
    %v1562 = vsub.f32 1.0, %v1561
    %v1563 = vmul.f32 %v1560, %v1562
    %v1564 = vadd.f32 %v1560, %v1563
    %vm1565 = vweird.f32 %v1556
    %vm1566 = vweird.f32 %v1560
    %vm1567 = vmor %vm1565, %vm1566
    %v1568 = vsel %vm1567, %v1560, %v1564
    %v1569 = vand.u32 2147483647, %v1556
    %vm1570 = vcmp.eq.f32.partialorder %v1569, 8.507059e+37
    %v1571 = vand.u32 %v1556, 2147483648
    %v1572 = vor.u32 1.1754944e-38, %v1571
    %v1573 = vsel %vm1570, %v1572, %v1568
    %v1574 = vrcp.pop %v1559
    %v1575 = vmul.f32 %v1559, %v1574
    %v1576 = vsub.f32 1.0, %v1575
    %v1577 = vmul.f32 %v1574, %v1576
    %v1578 = vadd.f32 %v1574, %v1577
    %vm1579 = vweird.f32 %v1559
    %vm1580 = vweird.f32 %v1574
    %vm1581 = vmor %vm1579, %vm1580
    %v1582 = vsel %vm1581, %v1574, %v1578
    %v1583 = vand.u32 2147483647, %v1559
    %vm1584 = vcmp.eq.f32.partialorder %v1583, 8.507059e+37
    %v1585 = vand.u32 %v1559, 2147483648
    %v1586 = vor.u32 1.1754944e-38, %v1585
    %v1587 = vsel %vm1584, %v1586, %v1582
    %v1588 = vmul.f32 %v1551, %v1573
    %v1589 = vmul.f32 %v1553, %v1587
    %1590 = vrot.lane.b32.xlu0 %v1322, 56
    %v1591 = vpop.permute.xlu0 %1590
    %v1594 = vsel %vm343, %v1588, 0
    %1596 = vmatpush.msra.mxu0 0.0
    %1597 = vmatpush.msra.mxu0 0.0
    %1598 = vmatpush.msra.mxu0 0.0
    %1599 = vmatpush.msra.mxu0 0.0
    %1600 = vmatpush.msra.mxu0 0.0
    %1601 = vmatpush.msra.mxu0 0.0
    %1602 = vmatpush.msra.mxu0 0.0
    %1603 = vmatpush.msra.mxu0 0.0
    %1604 = vmatpush.msra.mxu0 0.0
    %1605 = vmatpush.msra.mxu0 0.0
    %1606 = vmatpush.msra.mxu0 0.0
    %1607 = vmatpush.msra.mxu0 0.0
    %1608 = vmatpush.msra.mxu0 0.0
    %1609 = vmatpush.msra.mxu0 0.0
    %1610 = vmatpush.msra.mxu0 0.0
    %1611 = vmatpush.msra.mxu0 %v1591
    %1612 = vmatmul.f32.gmra.mxu0 %v1594
    %v1613 = vpop.f32.mrf.mxu0
    %v1614 = vadd.f32 0.0, %v1613
    %1615 = vdwg.mxu0
    %1616 = vrot.lane.b32.xlu0 %v1325, 56
    %v1617 = vpop.permute.xlu0 %1616
    %v1620 = vsel %vm343, %v1589, 0
    %1622 = vmatpush.msra.mxu0 0.0
    %1623 = vmatpush.msra.mxu0 0.0
    %1624 = vmatpush.msra.mxu0 0.0
    %1625 = vmatpush.msra.mxu0 0.0
    %1626 = vmatpush.msra.mxu0 0.0
    %1627 = vmatpush.msra.mxu0 0.0
    %1628 = vmatpush.msra.mxu0 0.0
    %1629 = vmatpush.msra.mxu0 0.0
    %1630 = vmatpush.msra.mxu0 0.0
    %1631 = vmatpush.msra.mxu0 0.0
    %1632 = vmatpush.msra.mxu0 0.0
    %1633 = vmatpush.msra.mxu0 0.0
    %1634 = vmatpush.msra.mxu0 0.0
    %1635 = vmatpush.msra.mxu0 0.0
    %1636 = vmatpush.msra.mxu0 0.0
    %1637 = vmatpush.msra.mxu0 %v1617
    %1638 = vmatmul.f32.gmra.mxu0 %v1620
    %v1639 = vpop.f32.mrf.mxu0
    %v1640 = vadd.f32 0.0, %v1639
    %1641 = vdwg.mxu0
    %v1643 = vsel %vm343, %v1614, 0
    %v1646 = vsel %vm343, %v1640, 0
    %1648 = vmatpush.msra.mxu0 0.0
    %1649 = vmatpush.msra.mxu0 0.0
    %1650 = vmatpush.msra.mxu0 0.0
    %1651 = vmatpush.msra.mxu0 0.0
    %1652 = vmatpush.msra.mxu0 0.0
    %1653 = vmatpush.msra.mxu0 0.0
    %1654 = vmatpush.msra.mxu0 0.0
    %1655 = vmatpush.msra.mxu0 0.0
    %1656 = vmatpush.msra.mxu0 0.0
    %1657 = vmatpush.msra.mxu0 0.0
    %1658 = vmatpush.msra.mxu0 0.0
    %1659 = vmatpush.msra.mxu0 0.0
    %1660 = vmatpush.msra.mxu0 0.0
    %1661 = vmatpush.msra.mxu0 0.0
    %1662 = vmatpush.msra.mxu0 0.0
    %1663 = vmatpush.msra.mxu0 %v1329
    %1664 = vmatmul.f32.gmra.mxu0 %v1643
    %v1665 = vpop.f32.mrf.mxu0
    %v1666 = vadd.f32 0.0, %v1665
    %1667 = vmatmul.f32.gmra.mxu0 %v1646
    %v1668 = vpop.f32.mrf.mxu0
    %v1669 = vadd.f32 0.0, %v1668
    %1670 = vdwg.mxu0
    %v1672 = vsel %vm343, %v1458, 0
    %v1675 = vsel %vm343, %v1484, 0
    %1677 = vmatpush.msra.mxu0 0.0
    %1678 = vmatpush.msra.mxu0 0.0
    %1679 = vmatpush.msra.mxu0 0.0
    %1680 = vmatpush.msra.mxu0 0.0
    %1681 = vmatpush.msra.mxu0 0.0
    %1682 = vmatpush.msra.mxu0 0.0
    %1683 = vmatpush.msra.mxu0 0.0
    %1684 = vmatpush.msra.mxu0 0.0
    %1685 = vmatpush.msra.mxu0 0.0
    %1686 = vmatpush.msra.mxu0 0.0
    %1687 = vmatpush.msra.mxu0 0.0
    %1688 = vmatpush.msra.mxu0 0.0
    %1689 = vmatpush.msra.mxu0 0.0
    %1690 = vmatpush.msra.mxu0 0.0
    %1691 = vmatpush.msra.mxu0 0.0
    %1692 = vmatpush.msra.mxu0 %v1328
    %1693 = vmatmul.f32.gmra.mxu0 %v1672
    %v1694 = vpop.f32.mrf.mxu0
    %v1695 = vadd.f32 %v1666, %v1694
    %1696 = vmatmul.f32.gmra.mxu0 %v1675
    %v1697 = vpop.f32.mrf.mxu0
    %v1698 = vadd.f32 %v1669, %v1697
    %1699 = vdwg.mxu0
    %1700 = vrot.lane.b32.xlu0 %v1322, 112
    %v1701 = vpop.permute.xlu0 %1700
    %1702 = vrot.lane.b32.xlu0 %v1322, 80
    %v1703 = vpop.permute.xlu0 %1702
    %v1704 = vsel %vm343, %v1701, 0
    %v1706 = vsel %vm343, %v1703, 0
    %1708 = vmatpush.xpose.msra.mxu0 0.0
    %1709 = vmatpush.xpose.msra.mxu0 0.0
    %1710 = vmatpush.xpose.msra.mxu0 0.0
    %1711 = vmatpush.xpose.msra.mxu0 0.0
    %1712 = vmatpush.xpose.msra.mxu0 0.0
    %1713 = vmatpush.xpose.msra.mxu0 0.0
    %1714 = vmatpush.xpose.msra.mxu0 0.0
    %1715 = vmatpush.xpose.msra.mxu0 0.0
    %1716 = vmatpush.xpose.msra.mxu0 0.0
    %1717 = vmatpush.xpose.msra.mxu0 0.0
    %1718 = vmatpush.xpose.msra.mxu0 0.0
    %1719 = vmatpush.xpose.msra.mxu0 0.0
    %1720 = vmatpush.xpose.msra.mxu0 0.0
    %1721 = vmatpush.xpose.msra.mxu0 0.0
    %1722 = vmatpush.xpose.msra.mxu0 0.0
    %1723 = vmatpush.xpose.msra.mxu0 %v1706
    %1724 = vmatmul.f32.gmra.mxu0 %v1704
    %v1725 = vpop.f32.mrf.mxu0
    %v1726 = vadd.f32 0.0, %v1725
    %1727 = vdwg.mxu0
    %1728 = vrot.lane.b32.xlu0 %v1325, 112
    %v1729 = vpop.permute.xlu0 %1728
    %1730 = vrot.lane.b32.xlu0 %v1325, 80
    %v1731 = vpop.permute.xlu0 %1730
    %v1732 = vsel %vm343, %v1729, 0
    %v1734 = vsel %vm343, %v1731, 0
    %1736 = vmatpush.xpose.msra.mxu0 0.0
    %1737 = vmatpush.xpose.msra.mxu0 0.0
    %1738 = vmatpush.xpose.msra.mxu0 0.0
    %1739 = vmatpush.xpose.msra.mxu0 0.0
    %1740 = vmatpush.xpose.msra.mxu0 0.0
    %1741 = vmatpush.xpose.msra.mxu0 0.0
    %1742 = vmatpush.xpose.msra.mxu0 0.0
    %1743 = vmatpush.xpose.msra.mxu0 0.0
    %1744 = vmatpush.xpose.msra.mxu0 0.0
    %1745 = vmatpush.xpose.msra.mxu0 0.0
    %1746 = vmatpush.xpose.msra.mxu0 0.0
    %1747 = vmatpush.xpose.msra.mxu0 0.0
    %1748 = vmatpush.xpose.msra.mxu0 0.0
    %1749 = vmatpush.xpose.msra.mxu0 0.0
    %1750 = vmatpush.xpose.msra.mxu0 0.0
    %1751 = vmatpush.xpose.msra.mxu0 %v1734
    %1752 = vmatmul.f32.gmra.mxu0 %v1732
    %v1753 = vpop.f32.mrf.mxu0
    %v1754 = vadd.f32 0.0, %v1753
    %1755 = vdwg.mxu0
    %v1756 = vsel %vm343, %v1726, -inf
    %1757 = vmax.xlane.f32.xlu0 %v1756
    %v1758 = vpop.xlane.xlu0 %1757
    %v1759 = vsel %vm343, %v1754, -inf
    %1760 = vmax.xlane.f32.xlu0 %v1759
    %v1761 = vpop.xlane.xlu0 %1760
    %v1762 = vsub.f32 %v1726, %v1758
    %v1763 = vsub.f32 %v1754, %v1761
    %v1764 = vmul.f32 %v1762, 1.442695
    %v1765 = vpow.pop %v1764
    %v1766 = vmul.f32 %v1763, 1.442695
    %v1767 = vpow.pop %v1766
    %v1768 = vsel %vm343, %v1765, 0.0
    %1769 = vadd.xlane.f32.xlu0 %v1768
    %v1770 = vpop.xlane.xlu0 %1769
    %v1771 = vsel %vm343, %v1767, 0.0
    %1772 = vadd.xlane.f32.xlu0 %v1771
    %v1773 = vpop.xlane.xlu0 %1772
    %v1774 = vrcp.pop %v1770
    %v1775 = vmul.f32 %v1770, %v1774
    %v1776 = vsub.f32 1.0, %v1775
    %v1777 = vmul.f32 %v1774, %v1776
    %v1778 = vadd.f32 %v1774, %v1777
    %vm1779 = vweird.f32 %v1770
    %vm1780 = vweird.f32 %v1774
    %vm1781 = vmor %vm1779, %vm1780
    %v1782 = vsel %vm1781, %v1774, %v1778
    %v1783 = vand.u32 2147483647, %v1770
    %vm1784 = vcmp.eq.f32.partialorder %v1783, 8.507059e+37
    %v1785 = vand.u32 %v1770, 2147483648
    %v1786 = vor.u32 1.1754944e-38, %v1785
    %v1787 = vsel %vm1784, %v1786, %v1782
    %v1788 = vrcp.pop %v1773
    %v1789 = vmul.f32 %v1773, %v1788
    %v1790 = vsub.f32 1.0, %v1789
    %v1791 = vmul.f32 %v1788, %v1790
    %v1792 = vadd.f32 %v1788, %v1791
    %vm1793 = vweird.f32 %v1773
    %vm1794 = vweird.f32 %v1788
    %vm1795 = vmor %vm1793, %vm1794
    %v1796 = vsel %vm1795, %v1788, %v1792
    %v1797 = vand.u32 2147483647, %v1773
    %vm1798 = vcmp.eq.f32.partialorder %v1797, 8.507059e+37
    %v1799 = vand.u32 %v1773, 2147483648
    %v1800 = vor.u32 1.1754944e-38, %v1799
    %v1801 = vsel %vm1798, %v1800, %v1796
    %v1802 = vmul.f32 %v1765, %v1787
    %v1803 = vmul.f32 %v1767, %v1801
    %1804 = vrot.lane.b32.xlu0 %v1322, 48
    %v1805 = vpop.permute.xlu0 %1804
    %v1808 = vsel %vm343, %v1802, 0
    %1810 = vmatpush.msra.mxu0 0.0
    %1811 = vmatpush.msra.mxu0 0.0
    %1812 = vmatpush.msra.mxu0 0.0
    %1813 = vmatpush.msra.mxu0 0.0
    %1814 = vmatpush.msra.mxu0 0.0
    %1815 = vmatpush.msra.mxu0 0.0
    %1816 = vmatpush.msra.mxu0 0.0
    %1817 = vmatpush.msra.mxu0 0.0
    %1818 = vmatpush.msra.mxu0 0.0
    %1819 = vmatpush.msra.mxu0 0.0
    %1820 = vmatpush.msra.mxu0 0.0
    %1821 = vmatpush.msra.mxu0 0.0
    %1822 = vmatpush.msra.mxu0 0.0
    %1823 = vmatpush.msra.mxu0 0.0
    %1824 = vmatpush.msra.mxu0 0.0
    %1825 = vmatpush.msra.mxu0 %v1805
    %1826 = vmatmul.f32.gmra.mxu0 %v1808
    %v1827 = vpop.f32.mrf.mxu0
    %v1828 = vadd.f32 0.0, %v1827
    %1829 = vdwg.mxu0
    %1830 = vrot.lane.b32.xlu0 %v1325, 48
    %v1831 = vpop.permute.xlu0 %1830
    %v1834 = vsel %vm343, %v1803, 0
    %1836 = vmatpush.msra.mxu0 0.0
    %1837 = vmatpush.msra.mxu0 0.0
    %1838 = vmatpush.msra.mxu0 0.0
    %1839 = vmatpush.msra.mxu0 0.0
    %1840 = vmatpush.msra.mxu0 0.0
    %1841 = vmatpush.msra.mxu0 0.0
    %1842 = vmatpush.msra.mxu0 0.0
    %1843 = vmatpush.msra.mxu0 0.0
    %1844 = vmatpush.msra.mxu0 0.0
    %1845 = vmatpush.msra.mxu0 0.0
    %1846 = vmatpush.msra.mxu0 0.0
    %1847 = vmatpush.msra.mxu0 0.0
    %1848 = vmatpush.msra.mxu0 0.0
    %1849 = vmatpush.msra.mxu0 0.0
    %1850 = vmatpush.msra.mxu0 0.0
    %1851 = vmatpush.msra.mxu0 %v1831
    %1852 = vmatmul.f32.gmra.mxu0 %v1834
    %v1853 = vpop.f32.mrf.mxu0
    %v1854 = vadd.f32 0.0, %v1853
    %1855 = vdwg.mxu0
    %v1857 = vsel %vm343, %v1828, 0
    %v1860 = vsel %vm343, %v1854, 0
    %1862 = vmatpush.msra.mxu0 0.0
    %1863 = vmatpush.msra.mxu0 0.0
    %1864 = vmatpush.msra.mxu0 0.0
    %1865 = vmatpush.msra.mxu0 0.0
    %1866 = vmatpush.msra.mxu0 0.0
    %1867 = vmatpush.msra.mxu0 0.0
    %1868 = vmatpush.msra.mxu0 0.0
    %1869 = vmatpush.msra.mxu0 0.0
    %1870 = vmatpush.msra.mxu0 0.0
    %1871 = vmatpush.msra.mxu0 0.0
    %1872 = vmatpush.msra.mxu0 0.0
    %1873 = vmatpush.msra.mxu0 0.0
    %1874 = vmatpush.msra.mxu0 0.0
    %1875 = vmatpush.msra.mxu0 0.0
    %1876 = vmatpush.msra.mxu0 0.0
    %1877 = vmatpush.msra.mxu0 %v1330
    %1878 = vmatmul.f32.gmra.mxu0 %v1857
    %v1879 = vpop.f32.mrf.mxu0
    %v1880 = vadd.f32 0.0, %v1879
    %1881 = vmatmul.f32.gmra.mxu0 %v1860
    %v1882 = vpop.f32.mrf.mxu0
    %v1883 = vadd.f32 0.0, %v1882
    %1884 = vdwg.mxu0
    %v1885 = vadd.f32 %v1695, %v1880
    %v1886 = vadd.f32 %v1698, %v1883
    %1887 = vrot.lane.b32.xlu0 %v1322, 104
    %v1888 = vpop.permute.xlu0 %1887
    %1889 = vrot.lane.b32.xlu0 %v1322, 72
    %v1890 = vpop.permute.xlu0 %1889
    %v1891 = vsel %vm343, %v1888, 0
    %v1893 = vsel %vm343, %v1890, 0
    %1895 = vmatpush.xpose.msra.mxu0 0.0
    %1896 = vmatpush.xpose.msra.mxu0 0.0
    %1897 = vmatpush.xpose.msra.mxu0 0.0
    %1898 = vmatpush.xpose.msra.mxu0 0.0
    %1899 = vmatpush.xpose.msra.mxu0 0.0
    %1900 = vmatpush.xpose.msra.mxu0 0.0
    %1901 = vmatpush.xpose.msra.mxu0 0.0
    %1902 = vmatpush.xpose.msra.mxu0 0.0
    %1903 = vmatpush.xpose.msra.mxu0 0.0
    %1904 = vmatpush.xpose.msra.mxu0 0.0
    %1905 = vmatpush.xpose.msra.mxu0 0.0
    %1906 = vmatpush.xpose.msra.mxu0 0.0
    %1907 = vmatpush.xpose.msra.mxu0 0.0
    %1908 = vmatpush.xpose.msra.mxu0 0.0
    %1909 = vmatpush.xpose.msra.mxu0 0.0
    %1910 = vmatpush.xpose.msra.mxu0 %v1893
    %1911 = vmatmul.f32.gmra.mxu0 %v1891
    %v1912 = vpop.f32.mrf.mxu0
    %v1913 = vadd.f32 0.0, %v1912
    %1914 = vdwg.mxu0
    %1915 = vrot.lane.b32.xlu0 %v1325, 104
    %v1916 = vpop.permute.xlu0 %1915
    %1917 = vrot.lane.b32.xlu0 %v1325, 72
    %v1918 = vpop.permute.xlu0 %1917
    %v1919 = vsel %vm343, %v1916, 0
    %v1921 = vsel %vm343, %v1918, 0
    %1923 = vmatpush.xpose.msra.mxu0 0.0
    %1924 = vmatpush.xpose.msra.mxu0 0.0
    %1925 = vmatpush.xpose.msra.mxu0 0.0
    %1926 = vmatpush.xpose.msra.mxu0 0.0
    %1927 = vmatpush.xpose.msra.mxu0 0.0
    %1928 = vmatpush.xpose.msra.mxu0 0.0
    %1929 = vmatpush.xpose.msra.mxu0 0.0
    %1930 = vmatpush.xpose.msra.mxu0 0.0
    %1931 = vmatpush.xpose.msra.mxu0 0.0
    %1932 = vmatpush.xpose.msra.mxu0 0.0
    %1933 = vmatpush.xpose.msra.mxu0 0.0
    %1934 = vmatpush.xpose.msra.mxu0 0.0
    %1935 = vmatpush.xpose.msra.mxu0 0.0
    %1936 = vmatpush.xpose.msra.mxu0 0.0
    %1937 = vmatpush.xpose.msra.mxu0 0.0
    %1938 = vmatpush.xpose.msra.mxu0 %v1921
    %1939 = vmatmul.f32.gmra.mxu0 %v1919
    %v1940 = vpop.f32.mrf.mxu0
    %v1941 = vadd.f32 0.0, %v1940
    %1942 = vdwg.mxu0
    %v1943 = vsel %vm343, %v1913, -inf
    %1944 = vmax.xlane.f32.xlu0 %v1943
    %v1945 = vpop.xlane.xlu0 %1944
    %v1946 = vsel %vm343, %v1941, -inf
    %1947 = vmax.xlane.f32.xlu0 %v1946
    %v1948 = vpop.xlane.xlu0 %1947
    %v1949 = vsub.f32 %v1913, %v1945
    %v1950 = vsub.f32 %v1941, %v1948
    %v1951 = vmul.f32 %v1949, 1.442695
    %v1952 = vpow.pop %v1951
    %v1953 = vmul.f32 %v1950, 1.442695
    %v1954 = vpow.pop %v1953
    %v1955 = vsel %vm343, %v1952, 0.0
    %1956 = vadd.xlane.f32.xlu0 %v1955
    %v1957 = vpop.xlane.xlu0 %1956
    %v1958 = vsel %vm343, %v1954, 0.0
    %1959 = vadd.xlane.f32.xlu0 %v1958
    %v1960 = vpop.xlane.xlu0 %1959
    %v1961 = vrcp.pop %v1957
    %v1962 = vmul.f32 %v1957, %v1961
    %v1963 = vsub.f32 1.0, %v1962
    %v1964 = vmul.f32 %v1961, %v1963
    %v1965 = vadd.f32 %v1961, %v1964
    %vm1966 = vweird.f32 %v1957
    %vm1967 = vweird.f32 %v1961
    %vm1968 = vmor %vm1966, %vm1967
    %v1969 = vsel %vm1968, %v1961, %v1965
    %v1970 = vand.u32 2147483647, %v1957
    %vm1971 = vcmp.eq.f32.partialorder %v1970, 8.507059e+37
    %v1972 = vand.u32 %v1957, 2147483648
    %v1973 = vor.u32 1.1754944e-38, %v1972
    %v1974 = vsel %vm1971, %v1973, %v1969
    %v1975 = vrcp.pop %v1960
    %v1976 = vmul.f32 %v1960, %v1975
    %v1977 = vsub.f32 1.0, %v1976
    %v1978 = vmul.f32 %v1975, %v1977
    %v1979 = vadd.f32 %v1975, %v1978
    %vm1980 = vweird.f32 %v1960
    %vm1981 = vweird.f32 %v1975
    %vm1982 = vmor %vm1980, %vm1981
    %v1983 = vsel %vm1982, %v1975, %v1979
    %v1984 = vand.u32 2147483647, %v1960
    %vm1985 = vcmp.eq.f32.partialorder %v1984, 8.507059e+37
    %v1986 = vand.u32 %v1960, 2147483648
    %v1987 = vor.u32 1.1754944e-38, %v1986
    %v1988 = vsel %vm1985, %v1987, %v1983
    %v1989 = vmul.f32 %v1952, %v1974
    %v1990 = vmul.f32 %v1954, %v1988
    %1991 = vrot.lane.b32.xlu0 %v1322, 40
    %v1992 = vpop.permute.xlu0 %1991
    %v1995 = vsel %vm343, %v1989, 0
    %1997 = vmatpush.msra.mxu0 0.0
    %1998 = vmatpush.msra.mxu0 0.0
    %1999 = vmatpush.msra.mxu0 0.0
    %2000 = vmatpush.msra.mxu0 0.0
    %2001 = vmatpush.msra.mxu0 0.0
    %2002 = vmatpush.msra.mxu0 0.0
    %2003 = vmatpush.msra.mxu0 0.0
    %2004 = vmatpush.msra.mxu0 0.0
    %2005 = vmatpush.msra.mxu0 0.0
    %2006 = vmatpush.msra.mxu0 0.0
    %2007 = vmatpush.msra.mxu0 0.0
    %2008 = vmatpush.msra.mxu0 0.0
    %2009 = vmatpush.msra.mxu0 0.0
    %2010 = vmatpush.msra.mxu0 0.0
    %2011 = vmatpush.msra.mxu0 0.0
    %2012 = vmatpush.msra.mxu0 %v1992
    %2013 = vmatmul.f32.gmra.mxu0 %v1995
    %v2014 = vpop.f32.mrf.mxu0
    %v2015 = vadd.f32 0.0, %v2014
    %2016 = vdwg.mxu0
    %2017 = vrot.lane.b32.xlu0 %v1325, 40
    %v2018 = vpop.permute.xlu0 %2017
    %v2021 = vsel %vm343, %v1990, 0
    %2023 = vmatpush.msra.mxu0 0.0
    %2024 = vmatpush.msra.mxu0 0.0
    %2025 = vmatpush.msra.mxu0 0.0
    %2026 = vmatpush.msra.mxu0 0.0
    %2027 = vmatpush.msra.mxu0 0.0
    %2028 = vmatpush.msra.mxu0 0.0
    %2029 = vmatpush.msra.mxu0 0.0
    %2030 = vmatpush.msra.mxu0 0.0
    %2031 = vmatpush.msra.mxu0 0.0
    %2032 = vmatpush.msra.mxu0 0.0
    %2033 = vmatpush.msra.mxu0 0.0
    %2034 = vmatpush.msra.mxu0 0.0
    %2035 = vmatpush.msra.mxu0 0.0
    %2036 = vmatpush.msra.mxu0 0.0
    %2037 = vmatpush.msra.mxu0 0.0
    %2038 = vmatpush.msra.mxu0 %v2018
    %2039 = vmatmul.f32.gmra.mxu0 %v2021
    %v2040 = vpop.f32.mrf.mxu0
    %v2041 = vadd.f32 0.0, %v2040
    %2042 = vdwg.mxu0
    %v2044 = vsel %vm343, %v2015, 0
    %v2047 = vsel %vm343, %v2041, 0
    %2049 = vmatpush.msra.mxu0 0.0
    %2050 = vmatpush.msra.mxu0 0.0
    %2051 = vmatpush.msra.mxu0 0.0
    %2052 = vmatpush.msra.mxu0 0.0
    %2053 = vmatpush.msra.mxu0 0.0
    %2054 = vmatpush.msra.mxu0 0.0
    %2055 = vmatpush.msra.mxu0 0.0
    %2056 = vmatpush.msra.mxu0 0.0
    %2057 = vmatpush.msra.mxu0 0.0
    %2058 = vmatpush.msra.mxu0 0.0
    %2059 = vmatpush.msra.mxu0 0.0
    %2060 = vmatpush.msra.mxu0 0.0
    %2061 = vmatpush.msra.mxu0 0.0
    %2062 = vmatpush.msra.mxu0 0.0
    %2063 = vmatpush.msra.mxu0 0.0
    %2064 = vmatpush.msra.mxu0 %v1331
    %2065 = vmatmul.f32.gmra.mxu0 %v2044
    %v2066 = vpop.f32.mrf.mxu0
    %v2067 = vadd.f32 0.0, %v2066
    %2068 = vmatmul.f32.gmra.mxu0 %v2047
    %v2069 = vpop.f32.mrf.mxu0
    %v2070 = vadd.f32 0.0, %v2069
    %2071 = vdwg.mxu0
    %v2072 = vadd.f32 %v1885, %v2067
    %v2073 = vadd.f32 %v1886, %v2070
    %s2074 = scalar_lea.vmem [#allocation10], 1
    %v2075 = vld [vmem:[%s2074] sm:$0x1]
    %v2077 = vperm.slane %v2075, 0
    %v2079 = vadd.f32 %v2072, %v2077
    %v2080 = vadd.f32 %v2073, %v2077
    %v2081 = vadd.f32 %v1286, %v2079
    %v2082 = vadd.f32 %v1287, %v2080
    %s2083 = scalar_lea.vmem [#allocation11], 1
    %v2084 = vld [vmem:[%s2083] sm:$0x1]
    %s2085 = scalar_lea.vmem [#allocation13], 1
    %v2086 = vld [vmem:[%s2085] sm:$0x1]
    %v2087 = vsel %vm306, %v2081, 0.0
    %2088 = vadd.xlane.f32.xlu0 %v2087
    %v2089 = vpop.xlane.xlu0 %2088
    %v2090 = vsel %vm306, %v2082, 0.0
    %2091 = vadd.xlane.f32.xlu0 %v2090
    %v2092 = vpop.xlane.xlu0 %2091
    %v2093 = vmul.f32 %v2089, %v1105
    %v2094 = vmul.f32 %v2092, %v1105
    %v2095 = vsub.f32 %v2081, %v2093
    %v2096 = vsub.f32 %v2082, %v2094
    %v2097 = vmul.f32 %v2095, %v2095
    %v2098 = vmul.f32 %v2096, %v2096
    %v2099 = vsel %vm306, %v2097, 0.0
    %2100 = vadd.xlane.f32.xlu0 %v2099
    %v2101 = vpop.xlane.xlu0 %2100
    %v2102 = vsel %vm306, %v2098, 0.0
    %2103 = vadd.xlane.f32.xlu0 %v2102
    %v2104 = vpop.xlane.xlu0 %2103
    %v2105 = vmul.f32 %v2101, %v1105
    %v2106 = vmul.f32 %v2104, %v1105
    %v2107 = vadd.f32 %v2105, 1e-05
    %v2108 = vadd.f32 %v2106, 1e-05
    %v2109 = vrsqrt.pop %v2107
    %v2110 = vmul.f32 %v2109, %v2107
    %v2111 = vmul.f32 %v2110, %v2109
    %v2112 = vmul.f32 0.5, %v2111
    %v2113 = vsub.f32 1.5, %v2112
    %v2114 = vmul.f32 %v2109, %v2113
    %vm2115 = vweird.f32 %v2107
    %vm2116 = vweird.f32 %v2109
    %vm2117 = vmor %vm2115, %vm2116
    %v2118 = vsel %vm2117, %v2109, %v2114
    %v2119 = vrsqrt.pop %v2108
    %v2120 = vmul.f32 %v2119, %v2108
    %v2121 = vmul.f32 %v2120, %v2119
    %v2122 = vmul.f32 0.5, %v2121
    %v2123 = vsub.f32 1.5, %v2122
    %v2124 = vmul.f32 %v2119, %v2123
    %vm2125 = vweird.f32 %v2108
    %vm2126 = vweird.f32 %v2119
    %vm2127 = vmor %vm2125, %vm2126
    %v2128 = vsel %vm2127, %v2119, %v2124
    %v2129 = vmul.f32 %v2095, %v2118
    %v2130 = vmul.f32 %v2096, %v2128
    %v2132 = vperm.slane %v2084, 0
    %v2134 = vmul.f32 %v2129, %v2132
    %v2135 = vmul.f32 %v2130, %v2132
    %v2137 = vperm.slane %v2086, 0
    %v2139 = vadd.f32 %v2134, %v2137
    %v2140 = vadd.f32 %v2135, %v2137
    %s2141 = scalar_lea.vmem [#allocation17], 32
    %v2142 = vld [vmem:[%s2141] sm:$0xff]
    %v2143 = vld [vmem:[%s2141 + $0x8] sm:$0xff]
    %v2144 = vld [vmem:[%s2141 + $0x10] sm:$0xff]
    %v2145 = vld [vmem:[%s2141 + $0x18] sm:$0xff]
    %s2146 = scalar_lea.vmem [#allocation19], 1
    %v2147 = vld [vmem:[%s2146] sm:$0x1]
    %v2149 = vperm.slane %v2147, 0
    %v2152 = vsel %vm306, %v2139, 0
    %v2155 = vsel %vm306, %v2140, 0
    %2157 = vmatpush.msra.mxu0 0.0
    %2158 = vmatpush.msra.mxu0 0.0
    %2159 = vmatpush.msra.mxu0 0.0
    %2160 = vmatpush.msra.mxu0 0.0
    %2161 = vmatpush.msra.mxu0 0.0
    %2162 = vmatpush.msra.mxu0 0.0
    %2163 = vmatpush.msra.mxu0 0.0
    %2164 = vmatpush.msra.mxu0 0.0
    %2165 = vmatpush.msra.mxu0 0.0
    %2166 = vmatpush.msra.mxu0 0.0
    %2167 = vmatpush.msra.mxu0 0.0
    %2168 = vmatpush.msra.mxu0 0.0
    %2169 = vmatpush.msra.mxu0 %v2145
    %2170 = vmatpush.msra.mxu0 %v2144
    %2171 = vmatpush.msra.mxu0 %v2143
    %2172 = vmatpush.msra.mxu0 %v2142
    %2173 = vmatmul.f32.gmra.mxu0 %v2152
    %v2174 = vpop.f32.mrf.mxu0
    %v2175 = vadd.f32 %v2149, %v2174
    %2176 = vmatmul.f32.gmra.mxu0 %v2155
    %v2177 = vpop.f32.mrf.mxu0
    %v2178 = vadd.f32 %v2149, %v2177
    %2179 = vdwg.mxu0
    %v2180 = vmax.f32 %v2175, 0.0
    %v2181 = vmax.f32 %v2178, 0.0
    %s2182 = scalar_lea.vmem [#allocation20], 32
    %v2183 = vld [vmem:[%s2182] sm:$0xff]
    %v2184 = vld [vmem:[%s2182 + $0x8] sm:$0xff]
    %v2185 = vld [vmem:[%s2182 + $0x10] sm:$0xff]
    %v2186 = vld [vmem:[%s2182 + $0x18] sm:$0xff]
    %s2187 = scalar_lea.vmem [#allocation22], 1
    %v2188 = vld [vmem:[%s2187] sm:$0x1]
    %v2190 = vperm.slane %v2188, 0
    %v2193 = vsel %vm306, %v2180, 0
    %v2196 = vsel %vm306, %v2181, 0
    %2198 = vmatpush.msra.mxu0 0.0
    %2199 = vmatpush.msra.mxu0 0.0
    %2200 = vmatpush.msra.mxu0 0.0
    %2201 = vmatpush.msra.mxu0 0.0
    %2202 = vmatpush.msra.mxu0 0.0
    %2203 = vmatpush.msra.mxu0 0.0
    %2204 = vmatpush.msra.mxu0 0.0
    %2205 = vmatpush.msra.mxu0 0.0
    %2206 = vmatpush.msra.mxu0 0.0
    %2207 = vmatpush.msra.mxu0 0.0
    %2208 = vmatpush.msra.mxu0 0.0
    %2209 = vmatpush.msra.mxu0 0.0
    %2210 = vmatpush.msra.mxu0 %v2186
    %2211 = vmatpush.msra.mxu0 %v2185
    %2212 = vmatpush.msra.mxu0 %v2184
    %2213 = vmatpush.msra.mxu0 %v2183
    %2214 = vmatmul.f32.gmra.mxu0 %v2193
    %v2215 = vpop.f32.mrf.mxu0
    %v2216 = vadd.f32 %v2190, %v2215
    %2217 = vmatmul.f32.gmra.mxu0 %v2196
    %v2218 = vpop.f32.mrf.mxu0
    %v2219 = vadd.f32 %v2190, %v2218
    %2220 = vdwg.mxu0
    %v2221 = vadd.f32 %v2139, %v2216
    %v2222 = vadd.f32 %v2140, %v2219
    %s2223 = scalar_lea.vmem [#allocation14], 1
    %v2224 = vld [vmem:[%s2223] sm:$0x1]
    %s2225 = scalar_lea.vmem [#allocation16], 1
    %v2226 = vld [vmem:[%s2225] sm:$0x1]
    %v2227 = vsel %vm306, %v2221, 0.0
    %2228 = vadd.xlane.f32.xlu0 %v2227
    %v2229 = vpop.xlane.xlu0 %2228
    %v2230 = vsel %vm306, %v2222, 0.0
    %2231 = vadd.xlane.f32.xlu0 %v2230
    %v2232 = vpop.xlane.xlu0 %2231
    %v2233 = vmul.f32 %v2229, %v1105
    %v2234 = vmul.f32 %v2232, %v1105
    %v2235 = vsub.f32 %v2221, %v2233
    %v2236 = vsub.f32 %v2222, %v2234
    %v2237 = vmul.f32 %v2235, %v2235
    %v2238 = vmul.f32 %v2236, %v2236
    %v2239 = vsel %vm306, %v2237, 0.0
    %2240 = vadd.xlane.f32.xlu0 %v2239
    %v2241 = vpop.xlane.xlu0 %2240
    %v2242 = vsel %vm306, %v2238, 0.0
    %2243 = vadd.xlane.f32.xlu0 %v2242
    %v2244 = vpop.xlane.xlu0 %2243
    %v2245 = vmul.f32 %v2241, %v1105
    %v2246 = vmul.f32 %v2244, %v1105
    %v2247 = vadd.f32 %v2245, 1e-05
    %v2248 = vadd.f32 %v2246, 1e-05
    %v2249 = vrsqrt.pop %v2247
    %v2250 = vmul.f32 %v2249, %v2247
    %v2251 = vmul.f32 %v2250, %v2249
    %v2252 = vmul.f32 0.5, %v2251
    %v2253 = vsub.f32 1.5, %v2252
    %v2254 = vmul.f32 %v2249, %v2253
    %vm2255 = vweird.f32 %v2247
    %vm2256 = vweird.f32 %v2249
    %vm2257 = vmor %vm2255, %vm2256
    %v2258 = vsel %vm2257, %v2249, %v2254
    %v2259 = vrsqrt.pop %v2248
    %v2260 = vmul.f32 %v2259, %v2248
    %v2261 = vmul.f32 %v2260, %v2259
    %v2262 = vmul.f32 0.5, %v2261
    %v2263 = vsub.f32 1.5, %v2262
    %v2264 = vmul.f32 %v2259, %v2263
    %vm2265 = vweird.f32 %v2248
    %vm2266 = vweird.f32 %v2259
    %vm2267 = vmor %vm2265, %vm2266
    %v2268 = vsel %vm2267, %v2259, %v2264
    %v2269 = vmul.f32 %v2235, %v2258
    %v2270 = vmul.f32 %v2236, %v2268
    %v2272 = vperm.slane %v2224, 0
    %v2274 = vmul.f32 %v2269, %v2272
    %v2275 = vmul.f32 %v2270, %v2272
    %v2277 = vperm.slane %v2226, 0
    %v2279 = vadd.f32 %v2274, %v2277
    %v2280 = vadd.f32 %v2275, %v2277
    %v2281 = vsel %vm306, %v2279, 0.0
    %v2282 = vrot.slane %v2281, 4
    %v2283 = vadd.f32 %v2281, %v2282
    %v2284 = vrot.slane %v2283, 2
    %v2285 = vadd.f32 %v2283, %v2284
    %v2286 = vrot.slane %v2285, 1
    %v2287 = vadd.f32 %v2285, %v2286
    %v2288 = vsel %vm306, %v2280, 0.0
    %v2289 = vrot.slane %v2288, 4
    %v2290 = vadd.f32 %v2288, %v2289
    %v2291 = vrot.slane %v2290, 2
    %v2292 = vadd.f32 %v2290, %v2291
    %v2293 = vrot.slane %v2292, 1
    %v2294 = vadd.f32 %v2292, %v2293
    %v2295 = vrcp.pop 8.0
    %v2296 = vmul.f32 8.0, %v2295
    %v2297 = vsub.f32 1.0, %v2296
    %v2298 = vmul.f32 %v2295, %v2297
    %v2299 = vadd.f32 %v2295, %v2298
    %vm2300 = vweird.f32 %v2295
    %v2301 = vsel %vm2300, %v2295, %v2299
    %v2302 = vmul.f32 %v2287, %v2301
    %v2303 = vmul.f32 %v2294, %v2301
    %v2304 = vld [vmem:[%s14] sm:$0xff]
    %v2305 = vld [vmem:[%s14 + $0x8] sm:$0xff]
    %v2306 = vld [vmem:[%s14 + $0x10] sm:$0xff]
    %v2307 = vld [vmem:[%s14 + $0x18] sm:$0xff]
    %v2308 = vld [vmem:[%s15] sm:$0x1]
    %v2310 = vperm.slane %v2308, 0
    %vm2314 = vcmask 1041409
    %v2315 = vsel %vm2314, %v2303, %v2302
    %v2316 = vsel %vm306, %v2315, 0
    %2318 = vmatpush.msra.mxu0 0.0
    %2319 = vmatpush.msra.mxu0 0.0
    %2320 = vmatpush.msra.mxu0 0.0
    %2321 = vmatpush.msra.mxu0 0.0
    %2322 = vmatpush.msra.mxu0 0.0
    %2323 = vmatpush.msra.mxu0 0.0
    %2324 = vmatpush.msra.mxu0 0.0
    %2325 = vmatpush.msra.mxu0 0.0
    %2326 = vmatpush.msra.mxu0 0.0
    %2327 = vmatpush.msra.mxu0 0.0
    %2328 = vmatpush.msra.mxu0 0.0
    %2329 = vmatpush.msra.mxu0 0.0
    %2330 = vmatpush.msra.mxu0 %v2307
    %2331 = vmatpush.msra.mxu0 %v2306
    %2332 = vmatpush.msra.mxu0 %v2305
    %2333 = vmatpush.msra.mxu0 %v2304
    %2334 = vmatmul.f32.gmra.mxu0 %v2316
    %v2335 = vpop.f32.mrf.mxu0
    %v2336 = vadd.f32 %v2310, %v2335
    %2337 = vdwg.mxu0
    %v2338 = vld [vmem:[#allocation23] sm:$0x1]
    %v2339 = vld [vmem:[#allocation25] sm:$0x1]
    %vm2340 = vcmask 254976
    %v2341 = vsel %vm2340, %v2336, 0.0
    %2342 = vadd.xlane.f32.xlu0 %v2341
    %v2343 = vpop.xlane.xlu0 %2342
    %v2344 = vmul.f32 %v2343, %v1105
    %v2345 = vsub.f32 %v2336, %v2344
    %v2346 = vmul.f32 %v2345, %v2345
    %v2347 = vsel %vm2340, %v2346, 0.0
    %2348 = vadd.xlane.f32.xlu0 %v2347
    %v2349 = vpop.xlane.xlu0 %2348
    %v2350 = vmul.f32 %v2349, %v1105
    %v2351 = vadd.f32 %v2350, 1e-05
    %v2352 = vrsqrt.pop %v2351
    %v2353 = vmul.f32 %v2352, %v2351
    %v2354 = vmul.f32 %v2353, %v2352
    %v2355 = vmul.f32 0.5, %v2354
    %v2356 = vsub.f32 1.5, %v2355
    %v2357 = vmul.f32 %v2352, %v2356
    %vm2358 = vweird.f32 %v2351
    %vm2359 = vweird.f32 %v2352
    %vm2360 = vmor %vm2358, %vm2359
    %v2361 = vsel %vm2360, %v2352, %v2357
    %v2362 = vmul.f32 %v2345, %v2361
    %v2364 = vperm.slane %v2338, 0
    %v2366 = vmul.f32 %v2362, %v2364
    %v2368 = vperm.slane %v2339, 0
    %v2370 = vadd.f32 %v2366, %v2368
    %v2371 = vmax.f32 %v2370, 0.0
    %v2372 = vld [vmem:[%s18] sm:$0xff]
    %v2373 = vld [vmem:[%s18 + $0x8] sm:$0xff]
    %v2374 = vld [vmem:[%s18 + $0x10] sm:$0xff]
    %v2375 = vld [vmem:[%s18 + $0x18] sm:$0xff]
    %v2376 = vld [vmem:[%s19] sm:$0x1]
    %v2378 = vperm.slane %v2376, 0
    %v2381 = vsel %vm306, %v2371, 0
    %2383 = vmatpush.msra.mxu0 0.0
    %2384 = vmatpush.msra.mxu0 0.0
    %2385 = vmatpush.msra.mxu0 0.0
    %2386 = vmatpush.msra.mxu0 0.0
    %2387 = vmatpush.msra.mxu0 0.0
    %2388 = vmatpush.msra.mxu0 0.0
    %2389 = vmatpush.msra.mxu0 0.0
    %2390 = vmatpush.msra.mxu0 0.0
    %2391 = vmatpush.msra.mxu0 0.0
    %2392 = vmatpush.msra.mxu0 0.0
    %2393 = vmatpush.msra.mxu0 0.0
    %2394 = vmatpush.msra.mxu0 0.0
    %2395 = vmatpush.msra.mxu0 %v2375
    %2396 = vmatpush.msra.mxu0 %v2374
    %2397 = vmatpush.msra.mxu0 %v2373
    %2398 = vmatpush.msra.mxu0 %v2372
    %2399 = vmatmul.f32.gmra.mxu0 %v2381
    %v2400 = vpop.f32.mrf.mxu0
    %v2401 = vadd.f32 %v2378, %v2400
    %2402 = vdwg.mxu0
    %vm2403 = vcmask 123904
    %2404 = vst.msk [vmem:[#allocation26] sm:$0x3] %vm2403, %v2401
    // Predicated region
    $region142: #{tpu_custom_call.1} parent=1 // pred_check
      _
    $region143: #{tpu_custom_call.1} parent=1 // pred_check_branch
      %2406 = sbr.rel (0) target = $region145
    $region144: #{tpu_custom_call.1} parent=1 // pred_region
      %2408 = vsyncadd [#allocation4], 0
      %s2410 = sshll.u32 [#allocation26], 4
      %s2411 = int_to_ptr.vmem [resolvable:$true] %s2410
      %s2412 = sshll.u32 %s20, 4
      %s2413 = int_to_ptr.hbm [resolvable:$true] %s2412
      %2415 = dma.vmem_to_hbm [thread:$0]  %s2411, 32, %s2413, [#allocation4]
    $region145: #{tpu_custom_call.1} parent=1 // pred_fallthru
      _
    // Predicated region
    $region146: #{tpu_custom_call.1} parent=1 // pred_check
      _
    $region147: #{tpu_custom_call.1} parent=1 // pred_check_branch
      %2417 = sbr.rel (0) target = $region149
    $region148: #{tpu_custom_call.1} parent=1 // pred_region
      %2419 = dma.done [#allocation4], 32
    $region149: #{tpu_custom_call.1} parent=1 // pred_fallthru
      _
    %2420 = vsyncpa [#allocation3], 1
    %2421 = vsyncpa [#allocation6], 1
    %2422 = vsyncpa [#allocation9], 1
    %2423 = vsyncpa [#allocation12], 1
    %2424 = vsyncpa [#allocation15], 1
    %2425 = vsyncpa [#allocation18], 1
    %2426 = vsyncpa [#allocation21], 1
    %2427 = vsyncpa [#allocation24], 1
    %2428 = vsyncpa [#allocation4], 1

</llo_original>
